<compile_context>
chip_gen: v7x
topology: tpu7x:2x2x1
jax: 0.10.0
libtpu: 0.0.40
codegen_flags: <defaults>
</compile_context>

<pallas_src>
import functools

import jax
import jax.numpy as jnp
from jax.experimental import pallas as pl
from jax.experimental.pallas import tpu as pltpu


def _bart_attn_kernel(x_ref, wq_ref, bq_ref, wk_ref, bk_ref, wv_ref, bv_ref,
                      wo_ref, bo_ref, o_ref, ctx_ref, *, num_heads, head_dim):
    # One grid step == one batch element. x_ref is [T, E] bf16 (batch dim squeezed).
    x = x_ref[...]

    # Projections: bf16 x bf16 -> f32 accumulate. wq/bq are already scaled by
    # head_dim ** -0.5 in the wrapper; biases stay f32 and are added to the
    # f32 accumulator (single add per projection, outside the head loop).
    q = jnp.dot(x, wq_ref[...], preferred_element_type=jnp.float32) + bq_ref[...]
    k = jnp.dot(x, wk_ref[...], preferred_element_type=jnp.float32) + bk_ref[...]
    v = jnp.dot(x, wv_ref[...], preferred_element_type=jnp.float32) + bv_ref[...]
    q = q.astype(jnp.bfloat16)
    k = k.astype(jnp.bfloat16)
    v = v.astype(jnp.bfloat16)

    # Per-head attention. Each head's context is written straight into the [T, E]
    # VMEM scratch at its static lane slice: no concatenate, and each head's
    # [T, T] scores / [T, D] context die at the scratch store.
    for h in range(num_heads):
        sl = slice(h * head_dim, (h + 1) * head_dim)
        qh = q[:, sl]   # [T, D] bf16
        kh = k[:, sl]
        vh = v[:, sl]

        # s = qh @ kh.T without materializing a transposed copy.
        s = jnp.einsum("td,sd->ts", qh, kh,
                       preferred_element_type=jnp.float32)        # [T, T] f32
        s = s - jnp.max(s, axis=-1, keepdims=True)
        p = jnp.exp(s)
        p = p * pl.reciprocal(jnp.sum(p, axis=-1, keepdims=True), approx=True)
        ctx_h = jnp.dot(p.astype(jnp.bfloat16), vh,
                        preferred_element_type=jnp.float32)       # [T, D] f32
        ctx_ref[:, sl] = ctx_h.astype(jnp.bfloat16)

    # Output projection as one full-E-wide contraction on the MXU.
    out = jnp.dot(ctx_ref[...], wo_ref[...],
                  preferred_element_type=jnp.float32) + bo_ref[...]
    o_ref[...] = out.astype(o_ref.dtype)


def bart_self_attention(hidden_states, params, num_heads):
    """hidden_states: [B, T, E] float32.

    params: dict of (E, E) weights in [in, out] layout and (1, E) biases (float32).
    """
    B, T, E = hidden_states.shape
    head_dim = E // num_heads
    scaling = head_dim ** (-0.5)

    # bf16 operands for the MXU (halves weight + activation DMA bytes). Biases stay
    # f32. Fold the query scaling into the q weights/bias so the kernel needs no
    # extra elementwise pass: (x @ Wq + bq) * s == x @ (Wq * s) + bq * s.
    x_bf16 = hidden_states.astype(jnp.bfloat16)
    wq = (params["wq"] * scaling).astype(jnp.bfloat16)
    bq = params["bq"] * scaling
    wk = params["wk"].astype(jnp.bfloat16)
    wv = params["wv"].astype(jnp.bfloat16)
    wo = params["wo"].astype(jnp.bfloat16)
    bk, bv, bo = params["bk"], params["bv"], params["bo"]

    kernel = functools.partial(_bart_attn_kernel,
                               num_heads=num_heads, head_dim=head_dim)

    # Constant index_maps: weights/biases are DMA'd once and stay resident in VMEM.
    w_spec = pl.BlockSpec((E, E), lambda b: (0, 0))
    b_spec = pl.BlockSpec((1, E), lambda b: (0, 0))
    # Batch dim squeezed: kernel sees a plain lane-dense [T, E] tile.
    x_spec = pl.BlockSpec((None, T, E), lambda b: (b, 0, 0))
    o_spec = pl.BlockSpec((None, T, E), lambda b: (b, 0, 0))

    return pl.pallas_call(
        kernel,
        out_shape=jax.ShapeDtypeStruct((B, T, E), hidden_states.dtype),
        grid_spec=pltpu.PrefetchScalarGridSpec(
            num_scalar_prefetch=0,
            grid=(B,),
            in_specs=[
                x_spec,
                w_spec, b_spec,   # q_proj (pre-scaled)
                w_spec, b_spec,   # k_proj
                w_spec, b_spec,   # v_proj
                w_spec, b_spec,   # out_proj
            ],
            out_specs=o_spec,
            scratch_shapes=[pltpu.VMEM((T, E), jnp.bfloat16)],   # per-batch ctx buffer
        ),
        compiler_params=pltpu.CompilerParams(
            dimension_semantics=("parallel",),
            vmem_limit_bytes=64 * 1024 * 1024),
    )(x_bf16, wq, bq, wk, bk, wv, bv, wo, bo)


def _reference(hidden_states, params, num_heads):
    """Pure-JAX f32 reference mirroring the PyTorch forward exactly."""
    B, T, E = hidden_states.shape
    D = E // num_heads
    scaling = D ** (-0.5)

    def lin(x, w, b):
        return jnp.einsum("bte,ef->btf", x, w) + b  # w already [in, out]

    q = lin(hidden_states, params["wq"], params["bq"]) * scaling
    k = lin(hidden_states, params["wk"], params["bk"])
    v = lin(hidden_states, params["wv"], params["bv"])

    def shape(t):  # [B,T,E] -> [B*H, T, D]
        return t.reshape(B, T, num_heads, D).transpose(0, 2, 1, 3).reshape(
            B * num_heads, T, D)

    q, k, v = shape(q), shape(k), shape(v)
    w = jnp.einsum("btd,bsd->bts", q, k)
    w = jax.nn.softmax(w, axis=-1)
    o = jnp.einsum("bts,bsd->btd", w, v)
    o = o.reshape(B, num_heads, T, D).transpose(0, 2, 1, 3).reshape(B, T, E)
    return lin(o, params["wo"], params["bo"])


if __name__ == "__main__":
    # Small, lane-aligned demo shape: batch=2, seq=128, embed=128, heads=4 (D=32).
    B, T, E, H = 2, 128, 128, 4

    key = jax.random.PRNGKey(0)
    keys = jax.random.split(key, 9)
    scale = 0.05
    params = {
        "wq": scale * jax.random.normal(keys[0], (E, E), jnp.float32),
        "bq": scale * jax.random.normal(keys[1], (1, E), jnp.float32),
        "wk": scale * jax.random.normal(keys[2], (E, E), jnp.float32),
        "bk": scale * jax.random.normal(keys[3], (1, E), jnp.float32),
        "wv": scale * jax.random.normal(keys[4], (E, E), jnp.float32),
        "bv": scale * jax.random.normal(keys[5], (1, E), jnp.float32),
        "wo": scale * jax.random.normal(keys[6], (E, E), jnp.float32),
        "bo": scale * jax.random.normal(keys[7], (1, E), jnp.float32),
    }
    x = jax.random.normal(keys[8], (B, T, E), jnp.float32)

    out = jax.block_until_ready(bart_self_attention(x, params, H))
    ref = _reference(x, params, H)

    assert out.shape == (B, T, E)
    max_err = float(jnp.max(jnp.abs(out - ref)))
    # bf16 MXU operands + approx reciprocal => loosened (but still tight) tolerance.
    assert jnp.allclose(out, ref, atol=2e-2, rtol=2e-2), \
        f"mismatch vs JAX reference (max abs err {max_err})"

    print("KERNEL_OK")
</pallas_src>

<mosaic_0001>
module attributes {stable_mosaic.version = 11 : i64} {
  func.func @_bart_attn_kernel(%arg0: i32, %arg1: memref<1x128x128xbf16, #tpu.memory_space<vmem>>, %arg2: memref<128x128xbf16, #tpu.memory_space<vmem>>, %arg3: memref<1x128xf32, #tpu.memory_space<vmem>>, %arg4: memref<128x128xbf16, #tpu.memory_space<vmem>>, %arg5: memref<1x128xf32, #tpu.memory_space<vmem>>, %arg6: memref<128x128xbf16, #tpu.memory_space<vmem>>, %arg7: memref<1x128xf32, #tpu.memory_space<vmem>>, %arg8: memref<128x128xbf16, #tpu.memory_space<vmem>>, %arg9: memref<1x128xf32, #tpu.memory_space<vmem>>, %arg10: memref<1x128x128xf32, #tpu.memory_space<vmem>>, %arg11: memref<128x128xbf16, #tpu.memory_space<vmem>>) attributes {dimension_semantics = [#tpu.dimension_semantics<parallel>], iteration_bounds = array<i64: 2>, scalar_prefetch = 0 : i64, scratch_operands = 1 : i64, tpu.core_type = #tpu.core_type<tc>, window_params = [{transform_indices = @transform_0, window_bounds = array<i64: 1, 128, 128>}, {pipeline_mode = #tpu.pipeline_mode<synchronous>, transform_indices = @transform_1, window_bounds = array<i64: 128, 128>}, {pipeline_mode = #tpu.pipeline_mode<synchronous>, transform_indices = @transform_2, window_bounds = array<i64: 1, 128>}, {pipeline_mode = #tpu.pipeline_mode<synchronous>, transform_indices = @transform_3, window_bounds = array<i64: 128, 128>}, {pipeline_mode = #tpu.pipeline_mode<synchronous>, transform_indices = @transform_4, window_bounds = array<i64: 1, 128>}, {pipeline_mode = #tpu.pipeline_mode<synchronous>, transform_indices = @transform_5, window_bounds = array<i64: 128, 128>}, {pipeline_mode = #tpu.pipeline_mode<synchronous>, transform_indices = @transform_6, window_bounds = array<i64: 1, 128>}, {pipeline_mode = #tpu.pipeline_mode<synchronous>, transform_indices = @transform_7, window_bounds = array<i64: 128, 128>}, {pipeline_mode = #tpu.pipeline_mode<synchronous>, transform_indices = @transform_8, window_bounds = array<i64: 1, 128>}, {transform_indices = @transform_9, window_bounds = array<i64: 1, 128, 128>}]} {
    %c0 = arith.constant 0 : index
    %c0_0 = arith.constant 0 : index
    %c0_1 = arith.constant 0 : index
    %0 = vector.load %arg1[%c0, %c0_0, %c0_1] : memref<1x128x128xbf16, #tpu.memory_space<vmem>>, vector<1x128x128xbf16>
    %1 = vector.shape_cast %0 : vector<1x128x128xbf16> to vector<128x128xbf16>
    %c0_2 = arith.constant 0 : index
    %c0_3 = arith.constant 0 : index
    %2 = vector.load %arg2[%c0_2, %c0_3] : memref<128x128xbf16, #tpu.memory_space<vmem>>, vector<128x128xbf16>
    %cst = arith.constant dense<0.000000e+00> : vector<128x128xf32>
    %3 = tpu.matmul %1, %2, %cst {dimension_numbers = #tpu.dot_dimension_numbers<[1], [0], [0], [1], [0, 0, 1, 1], [], []>} : vector<128x128xbf16>, vector<128x128xbf16>, vector<128x128xf32> -> vector<128x128xf32>
    %c0_4 = arith.constant 0 : index
    %c0_5 = arith.constant 0 : index
    %4 = vector.load %arg3[%c0_4, %c0_5] : memref<1x128xf32, #tpu.memory_space<vmem>>, vector<1x128xf32>
    %5 = vector.broadcast %4 : vector<1x128xf32> to vector<128x128xf32>
    %6 = arith.addf %3, %5 : vector<128x128xf32>
    %c0_6 = arith.constant 0 : index
    %c0_7 = arith.constant 0 : index
    %7 = vector.load %arg4[%c0_6, %c0_7] : memref<128x128xbf16, #tpu.memory_space<vmem>>, vector<128x128xbf16>
    %cst_8 = arith.constant dense<0.000000e+00> : vector<128x128xf32>
    %8 = tpu.matmul %1, %7, %cst_8 {dimension_numbers = #tpu.dot_dimension_numbers<[1], [0], [0], [1], [0, 0, 1, 1], [], []>} : vector<128x128xbf16>, vector<128x128xbf16>, vector<128x128xf32> -> vector<128x128xf32>
    %c0_9 = arith.constant 0 : index
    %c0_10 = arith.constant 0 : index
    %9 = vector.load %arg5[%c0_9, %c0_10] : memref<1x128xf32, #tpu.memory_space<vmem>>, vector<1x128xf32>
    %10 = vector.broadcast %9 : vector<1x128xf32> to vector<128x128xf32>
    %11 = arith.addf %8, %10 : vector<128x128xf32>
    %c0_11 = arith.constant 0 : index
    %c0_12 = arith.constant 0 : index
    %12 = vector.load %arg6[%c0_11, %c0_12] : memref<128x128xbf16, #tpu.memory_space<vmem>>, vector<128x128xbf16>
    %cst_13 = arith.constant dense<0.000000e+00> : vector<128x128xf32>
    %13 = tpu.matmul %1, %12, %cst_13 {dimension_numbers = #tpu.dot_dimension_numbers<[1], [0], [0], [1], [0, 0, 1, 1], [], []>} : vector<128x128xbf16>, vector<128x128xbf16>, vector<128x128xf32> -> vector<128x128xf32>
    %c0_14 = arith.constant 0 : index
    %c0_15 = arith.constant 0 : index
    %14 = vector.load %arg7[%c0_14, %c0_15] : memref<1x128xf32, #tpu.memory_space<vmem>>, vector<1x128xf32>
    %15 = vector.broadcast %14 : vector<1x128xf32> to vector<128x128xf32>
    %16 = arith.addf %13, %15 : vector<128x128xf32>
    %17 = arith.truncf %6 : vector<128x128xf32> to vector<128x128xbf16>
    %18 = arith.truncf %11 : vector<128x128xf32> to vector<128x128xbf16>
    %19 = arith.truncf %16 : vector<128x128xf32> to vector<128x128xbf16>
    %20 = vector.extract_strided_slice %17 {offsets = [0, 0], sizes = [128, 32], strides = [1, 1]} : vector<128x128xbf16> to vector<128x32xbf16>
    %21 = vector.extract_strided_slice %18 {offsets = [0, 0], sizes = [128, 32], strides = [1, 1]} : vector<128x128xbf16> to vector<128x32xbf16>
    %22 = vector.extract_strided_slice %19 {offsets = [0, 0], sizes = [128, 32], strides = [1, 1]} : vector<128x128xbf16> to vector<128x32xbf16>
    "tpu.trace_start"() <{level = 10 : i32, message = "td,sd->ts"}> : () -> ()
    %cst_16 = arith.constant dense<0.000000e+00> : vector<128x128xf32>
    %23 = tpu.matmul %20, %21, %cst_16 {dimension_numbers = #tpu.dot_dimension_numbers<[1], [1], [0], [0], [0, 0, 1, 0], [], []>} : vector<128x32xbf16>, vector<128x32xbf16>, vector<128x128xf32> -> vector<128x128xf32>
    "tpu.trace_stop"() : () -> ()
    %cst_17 = arith.constant dense<0xFF800000> : vector<128xf32>
    %24 = vector.multi_reduction <maximumf>, %23, %cst_17 [1] : vector<128x128xf32> to vector<128xf32>
    %25 = vector.shape_cast %24 : vector<128xf32> to vector<128x1xf32>
    %26 = vector.broadcast %25 : vector<128x1xf32> to vector<128x128xf32>
    %27 = arith.subf %23, %26 : vector<128x128xf32>
    %28 = math.exp %27 : vector<128x128xf32>
    %cst_18 = arith.constant dense<0.000000e+00> : vector<128xf32>
    %29 = vector.multi_reduction <add>, %28, %cst_18 [1] : vector<128x128xf32> to vector<128xf32>
    %30 = vector.shape_cast %29 : vector<128xf32> to vector<128x1xf32>
    %31 = tpu.reciprocal %30 {approx = true} : vector<128x1xf32> -> vector<128x1xf32>
    %32 = vector.broadcast %31 : vector<128x1xf32> to vector<128x128xf32>
    %33 = arith.mulf %28, %32 : vector<128x128xf32>
    %34 = arith.truncf %33 : vector<128x128xf32> to vector<128x128xbf16>
    %cst_19 = arith.constant dense<0.000000e+00> : vector<128x32xf32>
    %35 = tpu.matmul %34, %22, %cst_19 {dimension_numbers = #tpu.dot_dimension_numbers<[1], [0], [0], [1], [0, 0, 1, 1], [], []>} : vector<128x128xbf16>, vector<128x32xbf16>, vector<128x32xf32> -> vector<128x32xf32>
    %36 = arith.truncf %35 : vector<128x32xf32> to vector<128x32xbf16>
    %c0_20 = arith.constant 0 : index
    %c0_21 = arith.constant 0 : index
    %37 = vector.load %arg11[%c0_20, %c0_21] : memref<128x128xbf16, #tpu.memory_space<vmem>>, vector<128x32xbf16>
    tpu.vector_store %arg11[%c0_20, %c0_21], %36 {strides = array<i32>} : memref<128x128xbf16, #tpu.memory_space<vmem>>, vector<128x32xbf16>,
    %38 = vector.extract_strided_slice %17 {offsets = [0, 32], sizes = [128, 32], strides = [1, 1]} : vector<128x128xbf16> to vector<128x32xbf16>
    %39 = vector.extract_strided_slice %18 {offsets = [0, 32], sizes = [128, 32], strides = [1, 1]} : vector<128x128xbf16> to vector<128x32xbf16>
    %40 = vector.extract_strided_slice %19 {offsets = [0, 32], sizes = [128, 32], strides = [1, 1]} : vector<128x128xbf16> to vector<128x32xbf16>
    "tpu.trace_start"() <{level = 10 : i32, message = "td,sd->ts"}> : () -> ()
    %cst_22 = arith.constant dense<0.000000e+00> : vector<128x128xf32>
    %41 = tpu.matmul %38, %39, %cst_22 {dimension_numbers = #tpu.dot_dimension_numbers<[1], [1], [0], [0], [0, 0, 1, 0], [], []>} : vector<128x32xbf16>, vector<128x32xbf16>, vector<128x128xf32> -> vector<128x128xf32>
    "tpu.trace_stop"() : () -> ()
    %cst_23 = arith.constant dense<0xFF800000> : vector<128xf32>
    %42 = vector.multi_reduction <maximumf>, %41, %cst_23 [1] : vector<128x128xf32> to vector<128xf32>
    %43 = vector.shape_cast %42 : vector<128xf32> to vector<128x1xf32>
    %44 = vector.broadcast %43 : vector<128x1xf32> to vector<128x128xf32>
    %45 = arith.subf %41, %44 : vector<128x128xf32>
    %46 = math.exp %45 : vector<128x128xf32>
    %cst_24 = arith.constant dense<0.000000e+00> : vector<128xf32>
    %47 = vector.multi_reduction <add>, %46, %cst_24 [1] : vector<128x128xf32> to vector<128xf32>
    %48 = vector.shape_cast %47 : vector<128xf32> to vector<128x1xf32>
    %49 = tpu.reciprocal %48 {approx = true} : vector<128x1xf32> -> vector<128x1xf32>
    %50 = vector.broadcast %49 : vector<128x1xf32> to vector<128x128xf32>
    %51 = arith.mulf %46, %50 : vector<128x128xf32>
    %52 = arith.truncf %51 : vector<128x128xf32> to vector<128x128xbf16>
    %cst_25 = arith.constant dense<0.000000e+00> : vector<128x32xf32>
    %53 = tpu.matmul %52, %40, %cst_25 {dimension_numbers = #tpu.dot_dimension_numbers<[1], [0], [0], [1], [0, 0, 1, 1], [], []>} : vector<128x128xbf16>, vector<128x32xbf16>, vector<128x32xf32> -> vector<128x32xf32>
    %54 = arith.truncf %53 : vector<128x32xf32> to vector<128x32xbf16>
    %c0_26 = arith.constant 0 : index
    %c32 = arith.constant 32 : index
    %55 = vector.load %arg11[%c0_26, %c32] : memref<128x128xbf16, #tpu.memory_space<vmem>>, vector<128x32xbf16>
    tpu.vector_store %arg11[%c0_26, %c32], %54 {strides = array<i32>} : memref<128x128xbf16, #tpu.memory_space<vmem>>, vector<128x32xbf16>,
    %56 = vector.extract_strided_slice %17 {offsets = [0, 64], sizes = [128, 32], strides = [1, 1]} : vector<128x128xbf16> to vector<128x32xbf16>
    %57 = vector.extract_strided_slice %18 {offsets = [0, 64], sizes = [128, 32], strides = [1, 1]} : vector<128x128xbf16> to vector<128x32xbf16>
    %58 = vector.extract_strided_slice %19 {offsets = [0, 64], sizes = [128, 32], strides = [1, 1]} : vector<128x128xbf16> to vector<128x32xbf16>
    "tpu.trace_start"() <{level = 10 : i32, message = "td,sd->ts"}> : () -> ()
    %cst_27 = arith.constant dense<0.000000e+00> : vector<128x128xf32>
    %59 = tpu.matmul %56, %57, %cst_27 {dimension_numbers = #tpu.dot_dimension_numbers<[1], [1], [0], [0], [0, 0, 1, 0], [], []>} : vector<128x32xbf16>, vector<128x32xbf16>, vector<128x128xf32> -> vector<128x128xf32>
    "tpu.trace_stop"() : () -> ()
    %cst_28 = arith.constant dense<0xFF800000> : vector<128xf32>
    %60 = vector.multi_reduction <maximumf>, %59, %cst_28 [1] : vector<128x128xf32> to vector<128xf32>
    %61 = vector.shape_cast %60 : vector<128xf32> to vector<128x1xf32>
    %62 = vector.broadcast %61 : vector<128x1xf32> to vector<128x128xf32>
    %63 = arith.subf %59, %62 : vector<128x128xf32>
    %64 = math.exp %63 : vector<128x128xf32>
    %cst_29 = arith.constant dense<0.000000e+00> : vector<128xf32>
    %65 = vector.multi_reduction <add>, %64, %cst_29 [1] : vector<128x128xf32> to vector<128xf32>
    %66 = vector.shape_cast %65 : vector<128xf32> to vector<128x1xf32>
    %67 = tpu.reciprocal %66 {approx = true} : vector<128x1xf32> -> vector<128x1xf32>
    %68 = vector.broadcast %67 : vector<128x1xf32> to vector<128x128xf32>
    %69 = arith.mulf %64, %68 : vector<128x128xf32>
    %70 = arith.truncf %69 : vector<128x128xf32> to vector<128x128xbf16>
    %cst_30 = arith.constant dense<0.000000e+00> : vector<128x32xf32>
    %71 = tpu.matmul %70, %58, %cst_30 {dimension_numbers = #tpu.dot_dimension_numbers<[1], [0], [0], [1], [0, 0, 1, 1], [], []>} : vector<128x128xbf16>, vector<128x32xbf16>, vector<128x32xf32> -> vector<128x32xf32>
    %72 = arith.truncf %71 : vector<128x32xf32> to vector<128x32xbf16>
    %c0_31 = arith.constant 0 : index
    %c64 = arith.constant 64 : index
    %73 = vector.load %arg11[%c0_31, %c64] : memref<128x128xbf16, #tpu.memory_space<vmem>>, vector<128x32xbf16>
    tpu.vector_store %arg11[%c0_31, %c64], %72 {strides = array<i32>} : memref<128x128xbf16, #tpu.memory_space<vmem>>, vector<128x32xbf16>,
    %74 = vector.extract_strided_slice %17 {offsets = [0, 96], sizes = [128, 32], strides = [1, 1]} : vector<128x128xbf16> to vector<128x32xbf16>
    %75 = vector.extract_strided_slice %18 {offsets = [0, 96], sizes = [128, 32], strides = [1, 1]} : vector<128x128xbf16> to vector<128x32xbf16>
    %76 = vector.extract_strided_slice %19 {offsets = [0, 96], sizes = [128, 32], strides = [1, 1]} : vector<128x128xbf16> to vector<128x32xbf16>
    "tpu.trace_start"() <{level = 10 : i32, message = "td,sd->ts"}> : () -> ()
    %cst_32 = arith.constant dense<0.000000e+00> : vector<128x128xf32>
    %77 = tpu.matmul %74, %75, %cst_32 {dimension_numbers = #tpu.dot_dimension_numbers<[1], [1], [0], [0], [0, 0, 1, 0], [], []>} : vector<128x32xbf16>, vector<128x32xbf16>, vector<128x128xf32> -> vector<128x128xf32>
    "tpu.trace_stop"() : () -> ()
    %cst_33 = arith.constant dense<0xFF800000> : vector<128xf32>
    %78 = vector.multi_reduction <maximumf>, %77, %cst_33 [1] : vector<128x128xf32> to vector<128xf32>
    %79 = vector.shape_cast %78 : vector<128xf32> to vector<128x1xf32>
    %80 = vector.broadcast %79 : vector<128x1xf32> to vector<128x128xf32>
    %81 = arith.subf %77, %80 : vector<128x128xf32>
    %82 = math.exp %81 : vector<128x128xf32>
    %cst_34 = arith.constant dense<0.000000e+00> : vector<128xf32>
    %83 = vector.multi_reduction <add>, %82, %cst_34 [1] : vector<128x128xf32> to vector<128xf32>
    %84 = vector.shape_cast %83 : vector<128xf32> to vector<128x1xf32>
    %85 = tpu.reciprocal %84 {approx = true} : vector<128x1xf32> -> vector<128x1xf32>
    %86 = vector.broadcast %85 : vector<128x1xf32> to vector<128x128xf32>
    %87 = arith.mulf %82, %86 : vector<128x128xf32>
    %88 = arith.truncf %87 : vector<128x128xf32> to vector<128x128xbf16>
    %cst_35 = arith.constant dense<0.000000e+00> : vector<128x32xf32>
    %89 = tpu.matmul %88, %76, %cst_35 {dimension_numbers = #tpu.dot_dimension_numbers<[1], [0], [0], [1], [0, 0, 1, 1], [], []>} : vector<128x128xbf16>, vector<128x32xbf16>, vector<128x32xf32> -> vector<128x32xf32>
    %90 = arith.truncf %89 : vector<128x32xf32> to vector<128x32xbf16>
    %c0_36 = arith.constant 0 : index
    %c96 = arith.constant 96 : index
    %91 = vector.load %arg11[%c0_36, %c96] : memref<128x128xbf16, #tpu.memory_space<vmem>>, vector<128x32xbf16>
    tpu.vector_store %arg11[%c0_36, %c96], %90 {strides = array<i32>} : memref<128x128xbf16, #tpu.memory_space<vmem>>, vector<128x32xbf16>,
    %c0_37 = arith.constant 0 : index
    %c0_38 = arith.constant 0 : index
    %92 = vector.load %arg11[%c0_37, %c0_38] : memref<128x128xbf16, #tpu.memory_space<vmem>>, vector<128x128xbf16>
    %c0_39 = arith.constant 0 : index
    %c0_40 = arith.constant 0 : index
    %93 = vector.load %arg8[%c0_39, %c0_40] : memref<128x128xbf16, #tpu.memory_space<vmem>>, vector<128x128xbf16>
    %cst_41 = arith.constant dense<0.000000e+00> : vector<128x128xf32>
    %94 = tpu.matmul %92, %93, %cst_41 {dimension_numbers = #tpu.dot_dimension_numbers<[1], [0], [0], [1], [0, 0, 1, 1], [], []>} : vector<128x128xbf16>, vector<128x128xbf16>, vector<128x128xf32> -> vector<128x128xf32>
    %c0_42 = arith.constant 0 : index
    %c0_43 = arith.constant 0 : index
    %95 = vector.load %arg9[%c0_42, %c0_43] : memref<1x128xf32, #tpu.memory_space<vmem>>, vector<1x128xf32>
    %96 = vector.broadcast %95 : vector<1x128xf32> to vector<128x128xf32>
    %97 = arith.addf %94, %96 : vector<128x128xf32>
    %c0_44 = arith.constant 0 : index
    %c0_45 = arith.constant 0 : index
    %c0_46 = arith.constant 0 : index
    %98 = vector.load %arg10[%c0_44, %c0_45, %c0_46] : memref<1x128x128xf32, #tpu.memory_space<vmem>>, vector<1x128x128xf32>
    %99 = vector.shape_cast %98 : vector<1x128x128xf32> to vector<128x128xf32>
    %100 = vector.shape_cast %97 : vector<128x128xf32> to vector<1x128x128xf32>
    tpu.vector_store %arg10[%c0_44, %c0_45, %c0_46], %100 {strides = array<i32>} : memref<1x128x128xf32, #tpu.memory_space<vmem>>, vector<1x128x128xf32>,
    return
  }
  func.func @transform_0(%arg0: i32) -> (i32, i32, i32) {
    %c0_i32 = arith.constant 0 : i32
    %c0_i32_0 = arith.constant 0 : i32
    %c0_i32_1 = arith.constant 0 : i32
    return %arg0, %c0_i32, %c0_i32_0 : i32, i32, i32
  }
  func.func @transform_1(%arg0: i32) -> (i32, i32) {
    %c0_i32 = arith.constant 0 : i32
    %c0_i32_0 = arith.constant 0 : i32
    %c0_i32_1 = arith.constant 0 : i32
    return %c0_i32, %c0_i32_0 : i32, i32
  }
  func.func @transform_2(%arg0: i32) -> (i32, i32) {
    %c0_i32 = arith.constant 0 : i32
    %c0_i32_0 = arith.constant 0 : i32
    %c0_i32_1 = arith.constant 0 : i32
    return %c0_i32, %c0_i32_0 : i32, i32
  }
  func.func @transform_3(%arg0: i32) -> (i32, i32) {
    %c0_i32 = arith.constant 0 : i32
    %c0_i32_0 = arith.constant 0 : i32
    %c0_i32_1 = arith.constant 0 : i32
    return %c0_i32, %c0_i32_0 : i32, i32
  }
  func.func @transform_4(%arg0: i32) -> (i32, i32) {
    %c0_i32 = arith.constant 0 : i32
    %c0_i32_0 = arith.constant 0 : i32
    %c0_i32_1 = arith.constant 0 : i32
    return %c0_i32, %c0_i32_0 : i32, i32
  }
  func.func @transform_5(%arg0: i32) -> (i32, i32) {
    %c0_i32 = arith.constant 0 : i32
    %c0_i32_0 = arith.constant 0 : i32
    %c0_i32_1 = arith.constant 0 : i32
    return %c0_i32, %c0_i32_0 : i32, i32
  }
  func.func @transform_6(%arg0: i32) -> (i32, i32) {
    %c0_i32 = arith.constant 0 : i32
    %c0_i32_0 = arith.constant 0 : i32
    %c0_i32_1 = arith.constant 0 : i32
    return %c0_i32, %c0_i32_0 : i32, i32
  }
  func.func @transform_7(%arg0: i32) -> (i32, i32) {
    %c0_i32 = arith.constant 0 : i32
    %c0_i32_0 = arith.constant 0 : i32
    %c0_i32_1 = arith.constant 0 : i32
    return %c0_i32, %c0_i32_0 : i32, i32
  }
  func.func @transform_8(%arg0: i32) -> (i32, i32) {
    %c0_i32 = arith.constant 0 : i32
    %c0_i32_0 = arith.constant 0 : i32
    %c0_i32_1 = arith.constant 0 : i32
    return %c0_i32, %c0_i32_0 : i32, i32
  }
  func.func @transform_9(%arg0: i32) -> (i32, i32, i32) {
    %c0_i32 = arith.constant 0 : i32
    %c0_i32_0 = arith.constant 0 : i32
    %c0_i32_1 = arith.constant 0 : i32
    return %arg0, %c0_i32, %c0_i32_0 : i32, i32, i32
  }
}

</mosaic_0001>

<llo_original>
// kernel: tpu_custom_call.1
$region0: #{tpu_custom_call.1}
  #allocation0 [shape = 'u32[]', space=smem, size = 0x4, offset = 0x4, fixed_abs, tag = 'smem constant byte address 0x4 - core index']
  #allocation1 [shape = 'u32[144,128]{1,0:T(1,128)}', space=vmem, size = 0x12000, scoped, tag = 'internal scratch']
  #allocation2 [shape = 'bf16[128,128]{1,0:T(16,128)(2,1)}', space=vmem, size = 0x8000, scoped, tag = 'scratch operand']
  %s0 = inlined_call_operand.hbm [shape: bf16[2,128,128], index: 0, kind: input, shape index: {}]
  %s1 = inlined_call_operand.hbm [shape: bf16[128,128], index: 1, kind: input, shape index: {}]
  %s2 = inlined_call_operand.hbm [shape: f32[1,128], index: 2, kind: input, shape index: {}]
  %s3 = inlined_call_operand.hbm [shape: bf16[128,128], index: 3, kind: input, shape index: {}]
  %s4 = inlined_call_operand.hbm [shape: f32[1,128], index: 4, kind: input, shape index: {}]
  %s5 = inlined_call_operand.hbm [shape: bf16[128,128], index: 5, kind: input, shape index: {}]
  %s6 = inlined_call_operand.hbm [shape: f32[1,128], index: 6, kind: input, shape index: {}]
  %s7 = inlined_call_operand.hbm [shape: bf16[128,128], index: 7, kind: input, shape index: {}]
  %s8 = inlined_call_operand.hbm [shape: f32[1,128], index: 8, kind: input, shape index: {}]
  %s9 = inlined_call_operand.hbm [shape: f32[2,128,128], index: 9, kind: output, shape index: {}]
  %s10 = sld [smem:[#allocation0]]
  $region105: #{tpu_custom_call.1} parent=0
    _
  %s12 = ssub.s32 1, %s10
  %s13 = scalar_select 0, %s12, %s10
  $region1: #{tpu_custom_call.1} parent=0
    #allocation3 [shape = 'u8[65536]{0}', space=vmem, size = 0x10000, scoped, tag = 'input window, operand 0']
    #allocation4 [shape = 's32[2]{0}', space=sflag, size = 0x8, scoped, tag = 'scoped memory for tpu_custom_call.1']
    #allocation5 [shape = 's32[2]{0}', space=sflag, size = 0x8, scoped, tag = 'scoped memory for tpu_custom_call.1']
    #allocation6 [shape = 'u8[32768]{0}', space=vmem, size = 0x8000, scoped, tag = 'input window, operand 1, single buffered']
    #allocation7 [shape = 's32[1]{0}', space=sflag, size = 0x4, scoped, tag = 'scoped memory for tpu_custom_call.1']
    #allocation8 [shape = 'u8[512]{0}', space=vmem, size = 0x400, scoped, tag = 'input window, operand 2, single buffered']
    #allocation9 [shape = 'u8[32768]{0}', space=vmem, size = 0x8000, scoped, tag = 'input window, operand 3, single buffered']
    #allocation10 [shape = 's32[1]{0}', space=sflag, size = 0x4, scoped, tag = 'scoped memory for tpu_custom_call.1']
    #allocation11 [shape = 'u8[512]{0}', space=vmem, size = 0x400, scoped, tag = 'input window, operand 4, single buffered']
    #allocation12 [shape = 'u8[32768]{0}', space=vmem, size = 0x8000, scoped, tag = 'input window, operand 5, single buffered']
    #allocation13 [shape = 's32[1]{0}', space=sflag, size = 0x4, scoped, tag = 'scoped memory for tpu_custom_call.1']
    #allocation14 [shape = 'u8[512]{0}', space=vmem, size = 0x400, scoped, tag = 'input window, operand 6, single buffered']
    #allocation15 [shape = 'u8[32768]{0}', space=vmem, size = 0x8000, scoped, tag = 'input window, operand 7, single buffered']
    #allocation16 [shape = 's32[1]{0}', space=sflag, size = 0x4, scoped, tag = 'scoped memory for tpu_custom_call.1']
    #allocation17 [shape = 'u8[512]{0}', space=vmem, size = 0x400, scoped, tag = 'input window, operand 8, single buffered']
    #allocation18 [shape = 'u8[131072]{0}', space=vmem, size = 0x20000, scoped, tag = 'output window, operand 0']
    %14 = vsyncpa [#allocation4], 0
    %s15 = scalar_lea.sflag [#allocation4], 1
    %16 = vsyncpa %s15, 0
    %17 = vsyncpa [#allocation7], 0
    %18 = vsyncpa [#allocation10], 0
    %19 = vsyncpa [#allocation13], 0
    %20 = vsyncpa [#allocation16], 0
    %21 = vsyncpa [#allocation5], 0
    %s22 = scalar_lea.sflag [#allocation5], 1
    %23 = vsyncpa %s22, 0
    loop: start=0, step=1, limit=4
    $region2: #{tpu_custom_call.1} parent=1 // loop_pre_header
      _
    $region3: #{tpu_custom_call.1} parent=1 // loop_header
      %s25 = sphi 0, %s29
      %p26 = scmp.ge.s32.totalorder %s25, 4
      %s35 = sphi 0, %s37
      %s38 = sphi 0, %s35
      %s39 = sphi 0, %s38
      %s55 = sphi 0, %s39
      %s59 = sphi 0, %s59
      %s61 = sphi 0, %s59
      %s62 = sphi 0, %s61
      %s76 = sphi 0, %s62
      %s80 = sphi 0, %s80
      %s82 = sphi 0, %s80
      %s83 = sphi 0, %s82
      %s97 = sphi 0, %s83
      %s101 = sphi 0, %s101
      %s103 = sphi 0, %s101
      %s104 = sphi 0, %s103
      %s118 = sphi 0, %s104
      %s122 = sphi 0, %s122
      %s124 = sphi 0, %s122
      %s125 = sphi 0, %s124
      %s139 = sphi 0, %s125
      %s143 = sphi 0, %s143
      %s145 = sphi 0, %s143
      %s146 = sphi 0, %s145
      %s160 = sphi 0, %s146
      %s164 = sphi 0, %s164
      %s166 = sphi 0, %s164
      %s167 = sphi 0, %s166
      %s181 = sphi 0, %s167
      %s185 = sphi 0, %s185
      %s187 = sphi 0, %s185
      %s188 = sphi 0, %s187
      %s202 = sphi 0, %s188
      %s206 = sphi 0, %s206
      %s208 = sphi 0, %s206
      %s209 = sphi 0, %s208
      %s223 = sphi 0, %s209
      %s229 = sphi 0, %s231
      %s232 = sphi 0, %s229
      %s233 = sphi 0, %s232
      %s249 = sphi 0, %s233
    $region4: #{tpu_custom_call.1} parent=1 // loop_header_branch
      %28 = sbr.rel (%p26) target = $region8
    $region5: #{tpu_custom_call.1} parent=1 // loop_body
      %s30 = ssub.s32 %s25, 1
      %s31 = ssub.s32 %s25, 2
      %s32 = sadd.s32 %s25, 1
      %s33 = ssub.s32 %s25, %s32
      %p34 = scmp.eq.s32.totalorder %s33, 0
      %s36 = sadd.s32 %s35, 1
      %s37 = scalar_select %p34, %s35, %s36
      %p40 = pneg %p34
      %p41 = scmp.eq.s32.totalorder %s25, 1
      %p42 = por %p40, %p41
      %p43 = scmp.ne.s32.totalorder %s35, %s38
      %p44 = scmp.eq.s32.totalorder %s25, 0
      %p45 = por %p43, %p44
      %p46 = scmp.ne.s32.totalorder %s35, %s38
      %p47 = scmp.eq.s32.totalorder %s30, 1
      %p48 = por %p46, %p47
      %p49 = scmp.ne.s32.totalorder %s38, %s39
      %p50 = scmp.eq.s32.totalorder %s30, 0
      %p51 = por %p49, %p50
      %p52 = scmp.ne.s32.totalorder %s38, %s39
      %p53 = scmp.eq.s32.totalorder %s31, 1
      %p54 = por %p52, %p53
      %p56 = scmp.ne.s32.totalorder %s39, %s55
      %p57 = scmp.eq.s32.totalorder %s31, 0
      %p58 = por %p56, %p57
      %s60 = sadd.s32 %s59, 1
      %p63 = scmp.eq.s32.totalorder %s25, 1
      %p64 = scmp.ne.s32.totalorder %s59, %s61
      %p65 = scmp.eq.s32.totalorder %s25, 0
      %p66 = por %p64, %p65
      %p67 = scmp.ne.s32.totalorder %s59, %s61
      %p68 = scmp.eq.s32.totalorder %s30, 1
      %p69 = por %p67, %p68
      %p70 = scmp.ne.s32.totalorder %s61, %s62
      %p71 = scmp.eq.s32.totalorder %s30, 0
      %p72 = por %p70, %p71
      %p73 = scmp.ne.s32.totalorder %s61, %s62
      %p74 = scmp.eq.s32.totalorder %s31, 1
      %p75 = por %p73, %p74
      %p77 = scmp.ne.s32.totalorder %s62, %s76
      %p78 = scmp.eq.s32.totalorder %s31, 0
      %p79 = por %p77, %p78
      %s81 = sadd.s32 %s80, 1
      %p84 = scmp.eq.s32.totalorder %s25, 1
      %p85 = scmp.ne.s32.totalorder %s80, %s82
      %p86 = scmp.eq.s32.totalorder %s25, 0
      %p87 = por %p85, %p86
      %p88 = scmp.ne.s32.totalorder %s80, %s82
      %p89 = scmp.eq.s32.totalorder %s30, 1
      %p90 = por %p88, %p89
      %p91 = scmp.ne.s32.totalorder %s82, %s83
      %p92 = scmp.eq.s32.totalorder %s30, 0
      %p93 = por %p91, %p92
      %p94 = scmp.ne.s32.totalorder %s82, %s83
      %p95 = scmp.eq.s32.totalorder %s31, 1
      %p96 = por %p94, %p95
      %p98 = scmp.ne.s32.totalorder %s83, %s97
      %p99 = scmp.eq.s32.totalorder %s31, 0
      %p100 = por %p98, %p99
      %s102 = sadd.s32 %s101, 1
      %p105 = scmp.eq.s32.totalorder %s25, 1
      %p106 = scmp.ne.s32.totalorder %s101, %s103
      %p107 = scmp.eq.s32.totalorder %s25, 0
      %p108 = por %p106, %p107
      %p109 = scmp.ne.s32.totalorder %s101, %s103
      %p110 = scmp.eq.s32.totalorder %s30, 1
      %p111 = por %p109, %p110
      %p112 = scmp.ne.s32.totalorder %s103, %s104
      %p113 = scmp.eq.s32.totalorder %s30, 0
      %p114 = por %p112, %p113
      %p115 = scmp.ne.s32.totalorder %s103, %s104
      %p116 = scmp.eq.s32.totalorder %s31, 1
      %p117 = por %p115, %p116
      %p119 = scmp.ne.s32.totalorder %s104, %s118
      %p120 = scmp.eq.s32.totalorder %s31, 0
      %p121 = por %p119, %p120
      %s123 = sadd.s32 %s122, 1
      %p126 = scmp.eq.s32.totalorder %s25, 1
      %p127 = scmp.ne.s32.totalorder %s122, %s124
      %p128 = scmp.eq.s32.totalorder %s25, 0
      %p129 = por %p127, %p128
      %p130 = scmp.ne.s32.totalorder %s122, %s124
      %p131 = scmp.eq.s32.totalorder %s30, 1
      %p132 = por %p130, %p131
      %p133 = scmp.ne.s32.totalorder %s124, %s125
      %p134 = scmp.eq.s32.totalorder %s30, 0
      %p135 = por %p133, %p134
      %p136 = scmp.ne.s32.totalorder %s124, %s125
      %p137 = scmp.eq.s32.totalorder %s31, 1
      %p138 = por %p136, %p137
      %p140 = scmp.ne.s32.totalorder %s125, %s139
      %p141 = scmp.eq.s32.totalorder %s31, 0
      %p142 = por %p140, %p141
      %s144 = sadd.s32 %s143, 1
      %p147 = scmp.eq.s32.totalorder %s25, 1
      %p148 = scmp.ne.s32.totalorder %s143, %s145
      %p149 = scmp.eq.s32.totalorder %s25, 0
      %p150 = por %p148, %p149
      %p151 = scmp.ne.s32.totalorder %s143, %s145
      %p152 = scmp.eq.s32.totalorder %s30, 1
      %p153 = por %p151, %p152
      %p154 = scmp.ne.s32.totalorder %s145, %s146
      %p155 = scmp.eq.s32.totalorder %s30, 0
      %p156 = por %p154, %p155
      %p157 = scmp.ne.s32.totalorder %s145, %s146
      %p158 = scmp.eq.s32.totalorder %s31, 1
      %p159 = por %p157, %p158
      %p161 = scmp.ne.s32.totalorder %s146, %s160
      %p162 = scmp.eq.s32.totalorder %s31, 0
      %p163 = por %p161, %p162
      %s165 = sadd.s32 %s164, 1
      %p168 = scmp.eq.s32.totalorder %s25, 1
      %p169 = scmp.ne.s32.totalorder %s164, %s166
      %p170 = scmp.eq.s32.totalorder %s25, 0
      %p171 = por %p169, %p170
      %p172 = scmp.ne.s32.totalorder %s164, %s166
      %p173 = scmp.eq.s32.totalorder %s30, 1
      %p174 = por %p172, %p173
      %p175 = scmp.ne.s32.totalorder %s166, %s167
      %p176 = scmp.eq.s32.totalorder %s30, 0
      %p177 = por %p175, %p176
      %p178 = scmp.ne.s32.totalorder %s166, %s167
      %p179 = scmp.eq.s32.totalorder %s31, 1
      %p180 = por %p178, %p179
      %p182 = scmp.ne.s32.totalorder %s167, %s181
      %p183 = scmp.eq.s32.totalorder %s31, 0
      %p184 = por %p182, %p183
      %s186 = sadd.s32 %s185, 1
      %p189 = scmp.eq.s32.totalorder %s25, 1
      %p190 = scmp.ne.s32.totalorder %s185, %s187
      %p191 = scmp.eq.s32.totalorder %s25, 0
      %p192 = por %p190, %p191
      %p193 = scmp.ne.s32.totalorder %s185, %s187
      %p194 = scmp.eq.s32.totalorder %s30, 1
      %p195 = por %p193, %p194
      %p196 = scmp.ne.s32.totalorder %s187, %s188
      %p197 = scmp.eq.s32.totalorder %s30, 0
      %p198 = por %p196, %p197
      %p199 = scmp.ne.s32.totalorder %s187, %s188
      %p200 = scmp.eq.s32.totalorder %s31, 1
      %p201 = por %p199, %p200
      %p203 = scmp.ne.s32.totalorder %s188, %s202
      %p204 = scmp.eq.s32.totalorder %s31, 0
      %p205 = por %p203, %p204
      %s207 = sadd.s32 %s206, 1
      %p210 = scmp.eq.s32.totalorder %s25, 1
      %p211 = scmp.ne.s32.totalorder %s206, %s208
      %p212 = scmp.eq.s32.totalorder %s25, 0
      %p213 = por %p211, %p212
      %p214 = scmp.ne.s32.totalorder %s206, %s208
      %p215 = scmp.eq.s32.totalorder %s30, 1
      %p216 = por %p214, %p215
      %p217 = scmp.ne.s32.totalorder %s208, %s209
      %p218 = scmp.eq.s32.totalorder %s30, 0
      %p219 = por %p217, %p218
      %p220 = scmp.ne.s32.totalorder %s208, %s209
      %p221 = scmp.eq.s32.totalorder %s31, 1
      %p222 = por %p220, %p221
      %p224 = scmp.ne.s32.totalorder %s209, %s223
      %p225 = scmp.eq.s32.totalorder %s31, 0
      %p226 = por %p224, %p225
      %s227 = ssub.s32 %s25, %s32
      %p228 = scmp.eq.s32.totalorder %s227, 0
      %s230 = sadd.s32 %s229, 1
      %s231 = scalar_select %p228, %s229, %s230
      %p234 = pneg %p228
      %p235 = scmp.eq.s32.totalorder %s25, 1
      %p236 = por %p234, %p235
      %p237 = scmp.ne.s32.totalorder %s229, %s232
      %p238 = scmp.eq.s32.totalorder %s25, 0
      %p239 = por %p237, %p238
      %p240 = scmp.ne.s32.totalorder %s229, %s232
      %p241 = scmp.eq.s32.totalorder %s30, 1
      %p242 = por %p240, %p241
      %p243 = scmp.ne.s32.totalorder %s232, %s233
      %p244 = scmp.eq.s32.totalorder %s30, 0
      %p245 = por %p243, %p244
      %p246 = scmp.ne.s32.totalorder %s232, %s233
      %p247 = scmp.eq.s32.totalorder %s31, 1
      %p248 = por %p246, %p247
      %p250 = scmp.ne.s32.totalorder %s233, %s249
      %p251 = scmp.eq.s32.totalorder %s31, 0
      %p252 = por %p250, %p251
      %p253 = scmp.le.s32.totalorder 1, %s25
      %p254 = scmp.lt.s32.totalorder %s25, 3
      %p255 = pnand %p253, %p254
      %p256 = pneg %p255
      // Predicated region
      $region9: #{tpu_custom_call.1} parent=5 // pred_check
        _
      $region10: #{tpu_custom_call.1} parent=5 // pred_check_branch
        %258 = sbr.rel (%p255) target = $region12
      $region11: #{tpu_custom_call.1} parent=5 // pred_region
        %s259 = ssub.s32 %s25, 1
        // Predicated region
        $region13: #{tpu_custom_call.1} parent=11 // pred_check
          %p260 = pneg %p72
        $region14: #{tpu_custom_call.1} parent=11 // pred_check_branch
          %262 = sbr.rel (%p260) target = $region16
        $region15: #{tpu_custom_call.1} parent=11 // pred_region
          %s264 = ssub.s32 1024, 1024
          %265 = vsyncadd [#allocation7], %s264
          %s266 = sshll.u32 [#allocation6], 4
          %s267 = int_to_ptr.vmem [resolvable:$true] %s266
          %272 = dma.hbm_to_vmem [thread:$0]  %s1, 1024, %s267, [#allocation7], 64, 64, 4
        $region16: #{tpu_custom_call.1} parent=11 // pred_fallthru
          _
        // Predicated region
        $region17: #{tpu_custom_call.1} parent=11 // pred_check
          %p273 = pneg %p93
        $region18: #{tpu_custom_call.1} parent=11 // pred_check_branch
          %275 = sbr.rel (%p273) target = $region20
        $region19: #{tpu_custom_call.1} parent=11 // pred_region
          %s277 = ssub.s32 16, 16
          %278 = vsyncadd [#allocation7], %s277
          %s280 = sshll.u32 [#allocation8], 4
          %s281 = int_to_ptr.vmem [resolvable:$true] %s280
          %283 = dma.hbm_to_vmem [thread:$0]  %s2, 16, %s281, [#allocation7]
        $region20: #{tpu_custom_call.1} parent=11 // pred_fallthru
          _
        // Predicated region
        $region21: #{tpu_custom_call.1} parent=11 // pred_check
          %p284 = pneg %p114
        $region22: #{tpu_custom_call.1} parent=11 // pred_check_branch
          %286 = sbr.rel (%p284) target = $region24
        $region23: #{tpu_custom_call.1} parent=11 // pred_region
          %s288 = ssub.s32 1024, 1024
          %289 = vsyncadd [#allocation10], %s288
          %s290 = sshll.u32 [#allocation9], 4
          %s291 = int_to_ptr.vmem [resolvable:$true] %s290
          %296 = dma.hbm_to_vmem [thread:$0]  %s3, 1024, %s291, [#allocation10], 64, 64, 4
        $region24: #{tpu_custom_call.1} parent=11 // pred_fallthru
          _
        // Predicated region
        $region25: #{tpu_custom_call.1} parent=11 // pred_check
          %p297 = pneg %p135
        $region26: #{tpu_custom_call.1} parent=11 // pred_check_branch
          %299 = sbr.rel (%p297) target = $region28
        $region27: #{tpu_custom_call.1} parent=11 // pred_region
          %s301 = ssub.s32 16, 16
          %302 = vsyncadd [#allocation10], %s301
          %s304 = sshll.u32 [#allocation11], 4
          %s305 = int_to_ptr.vmem [resolvable:$true] %s304
          %307 = dma.hbm_to_vmem [thread:$0]  %s4, 16, %s305, [#allocation10]
        $region28: #{tpu_custom_call.1} parent=11 // pred_fallthru
          _
        // Predicated region
        $region29: #{tpu_custom_call.1} parent=11 // pred_check
          %p308 = pneg %p156
        $region30: #{tpu_custom_call.1} parent=11 // pred_check_branch
          %310 = sbr.rel (%p308) target = $region32
        $region31: #{tpu_custom_call.1} parent=11 // pred_region
          %s312 = ssub.s32 1024, 1024
          %313 = vsyncadd [#allocation13], %s312
          %s314 = sshll.u32 [#allocation12], 4
          %s315 = int_to_ptr.vmem [resolvable:$true] %s314
          %320 = dma.hbm_to_vmem [thread:$0]  %s5, 1024, %s315, [#allocation13], 64, 64, 4
        $region32: #{tpu_custom_call.1} parent=11 // pred_fallthru
          _
        // Predicated region
        $region33: #{tpu_custom_call.1} parent=11 // pred_check
          %p321 = pneg %p177
        $region34: #{tpu_custom_call.1} parent=11 // pred_check_branch
          %323 = sbr.rel (%p321) target = $region36
        $region35: #{tpu_custom_call.1} parent=11 // pred_region
          %s325 = ssub.s32 16, 16
          %326 = vsyncadd [#allocation13], %s325
          %s328 = sshll.u32 [#allocation14], 4
          %s329 = int_to_ptr.vmem [resolvable:$true] %s328
          %331 = dma.hbm_to_vmem [thread:$0]  %s6, 16, %s329, [#allocation13]
        $region36: #{tpu_custom_call.1} parent=11 // pred_fallthru
          _
        // Predicated region
        $region37: #{tpu_custom_call.1} parent=11 // pred_check
          %p332 = pneg %p198
        $region38: #{tpu_custom_call.1} parent=11 // pred_check_branch
          %334 = sbr.rel (%p332) target = $region40
        $region39: #{tpu_custom_call.1} parent=11 // pred_region
          %s336 = ssub.s32 1024, 1024
          %337 = vsyncadd [#allocation16], %s336
          %s338 = sshll.u32 [#allocation15], 4
          %s339 = int_to_ptr.vmem [resolvable:$true] %s338
          %344 = dma.hbm_to_vmem [thread:$0]  %s7, 1024, %s339, [#allocation16], 64, 64, 4
        $region40: #{tpu_custom_call.1} parent=11 // pred_fallthru
          _
        // Predicated region
        $region41: #{tpu_custom_call.1} parent=11 // pred_check
          %p345 = pneg %p219
        $region42: #{tpu_custom_call.1} parent=11 // pred_check_branch
          %347 = sbr.rel (%p345) target = $region44
        $region43: #{tpu_custom_call.1} parent=11 // pred_region
          %s349 = ssub.s32 16, 16
          %350 = vsyncadd [#allocation16], %s349
          %s352 = sshll.u32 [#allocation17], 4
          %s353 = int_to_ptr.vmem [resolvable:$true] %s352
          %355 = dma.hbm_to_vmem [thread:$0]  %s8, 16, %s353, [#allocation16]
        $region44: #{tpu_custom_call.1} parent=11 // pred_fallthru
          _
      $region12: #{tpu_custom_call.1} parent=5 // pred_fallthru
        _
      %p356 = scmp.lt.s32.totalorder %s25, 2
      // Predicated region
      $region45: #{tpu_custom_call.1} parent=5 // pred_check
        %p357 = pneg %p356
      $region46: #{tpu_custom_call.1} parent=5 // pred_check_branch
        %359 = sbr.rel (%p357) target = $region48
      $region47: #{tpu_custom_call.1} parent=5 // pred_region
        // Predicated region
        $region49: #{tpu_custom_call.1} parent=47 // pred_check
          %p360 = pneg %p45
        $region50: #{tpu_custom_call.1} parent=47 // pred_check_branch
          %362 = sbr.rel (%p360) target = $region52
        $region51: #{tpu_custom_call.1} parent=47 // pred_region
          %s363 = sand.u32 %s35, 1
          %s364 = scalar_lea.sflag [#allocation4], %s363
          %s365 = sand.u32 %s35, 1
          %s366 = smul.addr %s365, 64
          %s367 = scalar_lea.vmem [#allocation3], %s366
          %s369 = ssub.s32 1024, 1024
          %370 = vsyncadd %s364, %s369
          %s371 = smul.addr %s25, 16
          %s372 = smul.addr %s371, 64
          %s373 = scalar_lea.hbm %s0, %s372
          %s374 = sshll.u32 %s367, 4
          %s375 = int_to_ptr.vmem [resolvable:$true] %s374
          %380 = dma.hbm_to_vmem [thread:$0]  %s373, 1024, %s375, %s364, 64, 64, 4
        $region52: #{tpu_custom_call.1} parent=47 // pred_fallthru
          _
      $region48: #{tpu_custom_call.1} parent=5 // pred_fallthru
        _
      %p381 = scmp.le.s32.totalorder 1, %s25
      %p382 = scmp.lt.s32.totalorder %s25, 3
      %p383 = pnand %p381, %p382
      %p384 = pneg %p383
      // Predicated region
      $region53: #{tpu_custom_call.1} parent=5 // pred_check
        _
      $region54: #{tpu_custom_call.1} parent=5 // pred_check_branch
        %386 = sbr.rel (%p383) target = $region56
      $region55: #{tpu_custom_call.1} parent=5 // pred_region
        %s387 = ssub.s32 %s25, 1
        %s388 = sand.u32 %s38, 1
        %s389 = scalar_lea.sflag [#allocation4], %s388
        %s390 = sand.u32 %s38, 1
        %s391 = smul.addr %s390, 64
        %s392 = scalar_lea.vmem [#allocation3], %s391
        // Predicated region
        $region57: #{tpu_custom_call.1} parent=55 // pred_check
          %p393 = pneg %p51
        $region58: #{tpu_custom_call.1} parent=55 // pred_check_branch
          %395 = sbr.rel (%p393) target = $region60
        $region59: #{tpu_custom_call.1} parent=55 // pred_region
          %396 = dma.done %s389, 1024
        $region60: #{tpu_custom_call.1} parent=55 // pred_fallthru
          _
        // Predicated region
        $region61: #{tpu_custom_call.1} parent=55 // pred_check
          %p397 = pneg %p72
        $region62: #{tpu_custom_call.1} parent=55 // pred_check_branch
          %399 = sbr.rel (%p397) target = $region64
        $region63: #{tpu_custom_call.1} parent=55 // pred_region
          %400 = dma.done [#allocation7], 1024
        $region64: #{tpu_custom_call.1} parent=55 // pred_fallthru
          _
        // Predicated region
        $region65: #{tpu_custom_call.1} parent=55 // pred_check
          %p401 = pneg %p93
        $region66: #{tpu_custom_call.1} parent=55 // pred_check_branch
          %403 = sbr.rel (%p401) target = $region68
        $region67: #{tpu_custom_call.1} parent=55 // pred_region
          %404 = dma.done [#allocation7], 16
        $region68: #{tpu_custom_call.1} parent=55 // pred_fallthru
          _
        // Predicated region
        $region69: #{tpu_custom_call.1} parent=55 // pred_check
          %p405 = pneg %p114
        $region70: #{tpu_custom_call.1} parent=55 // pred_check_branch
          %407 = sbr.rel (%p405) target = $region72
        $region71: #{tpu_custom_call.1} parent=55 // pred_region
          %408 = dma.done [#allocation10], 1024
        $region72: #{tpu_custom_call.1} parent=55 // pred_fallthru
          _
        // Predicated region
        $region73: #{tpu_custom_call.1} parent=55 // pred_check
          %p409 = pneg %p135
        $region74: #{tpu_custom_call.1} parent=55 // pred_check_branch
          %411 = sbr.rel (%p409) target = $region76
        $region75: #{tpu_custom_call.1} parent=55 // pred_region
          %412 = dma.done [#allocation10], 16
        $region76: #{tpu_custom_call.1} parent=55 // pred_fallthru
          _
        // Predicated region
        $region77: #{tpu_custom_call.1} parent=55 // pred_check
          %p413 = pneg %p156
        $region78: #{tpu_custom_call.1} parent=55 // pred_check_branch
          %415 = sbr.rel (%p413) target = $region80
        $region79: #{tpu_custom_call.1} parent=55 // pred_region
          %416 = dma.done [#allocation13], 1024
        $region80: #{tpu_custom_call.1} parent=55 // pred_fallthru
          _
        // Predicated region
        $region81: #{tpu_custom_call.1} parent=55 // pred_check
          %p417 = pneg %p177
        $region82: #{tpu_custom_call.1} parent=55 // pred_check_branch
          %419 = sbr.rel (%p417) target = $region84
        $region83: #{tpu_custom_call.1} parent=55 // pred_region
          %420 = dma.done [#allocation13], 16
        $region84: #{tpu_custom_call.1} parent=55 // pred_fallthru
          _
        // Predicated region
        $region85: #{tpu_custom_call.1} parent=55 // pred_check
          %p421 = pneg %p198
        $region86: #{tpu_custom_call.1} parent=55 // pred_check_branch
          %423 = sbr.rel (%p421) target = $region88
        $region87: #{tpu_custom_call.1} parent=55 // pred_region
          %424 = dma.done [#allocation16], 1024
        $region88: #{tpu_custom_call.1} parent=55 // pred_fallthru
          _
        // Predicated region
        $region89: #{tpu_custom_call.1} parent=55 // pred_check
          %p425 = pneg %p219
        $region90: #{tpu_custom_call.1} parent=55 // pred_check_branch
          %427 = sbr.rel (%p425) target = $region92
        $region91: #{tpu_custom_call.1} parent=55 // pred_region
          %428 = dma.done [#allocation16], 16
        $region92: #{tpu_custom_call.1} parent=55 // pred_fallthru
          _
        %s429 = sand.u32 %s38, 1
        %s430 = scalar_lea.sflag [#allocation4], %s429
        %s431 = sand.u32 %s38, 1
        %s432 = smul.addr %s431, 64
        %s433 = scalar_lea.vmem [#allocation3], %s432
        %p434 = pneg %p51
        %p435 = pneg %p48
        %p436 = pneg %p72
        %p437 = pneg %p69
        %p438 = pneg %p93
        %p439 = pneg %p90
        %p440 = pneg %p114
        %p441 = pneg %p111
        %p442 = pneg %p135
        %p443 = pneg %p132
        %p444 = pneg %p156
        %p445 = pneg %p153
        %p446 = pneg %p177
        %p447 = pneg %p174
        %p448 = pneg %p198
        %p449 = pneg %p195
        %p450 = pneg %p219
        %p451 = pneg %p216
        %p452 = pneg %p245
        %p453 = pneg %p242
        %s454 = sand.u32 %s232, 1
        %s455 = scalar_lea.sflag [#allocation5], %s454
        %s456 = sand.u32 %s232, 1
        %s457 = smul.addr %s456, 128
        %s458 = scalar_lea.vmem [#allocation18], %s457
        %v460 = vld [vmem:[%s392] sm:$0xf]
        %v461 = vld [vmem:[%s392 + $0x4] sm:$0xf]
        %v462 = vld [vmem:[%s392 + $0x8] sm:$0xf]
        %v463 = vld [vmem:[%s392 + $0xc] sm:$0xf]
        %v464 = vld [vmem:[%s392 + $0x10] sm:$0xf]
        %v465 = vld [vmem:[%s392 + $0x14] sm:$0xf]
        %v466 = vld [vmem:[%s392 + $0x18] sm:$0xf]
        %v467 = vld [vmem:[%s392 + $0x1c] sm:$0xf]
        %v468 = vld [vmem:[%s392 + $0x20] sm:$0xf]
        %v469 = vld [vmem:[%s392 + $0x24] sm:$0xf]
        %v470 = vld [vmem:[%s392 + $0x28] sm:$0xf]
        %v471 = vld [vmem:[%s392 + $0x2c] sm:$0xf]
        %v472 = vld [vmem:[%s392 + $0x30] sm:$0xf]
        %v473 = vld [vmem:[%s392 + $0x34] sm:$0xf]
        %v474 = vld [vmem:[%s392 + $0x38] sm:$0xf]
        %v475 = vld [vmem:[%s392 + $0x3c] sm:$0xf]
        %v476 = vld [vmem:[#allocation6] sm:$0xf]
        %v477 = vld [vmem:[#allocation6 + $0x4] sm:$0xf]
        %v478 = vld [vmem:[#allocation6 + $0x8] sm:$0xf]
        %v479 = vld [vmem:[#allocation6 + $0xc] sm:$0xf]
        %v480 = vld [vmem:[#allocation6 + $0x10] sm:$0xf]
        %v481 = vld [vmem:[#allocation6 + $0x14] sm:$0xf]
        %v482 = vld [vmem:[#allocation6 + $0x18] sm:$0xf]
        %v483 = vld [vmem:[#allocation6 + $0x1c] sm:$0xf]
        %v484 = vld [vmem:[#allocation6 + $0x20] sm:$0xf]
        %v485 = vld [vmem:[#allocation6 + $0x24] sm:$0xf]
        %v486 = vld [vmem:[#allocation6 + $0x28] sm:$0xf]
        %v487 = vld [vmem:[#allocation6 + $0x2c] sm:$0xf]
        %v488 = vld [vmem:[#allocation6 + $0x30] sm:$0xf]
        %v489 = vld [vmem:[#allocation6 + $0x34] sm:$0xf]
        %v490 = vld [vmem:[#allocation6 + $0x38] sm:$0xf]
        %v491 = vld [vmem:[#allocation6 + $0x3c] sm:$0xf]
        %v492 = vld [vmem:[#allocation8] sm:$0x1]
        %v494 = vlaneseq
        %v495 = vshrl.u32 %v494, 7
        %v496 = vsub.s32 0, %v495
        %v497 = vrot.slane %v492, %v496
        %v515 = vunpack.c.l.b16 %v460
        %v516 = vunpack.c.l.b16 %v461
        %v517 = vunpack.c.l.b16 %v462
        %v518 = vunpack.c.l.b16 %v463
        %v519 = vunpack.c.l.b16 %v464
        %v520 = vunpack.c.l.b16 %v465
        %v521 = vunpack.c.l.b16 %v466
        %v522 = vunpack.c.l.b16 %v467
        %v523 = vunpack.c.l.b16 %v468
        %v524 = vunpack.c.l.b16 %v469
        %v525 = vunpack.c.l.b16 %v470
        %v526 = vunpack.c.l.b16 %v471
        %v527 = vunpack.c.l.b16 %v472
        %v528 = vunpack.c.l.b16 %v473
        %v529 = vunpack.c.l.b16 %v474
        %v530 = vunpack.c.l.b16 %v475
        %v531 = vpack.c.b16 %v516, %v515
        %v532 = vpack.c.b16 %v518, %v517
        %v533 = vpack.c.b16 %v520, %v519
        %v534 = vpack.c.b16 %v522, %v521
        %v535 = vpack.c.b16 %v524, %v523
        %v536 = vpack.c.b16 %v526, %v525
        %v537 = vpack.c.b16 %v528, %v527
        %v538 = vpack.c.b16 %v530, %v529
        %v563 = vunpack.c.l.b16 %v476
        %v564 = vunpack.c.l.b16 %v477
        %v565 = vunpack.c.l.b16 %v478
        %v566 = vunpack.c.l.b16 %v479
        %v567 = vunpack.c.l.b16 %v480
        %v568 = vunpack.c.l.b16 %v481
        %v569 = vunpack.c.l.b16 %v482
        %v570 = vunpack.c.l.b16 %v483
        %v571 = vunpack.c.l.b16 %v484
        %v572 = vunpack.c.l.b16 %v485
        %v573 = vunpack.c.l.b16 %v486
        %v574 = vunpack.c.l.b16 %v487
        %v575 = vunpack.c.l.b16 %v488
        %v576 = vunpack.c.l.b16 %v489
        %v577 = vunpack.c.l.b16 %v490
        %v578 = vunpack.c.l.b16 %v491
        %v579 = vpack.c.b16 %v564, %v563
        %v580 = vpack.c.b16 %v566, %v565
        %v581 = vpack.c.b16 %v568, %v567
        %v582 = vpack.c.b16 %v570, %v569
        %v583 = vpack.c.b16 %v572, %v571
        %v584 = vpack.c.b16 %v574, %v573
        %v585 = vpack.c.b16 %v576, %v575
        %v586 = vpack.c.b16 %v578, %v577
        %595 = vmatprep.subr.bf16.mxu0 0
        %596 = vmatpush1.bf16.msra.mxu0 %v579
        %597 = vmatprep.subr.bf16.mxu0 0
        %598 = vmatpush1.bf16.msra.mxu0 %v580
        %599 = vmatprep.subr.bf16.mxu0 0
        %600 = vmatpush1.bf16.msra.mxu0 %v581
        %601 = vmatprep.subr.bf16.mxu0 0
        %602 = vmatpush1.bf16.msra.mxu0 %v582
        %603 = vmatprep.subr.bf16.mxu0 0
        %604 = vmatpush1.bf16.msra.mxu0 %v583
        %605 = vmatprep.subr.bf16.mxu0 0
        %606 = vmatpush1.bf16.msra.mxu0 %v584
        %607 = vmatprep.subr.bf16.mxu0 0
        %608 = vmatpush1.bf16.msra.mxu0 %v585
        %609 = vmatprep.subr.bf16.mxu0 0
        %610 = vmatpush1.bf16.msra.mxu0 %v586
        %611 = vmatprep.subr.bf16.mxu0 0
        %612 = vmatpush1.bf16.msra.mxu0 0
        %613 = vmatprep.subr.bf16.mxu0 0
        %614 = vmatpush1.bf16.msra.mxu0 0
        %615 = vmatprep.subr.bf16.mxu0 0
        %616 = vmatpush1.bf16.msra.mxu0 0
        %617 = vmatprep.subr.bf16.mxu0 0
        %618 = vmatpush1.bf16.msra.mxu0 0
        %619 = vmatprep.subr.bf16.mxu0 0
        %620 = vmatpush1.bf16.msra.mxu0 0
        %621 = vmatprep.subr.bf16.mxu0 0
        %622 = vmatpush1.bf16.msra.mxu0 0
        %623 = vmatprep.subr.bf16.mxu0 0
        %624 = vmatpush1.bf16.msra.mxu0 0
        %625 = vmatprep.subr.bf16.mxu0 0
        %626 = vmatpush1.bf16.msra.mxu0 0
        %627 = vmatprep.mubr.bf16.mxu0 0
        %628 = vmatmul.mubr.bf16.gmra.mrb[0].mxu0 %v531
        %v629 = vpop.f32.mrb[0].mxu0
        %v630 = vadd.f32 %v497, %v629
        %v631 = vpop.f32.mrb[0].mxu0
        %v632 = vpop.f32.mrb[0].mxu0
        %v633 = vadd.f32 %v497, %v632
        %v634 = vpop.f32.mrb[0].mxu0
        %635 = vmatprep.mubr.bf16.mxu0 0
        %636 = vmatmul.mubr.bf16.gmra.mrb[0].mxu0 %v532
        %v637 = vpop.f32.mrb[0].mxu0
        %v638 = vadd.f32 %v497, %v637
        %v639 = vpop.f32.mrb[0].mxu0
        %v640 = vpop.f32.mrb[0].mxu0
        %v641 = vadd.f32 %v497, %v640
        %v642 = vpop.f32.mrb[0].mxu0
        %643 = vmatprep.mubr.bf16.mxu0 0
        %644 = vmatmul.mubr.bf16.gmra.mrb[0].mxu0 %v533
        %v645 = vpop.f32.mrb[0].mxu0
        %v646 = vadd.f32 %v497, %v645
        %v647 = vpop.f32.mrb[0].mxu0
        %v648 = vpop.f32.mrb[0].mxu0
        %v649 = vadd.f32 %v497, %v648
        %v650 = vpop.f32.mrb[0].mxu0
        %651 = vmatprep.mubr.bf16.mxu0 0
        %652 = vmatmul.mubr.bf16.gmra.mrb[0].mxu0 %v534
        %v653 = vpop.f32.mrb[0].mxu0
        %v654 = vadd.f32 %v497, %v653
        %v655 = vpop.f32.mrb[0].mxu0
        %v656 = vpop.f32.mrb[0].mxu0
        %v657 = vadd.f32 %v497, %v656
        %v658 = vpop.f32.mrb[0].mxu0
        %659 = vmatprep.mubr.bf16.mxu0 0
        %660 = vmatmul.mubr.bf16.gmra.mrb[0].mxu0 %v535
        %v661 = vpop.f32.mrb[0].mxu0
        %v662 = vadd.f32 %v497, %v661
        %v663 = vpop.f32.mrb[0].mxu0
        %v664 = vpop.f32.mrb[0].mxu0
        %v665 = vadd.f32 %v497, %v664
        %v666 = vpop.f32.mrb[0].mxu0
        %667 = vmatprep.mubr.bf16.mxu0 0
        %668 = vmatmul.mubr.bf16.gmra.mrb[0].mxu0 %v536
        %v669 = vpop.f32.mrb[0].mxu0
        %v670 = vadd.f32 %v497, %v669
        %v671 = vpop.f32.mrb[0].mxu0
        %v672 = vpop.f32.mrb[0].mxu0
        %v673 = vadd.f32 %v497, %v672
        %v674 = vpop.f32.mrb[0].mxu0
        %675 = vmatprep.mubr.bf16.mxu0 0
        %676 = vmatmul.mubr.bf16.gmra.mrb[0].mxu0 %v537
        %v677 = vpop.f32.mrb[0].mxu0
        %v678 = vadd.f32 %v497, %v677
        %v679 = vpop.f32.mrb[0].mxu0
        %v680 = vpop.f32.mrb[0].mxu0
        %v681 = vadd.f32 %v497, %v680
        %v682 = vpop.f32.mrb[0].mxu0
        %683 = vmatprep.mubr.bf16.mxu0 0
        %684 = vmatmul.mubr.bf16.gmra.mrb[0].mxu0 %v538
        %v685 = vpop.f32.mrb[0].mxu0
        %v686 = vadd.f32 %v497, %v685
        %v687 = vpop.f32.mrb[0].mxu0
        %v688 = vpop.f32.mrb[0].mxu0
        %v689 = vadd.f32 %v497, %v688
        %v690 = vpop.f32.mrb[0].mxu0
        %691 = vdwg.mxu0
        %v692 = vld [vmem:[#allocation9] sm:$0xf]
        %v693 = vld [vmem:[#allocation9 + $0x4] sm:$0xf]
        %v694 = vld [vmem:[#allocation9 + $0x8] sm:$0xf]
        %v695 = vld [vmem:[#allocation9 + $0xc] sm:$0xf]
        %v696 = vld [vmem:[#allocation9 + $0x10] sm:$0xf]
        %v697 = vld [vmem:[#allocation9 + $0x14] sm:$0xf]
        %v698 = vld [vmem:[#allocation9 + $0x18] sm:$0xf]
        %v699 = vld [vmem:[#allocation9 + $0x1c] sm:$0xf]
        %v700 = vld [vmem:[#allocation9 + $0x20] sm:$0xf]
        %v701 = vld [vmem:[#allocation9 + $0x24] sm:$0xf]
        %v702 = vld [vmem:[#allocation9 + $0x28] sm:$0xf]
        %v703 = vld [vmem:[#allocation9 + $0x2c] sm:$0xf]
        %v704 = vld [vmem:[#allocation9 + $0x30] sm:$0xf]
        %v705 = vld [vmem:[#allocation9 + $0x34] sm:$0xf]
        %v706 = vld [vmem:[#allocation9 + $0x38] sm:$0xf]
        %v707 = vld [vmem:[#allocation9 + $0x3c] sm:$0xf]
        %v708 = vld [vmem:[#allocation11] sm:$0x1]
        %v710 = vlaneseq
        %v711 = vshrl.u32 %v710, 7
        %v712 = vsub.s32 0, %v711
        %v713 = vrot.slane %v708, %v712
        %v731 = vunpack.c.l.b16 %v692
        %v732 = vunpack.c.l.b16 %v693
        %v733 = vunpack.c.l.b16 %v694
        %v734 = vunpack.c.l.b16 %v695
        %v735 = vunpack.c.l.b16 %v696
        %v736 = vunpack.c.l.b16 %v697
        %v737 = vunpack.c.l.b16 %v698
        %v738 = vunpack.c.l.b16 %v699
        %v739 = vunpack.c.l.b16 %v700
        %v740 = vunpack.c.l.b16 %v701
        %v741 = vunpack.c.l.b16 %v702
        %v742 = vunpack.c.l.b16 %v703
        %v743 = vunpack.c.l.b16 %v704
        %v744 = vunpack.c.l.b16 %v705
        %v745 = vunpack.c.l.b16 %v706
        %v746 = vunpack.c.l.b16 %v707
        %v747 = vpack.c.b16 %v732, %v731
        %v748 = vpack.c.b16 %v734, %v733
        %v749 = vpack.c.b16 %v736, %v735
        %v750 = vpack.c.b16 %v738, %v737
        %v751 = vpack.c.b16 %v740, %v739
        %v752 = vpack.c.b16 %v742, %v741
        %v753 = vpack.c.b16 %v744, %v743
        %v754 = vpack.c.b16 %v746, %v745
        %763 = vmatprep.subr.bf16.mxu0 0
        %764 = vmatpush1.bf16.msra.mxu0 %v747
        %765 = vmatprep.subr.bf16.mxu0 0
        %766 = vmatpush1.bf16.msra.mxu0 %v748
        %767 = vmatprep.subr.bf16.mxu0 0
        %768 = vmatpush1.bf16.msra.mxu0 %v749
        %769 = vmatprep.subr.bf16.mxu0 0
        %770 = vmatpush1.bf16.msra.mxu0 %v750
        %771 = vmatprep.subr.bf16.mxu0 0
        %772 = vmatpush1.bf16.msra.mxu0 %v751
        %773 = vmatprep.subr.bf16.mxu0 0
        %774 = vmatpush1.bf16.msra.mxu0 %v752
        %775 = vmatprep.subr.bf16.mxu0 0
        %776 = vmatpush1.bf16.msra.mxu0 %v753
        %777 = vmatprep.subr.bf16.mxu0 0
        %778 = vmatpush1.bf16.msra.mxu0 %v754
        %779 = vmatprep.subr.bf16.mxu0 0
        %780 = vmatpush1.bf16.msra.mxu0 0
        %781 = vmatprep.subr.bf16.mxu0 0
        %782 = vmatpush1.bf16.msra.mxu0 0
        %783 = vmatprep.subr.bf16.mxu0 0
        %784 = vmatpush1.bf16.msra.mxu0 0
        %785 = vmatprep.subr.bf16.mxu0 0
        %786 = vmatpush1.bf16.msra.mxu0 0
        %787 = vmatprep.subr.bf16.mxu0 0
        %788 = vmatpush1.bf16.msra.mxu0 0
        %789 = vmatprep.subr.bf16.mxu0 0
        %790 = vmatpush1.bf16.msra.mxu0 0
        %791 = vmatprep.subr.bf16.mxu0 0
        %792 = vmatpush1.bf16.msra.mxu0 0
        %793 = vmatprep.subr.bf16.mxu0 0
        %794 = vmatpush1.bf16.msra.mxu0 0
        %795 = vmatprep.mubr.bf16.mxu0 0
        %796 = vmatmul.mubr.bf16.gmra.mrb[0].mxu0 %v531
        %v797 = vpop.f32.mrb[0].mxu0
        %v798 = vadd.f32 %v713, %v797
        %v799 = vpop.f32.mrb[0].mxu0
        %v800 = vpop.f32.mrb[0].mxu0
        %v801 = vadd.f32 %v713, %v800
        %v802 = vpop.f32.mrb[0].mxu0
        %803 = vmatprep.mubr.bf16.mxu0 0
        %804 = vmatmul.mubr.bf16.gmra.mrb[0].mxu0 %v532
        %v805 = vpop.f32.mrb[0].mxu0
        %v806 = vadd.f32 %v713, %v805
        %v807 = vpop.f32.mrb[0].mxu0
        %v808 = vpop.f32.mrb[0].mxu0
        %v809 = vadd.f32 %v713, %v808
        %v810 = vpop.f32.mrb[0].mxu0
        %811 = vmatprep.mubr.bf16.mxu0 0
        %812 = vmatmul.mubr.bf16.gmra.mrb[0].mxu0 %v533
        %v813 = vpop.f32.mrb[0].mxu0
        %v814 = vadd.f32 %v713, %v813
        %v815 = vpop.f32.mrb[0].mxu0
        %v816 = vpop.f32.mrb[0].mxu0
        %v817 = vadd.f32 %v713, %v816
        %v818 = vpop.f32.mrb[0].mxu0
        %819 = vmatprep.mubr.bf16.mxu0 0
        %820 = vmatmul.mubr.bf16.gmra.mrb[0].mxu0 %v534
        %v821 = vpop.f32.mrb[0].mxu0
        %v822 = vadd.f32 %v713, %v821
        %v823 = vpop.f32.mrb[0].mxu0
        %v824 = vpop.f32.mrb[0].mxu0
        %v825 = vadd.f32 %v713, %v824
        %v826 = vpop.f32.mrb[0].mxu0
        %827 = vmatprep.mubr.bf16.mxu0 0
        %828 = vmatmul.mubr.bf16.gmra.mrb[0].mxu0 %v535
        %v829 = vpop.f32.mrb[0].mxu0
        %v830 = vadd.f32 %v713, %v829
        %v831 = vpop.f32.mrb[0].mxu0
        %v832 = vpop.f32.mrb[0].mxu0
        %v833 = vadd.f32 %v713, %v832
        %v834 = vpop.f32.mrb[0].mxu0
        %835 = vmatprep.mubr.bf16.mxu0 0
        %836 = vmatmul.mubr.bf16.gmra.mrb[0].mxu0 %v536
        %v837 = vpop.f32.mrb[0].mxu0
        %v838 = vadd.f32 %v713, %v837
        %v839 = vpop.f32.mrb[0].mxu0
        %v840 = vpop.f32.mrb[0].mxu0
        %v841 = vadd.f32 %v713, %v840
        %v842 = vpop.f32.mrb[0].mxu0
        %843 = vmatprep.mubr.bf16.mxu0 0
        %844 = vmatmul.mubr.bf16.gmra.mrb[0].mxu0 %v537
        %v845 = vpop.f32.mrb[0].mxu0
        %v846 = vadd.f32 %v713, %v845
        %v847 = vpop.f32.mrb[0].mxu0
        %v848 = vpop.f32.mrb[0].mxu0
        %v849 = vadd.f32 %v713, %v848
        %v850 = vpop.f32.mrb[0].mxu0
        %851 = vmatprep.mubr.bf16.mxu0 0
        %852 = vmatmul.mubr.bf16.gmra.mrb[0].mxu0 %v538
        %v853 = vpop.f32.mrb[0].mxu0
        %v854 = vadd.f32 %v713, %v853
        %v855 = vpop.f32.mrb[0].mxu0
        %v856 = vpop.f32.mrb[0].mxu0
        %v857 = vadd.f32 %v713, %v856
        %v858 = vpop.f32.mrb[0].mxu0
        %859 = vdwg.mxu0
        %v860 = vld [vmem:[#allocation12] sm:$0xf]
        %v861 = vld [vmem:[#allocation12 + $0x4] sm:$0xf]
        %v862 = vld [vmem:[#allocation12 + $0x8] sm:$0xf]
        %v863 = vld [vmem:[#allocation12 + $0xc] sm:$0xf]
        %v864 = vld [vmem:[#allocation12 + $0x10] sm:$0xf]
        %v865 = vld [vmem:[#allocation12 + $0x14] sm:$0xf]
        %v866 = vld [vmem:[#allocation12 + $0x18] sm:$0xf]
        %v867 = vld [vmem:[#allocation12 + $0x1c] sm:$0xf]
        %v868 = vld [vmem:[#allocation12 + $0x20] sm:$0xf]
        %v869 = vld [vmem:[#allocation12 + $0x24] sm:$0xf]
        %v870 = vld [vmem:[#allocation12 + $0x28] sm:$0xf]
        %v871 = vld [vmem:[#allocation12 + $0x2c] sm:$0xf]
        %v872 = vld [vmem:[#allocation12 + $0x30] sm:$0xf]
        %v873 = vld [vmem:[#allocation12 + $0x34] sm:$0xf]
        %v874 = vld [vmem:[#allocation12 + $0x38] sm:$0xf]
        %v875 = vld [vmem:[#allocation12 + $0x3c] sm:$0xf]
        %v876 = vld [vmem:[#allocation14] sm:$0x1]
        %v878 = vlaneseq
        %v879 = vshrl.u32 %v878, 7
        %v880 = vsub.s32 0, %v879
        %v881 = vrot.slane %v876, %v880
        %v899 = vunpack.c.l.b16 %v860
        %v900 = vunpack.c.l.b16 %v861
        %v901 = vunpack.c.l.b16 %v862
        %v902 = vunpack.c.l.b16 %v863
        %v903 = vunpack.c.l.b16 %v864
        %v904 = vunpack.c.l.b16 %v865
        %v905 = vunpack.c.l.b16 %v866
        %v906 = vunpack.c.l.b16 %v867
        %v907 = vunpack.c.l.b16 %v868
        %v908 = vunpack.c.l.b16 %v869
        %v909 = vunpack.c.l.b16 %v870
        %v910 = vunpack.c.l.b16 %v871
        %v911 = vunpack.c.l.b16 %v872
        %v912 = vunpack.c.l.b16 %v873
        %v913 = vunpack.c.l.b16 %v874
        %v914 = vunpack.c.l.b16 %v875
        %v915 = vpack.c.b16 %v900, %v899
        %v916 = vpack.c.b16 %v902, %v901
        %v917 = vpack.c.b16 %v904, %v903
        %v918 = vpack.c.b16 %v906, %v905
        %v919 = vpack.c.b16 %v908, %v907
        %v920 = vpack.c.b16 %v910, %v909
        %v921 = vpack.c.b16 %v912, %v911
        %v922 = vpack.c.b16 %v914, %v913
        %931 = vmatprep.subr.bf16.mxu0 0
        %932 = vmatpush1.bf16.msra.mxu0 %v915
        %933 = vmatprep.subr.bf16.mxu0 0
        %934 = vmatpush1.bf16.msra.mxu0 %v916
        %935 = vmatprep.subr.bf16.mxu0 0
        %936 = vmatpush1.bf16.msra.mxu0 %v917
        %937 = vmatprep.subr.bf16.mxu0 0
        %938 = vmatpush1.bf16.msra.mxu0 %v918
        %939 = vmatprep.subr.bf16.mxu0 0
        %940 = vmatpush1.bf16.msra.mxu0 %v919
        %941 = vmatprep.subr.bf16.mxu0 0
        %942 = vmatpush1.bf16.msra.mxu0 %v920
        %943 = vmatprep.subr.bf16.mxu0 0
        %944 = vmatpush1.bf16.msra.mxu0 %v921
        %945 = vmatprep.subr.bf16.mxu0 0
        %946 = vmatpush1.bf16.msra.mxu0 %v922
        %947 = vmatprep.subr.bf16.mxu0 0
        %948 = vmatpush1.bf16.msra.mxu0 0
        %949 = vmatprep.subr.bf16.mxu0 0
        %950 = vmatpush1.bf16.msra.mxu0 0
        %951 = vmatprep.subr.bf16.mxu0 0
        %952 = vmatpush1.bf16.msra.mxu0 0
        %953 = vmatprep.subr.bf16.mxu0 0
        %954 = vmatpush1.bf16.msra.mxu0 0
        %955 = vmatprep.subr.bf16.mxu0 0
        %956 = vmatpush1.bf16.msra.mxu0 0
        %957 = vmatprep.subr.bf16.mxu0 0
        %958 = vmatpush1.bf16.msra.mxu0 0
        %959 = vmatprep.subr.bf16.mxu0 0
        %960 = vmatpush1.bf16.msra.mxu0 0
        %961 = vmatprep.subr.bf16.mxu0 0
        %962 = vmatpush1.bf16.msra.mxu0 0
        %963 = vmatprep.mubr.bf16.mxu0 0
        %964 = vmatmul.mubr.bf16.gmra.mrb[0].mxu0 %v531
        %v965 = vpop.f32.mrb[0].mxu0
        %v966 = vadd.f32 %v881, %v965
        %v967 = vpop.f32.mrb[0].mxu0
        %v968 = vpop.f32.mrb[0].mxu0
        %v969 = vadd.f32 %v881, %v968
        %v970 = vpop.f32.mrb[0].mxu0
        %971 = vmatprep.mubr.bf16.mxu0 0
        %972 = vmatmul.mubr.bf16.gmra.mrb[0].mxu0 %v532
        %v973 = vpop.f32.mrb[0].mxu0
        %v974 = vadd.f32 %v881, %v973
        %v975 = vpop.f32.mrb[0].mxu0
        %v976 = vpop.f32.mrb[0].mxu0
        %v977 = vadd.f32 %v881, %v976
        %v978 = vpop.f32.mrb[0].mxu0
        %979 = vmatprep.mubr.bf16.mxu0 0
        %980 = vmatmul.mubr.bf16.gmra.mrb[0].mxu0 %v533
        %v981 = vpop.f32.mrb[0].mxu0
        %v982 = vadd.f32 %v881, %v981
        %v983 = vpop.f32.mrb[0].mxu0
        %v984 = vpop.f32.mrb[0].mxu0
        %v985 = vadd.f32 %v881, %v984
        %v986 = vpop.f32.mrb[0].mxu0
        %987 = vmatprep.mubr.bf16.mxu0 0
        %988 = vmatmul.mubr.bf16.gmra.mrb[0].mxu0 %v534
        %v989 = vpop.f32.mrb[0].mxu0
        %v990 = vadd.f32 %v881, %v989
        %v991 = vpop.f32.mrb[0].mxu0
        %v992 = vpop.f32.mrb[0].mxu0
        %v993 = vadd.f32 %v881, %v992
        %v994 = vpop.f32.mrb[0].mxu0
        %995 = vmatprep.mubr.bf16.mxu0 0
        %996 = vmatmul.mubr.bf16.gmra.mrb[0].mxu0 %v535
        %v997 = vpop.f32.mrb[0].mxu0
        %v998 = vadd.f32 %v881, %v997
        %v999 = vpop.f32.mrb[0].mxu0
        %v1000 = vpop.f32.mrb[0].mxu0
        %v1001 = vadd.f32 %v881, %v1000
        %v1002 = vpop.f32.mrb[0].mxu0
        %1003 = vmatprep.mubr.bf16.mxu0 0
        %1004 = vmatmul.mubr.bf16.gmra.mrb[0].mxu0 %v536
        %v1005 = vpop.f32.mrb[0].mxu0
        %v1006 = vadd.f32 %v881, %v1005
        %v1007 = vpop.f32.mrb[0].mxu0
        %v1008 = vpop.f32.mrb[0].mxu0
        %v1009 = vadd.f32 %v881, %v1008
        %v1010 = vpop.f32.mrb[0].mxu0
        %1011 = vmatprep.mubr.bf16.mxu0 0
        %1012 = vmatmul.mubr.bf16.gmra.mrb[0].mxu0 %v537
        %v1013 = vpop.f32.mrb[0].mxu0
        %v1014 = vadd.f32 %v881, %v1013
        %v1015 = vpop.f32.mrb[0].mxu0
        %v1016 = vpop.f32.mrb[0].mxu0
        %v1017 = vadd.f32 %v881, %v1016
        %v1018 = vpop.f32.mrb[0].mxu0
        %1019 = vmatprep.mubr.bf16.mxu0 0
        %1020 = vmatmul.mubr.bf16.gmra.mrb[0].mxu0 %v538
        %v1021 = vpop.f32.mrb[0].mxu0
        %v1022 = vadd.f32 %v881, %v1021
        %v1023 = vpop.f32.mrb[0].mxu0
        %v1024 = vpop.f32.mrb[0].mxu0
        %v1025 = vadd.f32 %v881, %v1024
        %v1026 = vpop.f32.mrb[0].mxu0
        %1027 = vdwg.mxu0
        %v1028 = vpack.c.bf16 %v633, %v630
        %v1029 = vpack.c.bf16 %v641, %v638
        %v1030 = vpack.c.bf16 %v649, %v646
        %v1031 = vpack.c.bf16 %v657, %v654
        %v1032 = vpack.c.bf16 %v665, %v662
        %v1033 = vpack.c.bf16 %v673, %v670
        %v1034 = vpack.c.bf16 %v681, %v678
        %v1035 = vpack.c.bf16 %v689, %v686
        %v1036 = vpack.c.bf16 %v801, %v798
        %v1037 = vpack.c.bf16 %v809, %v806
        %v1038 = vpack.c.bf16 %v817, %v814
        %v1039 = vpack.c.bf16 %v825, %v822
        %v1040 = vpack.c.bf16 %v833, %v830
        %v1041 = vpack.c.bf16 %v841, %v838
        %v1042 = vpack.c.bf16 %v849, %v846
        %v1043 = vpack.c.bf16 %v857, %v854
        %v1044 = vpack.c.bf16 %v969, %v966
        %v1045 = vpack.c.bf16 %v977, %v974
        %v1046 = vpack.c.bf16 %v985, %v982
        %v1047 = vpack.c.bf16 %v993, %v990
        %v1048 = vpack.c.bf16 %v1001, %v998
        %v1049 = vpack.c.bf16 %v1009, %v1006
        %v1050 = vpack.c.bf16 %v1017, %v1014
        %v1051 = vpack.c.bf16 %v1025, %v1022
        %vm1052 = vcmask 261120
        %v1054 = vsel %vm1052, %v1028, 0
        %v1057 = vsel %vm1052, %v1029, 0
        %v1060 = vsel %vm1052, %v1030, 0
        %v1063 = vsel %vm1052, %v1031, 0
        %v1066 = vsel %vm1052, %v1032, 0
        %v1069 = vsel %vm1052, %v1033, 0
        %v1072 = vsel %vm1052, %v1034, 0
        %v1075 = vsel %vm1052, %v1035, 0
        %v1078 = vsel %vm1052, %v1036, 0
        %v1081 = vsel %vm1052, %v1037, 0
        %v1084 = vsel %vm1052, %v1038, 0
        %v1087 = vsel %vm1052, %v1039, 0
        %v1090 = vsel %vm1052, %v1040, 0
        %v1093 = vsel %vm1052, %v1041, 0
        %v1096 = vsel %vm1052, %v1042, 0
        %v1099 = vsel %vm1052, %v1043, 0
        %1101 = vmatprep.subr.bf16.mxu0 0
        %1102 = vmatpush1.bf16.xpose.msra.mxu0 %v1078
        %1103 = vmatprep.subr.bf16.mxu0 0
        %1104 = vmatpush1.bf16.xpose.msra.mxu0 %v1081
        %1105 = vmatprep.subr.bf16.mxu0 0
        %1106 = vmatpush1.bf16.xpose.msra.mxu0 %v1084
        %1107 = vmatprep.subr.bf16.mxu0 0
        %1108 = vmatpush1.bf16.xpose.msra.mxu0 %v1087
        %1109 = vmatprep.subr.bf16.mxu0 0
        %1110 = vmatpush1.bf16.xpose.msra.mxu0 %v1090
        %1111 = vmatprep.subr.bf16.mxu0 0
        %1112 = vmatpush1.bf16.xpose.msra.mxu0 %v1093
        %1113 = vmatprep.subr.bf16.mxu0 0
        %1114 = vmatpush1.bf16.xpose.msra.mxu0 %v1096
        %1115 = vmatprep.subr.bf16.mxu0 0
        %1116 = vmatpush1.bf16.xpose.msra.mxu0 %v1099
        %1117 = vmatprep.subr.bf16.mxu0 0
        %1118 = vmatpush1.bf16.xpose.msra.mxu0 0
        %1119 = vmatprep.subr.bf16.mxu0 0
        %1120 = vmatpush1.bf16.xpose.msra.mxu0 0
        %1121 = vmatprep.subr.bf16.mxu0 0
        %1122 = vmatpush1.bf16.xpose.msra.mxu0 0
        %1123 = vmatprep.subr.bf16.mxu0 0
        %1124 = vmatpush1.bf16.xpose.msra.mxu0 0
        %1125 = vmatprep.subr.bf16.mxu0 0
        %1126 = vmatpush1.bf16.xpose.msra.mxu0 0
        %1127 = vmatprep.subr.bf16.mxu0 0
        %1128 = vmatpush1.bf16.xpose.msra.mxu0 0
        %1129 = vmatprep.subr.bf16.mxu0 0
        %1130 = vmatpush1.bf16.xpose.msra.mxu0 0
        %1131 = vmatprep.subr.bf16.mxu0 0
        %1132 = vmatpush1.bf16.xpose.msra.mxu0 0
        %1133 = vmatprep.mubr.bf16.mxu0 0
        %1134 = vmatmul.mubr.bf16.gmra.mrb[0].mxu0 %v1054
        %v1135 = vpop.f32.mrb[0].mxu0
        %v1136 = vadd.f32 0.0, %v1135
        %v1137 = vpop.f32.mrb[0].mxu0
        %v1138 = vpop.f32.mrb[0].mxu0
        %v1139 = vadd.f32 0.0, %v1138
        %v1140 = vpop.f32.mrb[0].mxu0
        %1141 = vmatprep.mubr.bf16.mxu0 0
        %1142 = vmatmul.mubr.bf16.gmra.mrb[0].mxu0 %v1057
        %v1143 = vpop.f32.mrb[0].mxu0
        %v1144 = vadd.f32 0.0, %v1143
        %v1145 = vpop.f32.mrb[0].mxu0
        %v1146 = vpop.f32.mrb[0].mxu0
        %v1147 = vadd.f32 0.0, %v1146
        %v1148 = vpop.f32.mrb[0].mxu0
        %1149 = vmatprep.mubr.bf16.mxu0 0
        %1150 = vmatmul.mubr.bf16.gmra.mrb[0].mxu0 %v1060
        %v1151 = vpop.f32.mrb[0].mxu0
        %v1152 = vadd.f32 0.0, %v1151
        %v1153 = vpop.f32.mrb[0].mxu0
        %v1154 = vpop.f32.mrb[0].mxu0
        %v1155 = vadd.f32 0.0, %v1154
        %v1156 = vpop.f32.mrb[0].mxu0
        %1157 = vmatprep.mubr.bf16.mxu0 0
        %1158 = vmatmul.mubr.bf16.gmra.mrb[0].mxu0 %v1063
        %v1159 = vpop.f32.mrb[0].mxu0
        %v1160 = vadd.f32 0.0, %v1159
        %v1161 = vpop.f32.mrb[0].mxu0
        %v1162 = vpop.f32.mrb[0].mxu0
        %v1163 = vadd.f32 0.0, %v1162
        %v1164 = vpop.f32.mrb[0].mxu0
        %1165 = vmatprep.mubr.bf16.mxu0 0
        %1166 = vmatmul.mubr.bf16.gmra.mrb[0].mxu0 %v1066
        %v1167 = vpop.f32.mrb[0].mxu0
        %v1168 = vadd.f32 0.0, %v1167
        %v1169 = vpop.f32.mrb[0].mxu0
        %v1170 = vpop.f32.mrb[0].mxu0
        %v1171 = vadd.f32 0.0, %v1170
        %v1172 = vpop.f32.mrb[0].mxu0
        %1173 = vmatprep.mubr.bf16.mxu0 0
        %1174 = vmatmul.mubr.bf16.gmra.mrb[0].mxu0 %v1069
        %v1175 = vpop.f32.mrb[0].mxu0
        %v1176 = vadd.f32 0.0, %v1175
        %v1177 = vpop.f32.mrb[0].mxu0
        %v1178 = vpop.f32.mrb[0].mxu0
        %v1179 = vadd.f32 0.0, %v1178
        %v1180 = vpop.f32.mrb[0].mxu0
        %1181 = vmatprep.mubr.bf16.mxu0 0
        %1182 = vmatmul.mubr.bf16.gmra.mrb[0].mxu0 %v1072
        %v1183 = vpop.f32.mrb[0].mxu0
        %v1184 = vadd.f32 0.0, %v1183
        %v1185 = vpop.f32.mrb[0].mxu0
        %v1186 = vpop.f32.mrb[0].mxu0
        %v1187 = vadd.f32 0.0, %v1186
        %v1188 = vpop.f32.mrb[0].mxu0
        %1189 = vmatprep.mubr.bf16.mxu0 0
        %1190 = vmatmul.mubr.bf16.gmra.mrb[0].mxu0 %v1075
        %v1191 = vpop.f32.mrb[0].mxu0
        %v1192 = vadd.f32 0.0, %v1191
        %v1193 = vpop.f32.mrb[0].mxu0
        %v1194 = vpop.f32.mrb[0].mxu0
        %v1195 = vadd.f32 0.0, %v1194
        %v1196 = vpop.f32.mrb[0].mxu0
        %1197 = vdwg.mxu0
        %1198 = vmax.xlane.f32.xlu0 %v1136
        %v1199 = vpop.xlane.xlu0 %1198
        %1200 = vmax.xlane.f32.xlu0 %v1139
        %v1201 = vpop.xlane.xlu0 %1200
        %1202 = vmax.xlane.f32.xlu0 %v1144
        %v1203 = vpop.xlane.xlu0 %1202
        %1204 = vmax.xlane.f32.xlu0 %v1147
        %v1205 = vpop.xlane.xlu0 %1204
        %1206 = vmax.xlane.f32.xlu0 %v1152
        %v1207 = vpop.xlane.xlu0 %1206
        %1208 = vmax.xlane.f32.xlu0 %v1155
        %v1209 = vpop.xlane.xlu0 %1208
        %1210 = vmax.xlane.f32.xlu0 %v1160
        %v1211 = vpop.xlane.xlu0 %1210
        %1212 = vmax.xlane.f32.xlu0 %v1163
        %v1213 = vpop.xlane.xlu0 %1212
        %1214 = vmax.xlane.f32.xlu0 %v1168
        %v1215 = vpop.xlane.xlu0 %1214
        %1216 = vmax.xlane.f32.xlu0 %v1171
        %v1217 = vpop.xlane.xlu0 %1216
        %1218 = vmax.xlane.f32.xlu0 %v1176
        %v1219 = vpop.xlane.xlu0 %1218
        %1220 = vmax.xlane.f32.xlu0 %v1179
        %v1221 = vpop.xlane.xlu0 %1220
        %1222 = vmax.xlane.f32.xlu0 %v1184
        %v1223 = vpop.xlane.xlu0 %1222
        %1224 = vmax.xlane.f32.xlu0 %v1187
        %v1225 = vpop.xlane.xlu0 %1224
        %1226 = vmax.xlane.f32.xlu0 %v1192
        %v1227 = vpop.xlane.xlu0 %1226
        %1228 = vmax.xlane.f32.xlu0 %v1195
        %v1229 = vpop.xlane.xlu0 %1228
        %v1230 = vsub.f32 %v1136, %v1199
        %v1231 = vsub.f32 %v1139, %v1201
        %v1232 = vsub.f32 %v1144, %v1203
        %v1233 = vsub.f32 %v1147, %v1205
        %v1234 = vsub.f32 %v1152, %v1207
        %v1235 = vsub.f32 %v1155, %v1209
        %v1236 = vsub.f32 %v1160, %v1211
        %v1237 = vsub.f32 %v1163, %v1213
        %v1238 = vsub.f32 %v1168, %v1215
        %v1239 = vsub.f32 %v1171, %v1217
        %v1240 = vsub.f32 %v1176, %v1219
        %v1241 = vsub.f32 %v1179, %v1221
        %v1242 = vsub.f32 %v1184, %v1223
        %v1243 = vsub.f32 %v1187, %v1225
        %v1244 = vsub.f32 %v1192, %v1227
        %v1245 = vsub.f32 %v1195, %v1229
        %v1246 = vmul.f32 %v1230, 1.442695
        %v1247 = vpow.pop %v1246
        %v1248 = vmul.f32 %v1231, 1.442695
        %v1249 = vpow.pop %v1248
        %v1250 = vmul.f32 %v1232, 1.442695
        %v1251 = vpow.pop %v1250
        %v1252 = vmul.f32 %v1233, 1.442695
        %v1253 = vpow.pop %v1252
        %v1254 = vmul.f32 %v1234, 1.442695
        %v1255 = vpow.pop %v1254
        %v1256 = vmul.f32 %v1235, 1.442695
        %v1257 = vpow.pop %v1256
        %v1258 = vmul.f32 %v1236, 1.442695
        %v1259 = vpow.pop %v1258
        %v1260 = vmul.f32 %v1237, 1.442695
        %v1261 = vpow.pop %v1260
        %v1262 = vmul.f32 %v1238, 1.442695
        %v1263 = vpow.pop %v1262
        %v1264 = vmul.f32 %v1239, 1.442695
        %v1265 = vpow.pop %v1264
        %v1266 = vmul.f32 %v1240, 1.442695
        %v1267 = vpow.pop %v1266
        %v1268 = vmul.f32 %v1241, 1.442695
        %v1269 = vpow.pop %v1268
        %v1270 = vmul.f32 %v1242, 1.442695
        %v1271 = vpow.pop %v1270
        %v1272 = vmul.f32 %v1243, 1.442695
        %v1273 = vpow.pop %v1272
        %v1274 = vmul.f32 %v1244, 1.442695
        %v1275 = vpow.pop %v1274
        %v1276 = vmul.f32 %v1245, 1.442695
        %v1277 = vpow.pop %v1276
        %1278 = vadd.xlane.f32.xlu0 %v1247
        %v1279 = vpop.xlane.xlu0 %1278
        %1280 = vadd.xlane.f32.xlu0 %v1249
        %v1281 = vpop.xlane.xlu0 %1280
        %1282 = vadd.xlane.f32.xlu0 %v1251
        %v1283 = vpop.xlane.xlu0 %1282
        %1284 = vadd.xlane.f32.xlu0 %v1253
        %v1285 = vpop.xlane.xlu0 %1284
        %1286 = vadd.xlane.f32.xlu0 %v1255
        %v1287 = vpop.xlane.xlu0 %1286
        %1288 = vadd.xlane.f32.xlu0 %v1257
        %v1289 = vpop.xlane.xlu0 %1288
        %1290 = vadd.xlane.f32.xlu0 %v1259
        %v1291 = vpop.xlane.xlu0 %1290
        %1292 = vadd.xlane.f32.xlu0 %v1261
        %v1293 = vpop.xlane.xlu0 %1292
        %1294 = vadd.xlane.f32.xlu0 %v1263
        %v1295 = vpop.xlane.xlu0 %1294
        %1296 = vadd.xlane.f32.xlu0 %v1265
        %v1297 = vpop.xlane.xlu0 %1296
        %1298 = vadd.xlane.f32.xlu0 %v1267
        %v1299 = vpop.xlane.xlu0 %1298
        %1300 = vadd.xlane.f32.xlu0 %v1269
        %v1301 = vpop.xlane.xlu0 %1300
        %1302 = vadd.xlane.f32.xlu0 %v1271
        %v1303 = vpop.xlane.xlu0 %1302
        %1304 = vadd.xlane.f32.xlu0 %v1273
        %v1305 = vpop.xlane.xlu0 %1304
        %1306 = vadd.xlane.f32.xlu0 %v1275
        %v1307 = vpop.xlane.xlu0 %1306
        %1308 = vadd.xlane.f32.xlu0 %v1277
        %v1309 = vpop.xlane.xlu0 %1308
        %v1310 = vrcp.pop %v1279
        %v1311 = vrcp.pop %v1281
        %v1312 = vrcp.pop %v1283
        %v1313 = vrcp.pop %v1285
        %v1314 = vrcp.pop %v1287
        %v1315 = vrcp.pop %v1289
        %v1316 = vrcp.pop %v1291
        %v1317 = vrcp.pop %v1293
        %v1318 = vrcp.pop %v1295
        %v1319 = vrcp.pop %v1297
        %v1320 = vrcp.pop %v1299
        %v1321 = vrcp.pop %v1301
        %v1322 = vrcp.pop %v1303
        %v1323 = vrcp.pop %v1305
        %v1324 = vrcp.pop %v1307
        %v1325 = vrcp.pop %v1309
        %v1326 = vmul.f32 %v1247, %v1310
        %v1327 = vmul.f32 %v1249, %v1311
        %v1328 = vmul.f32 %v1251, %v1312
        %v1329 = vmul.f32 %v1253, %v1313
        %v1330 = vmul.f32 %v1255, %v1314
        %v1331 = vmul.f32 %v1257, %v1315
        %v1332 = vmul.f32 %v1259, %v1316
        %v1333 = vmul.f32 %v1261, %v1317
        %v1334 = vmul.f32 %v1263, %v1318
        %v1335 = vmul.f32 %v1265, %v1319
        %v1336 = vmul.f32 %v1267, %v1320
        %v1337 = vmul.f32 %v1269, %v1321
        %v1338 = vmul.f32 %v1271, %v1322
        %v1339 = vmul.f32 %v1273, %v1323
        %v1340 = vmul.f32 %v1275, %v1324
        %v1341 = vmul.f32 %v1277, %v1325
        %v1342 = vpack.c.bf16 %v1327, %v1326
        %v1343 = vpack.c.bf16 %v1329, %v1328
        %v1344 = vpack.c.bf16 %v1331, %v1330
        %v1345 = vpack.c.bf16 %v1333, %v1332
        %v1346 = vpack.c.bf16 %v1335, %v1334
        %v1347 = vpack.c.bf16 %v1337, %v1336
        %v1348 = vpack.c.bf16 %v1339, %v1338
        %v1349 = vpack.c.bf16 %v1341, %v1340
        %1350 = vmatprep.subr.bf16.mxu0 0
        %1351 = vmatpush1.bf16.msra.mxu0 %v1044
        %1352 = vmatprep.subr.bf16.mxu0 0
        %1353 = vmatpush1.bf16.msra.mxu0 %v1045
        %1354 = vmatprep.subr.bf16.mxu0 0
        %1355 = vmatpush1.bf16.msra.mxu0 %v1046
        %1356 = vmatprep.subr.bf16.mxu0 0
        %1357 = vmatpush1.bf16.msra.mxu0 %v1047
        %1358 = vmatprep.subr.bf16.mxu0 0
        %1359 = vmatpush1.bf16.msra.mxu0 %v1048
        %1360 = vmatprep.subr.bf16.mxu0 0
        %1361 = vmatpush1.bf16.msra.mxu0 %v1049
        %1362 = vmatprep.subr.bf16.mxu0 0
        %1363 = vmatpush1.bf16.msra.mxu0 %v1050
        %1364 = vmatprep.subr.bf16.mxu0 0
        %1365 = vmatpush1.bf16.msra.mxu0 %v1051
        %1366 = vmatprep.subr.bf16.mxu0 0
        %1367 = vmatpush1.bf16.msra.mxu0 0
        %1368 = vmatprep.subr.bf16.mxu0 0
        %1369 = vmatpush1.bf16.msra.mxu0 0
        %1370 = vmatprep.subr.bf16.mxu0 0
        %1371 = vmatpush1.bf16.msra.mxu0 0
        %1372 = vmatprep.subr.bf16.mxu0 0
        %1373 = vmatpush1.bf16.msra.mxu0 0
        %1374 = vmatprep.subr.bf16.mxu0 0
        %1375 = vmatpush1.bf16.msra.mxu0 0
        %1376 = vmatprep.subr.bf16.mxu0 0
        %1377 = vmatpush1.bf16.msra.mxu0 0
        %1378 = vmatprep.subr.bf16.mxu0 0
        %1379 = vmatpush1.bf16.msra.mxu0 0
        %1380 = vmatprep.subr.bf16.mxu0 0
        %1381 = vmatpush1.bf16.msra.mxu0 0
        %1382 = vmatprep.mubr.bf16.mxu0 0
        %1383 = vmatmul.mubr.bf16.gmra.mrb[0].mxu0 %v1342
        %v1384 = vpop.f32.mrb[0].mxu0
        %v1385 = vadd.f32 0.0, %v1384
        %v1386 = vpop.f32.mrb[0].mxu0
        %v1387 = vpop.f32.mrb[0].mxu0
        %v1388 = vadd.f32 0.0, %v1387
        %v1389 = vpop.f32.mrb[0].mxu0
        %1390 = vmatprep.mubr.bf16.mxu0 0
        %1391 = vmatmul.mubr.bf16.gmra.mrb[0].mxu0 %v1343
        %v1392 = vpop.f32.mrb[0].mxu0
        %v1393 = vadd.f32 0.0, %v1392
        %v1394 = vpop.f32.mrb[0].mxu0
        %v1395 = vpop.f32.mrb[0].mxu0
        %v1396 = vadd.f32 0.0, %v1395
        %v1397 = vpop.f32.mrb[0].mxu0
        %1398 = vmatprep.mubr.bf16.mxu0 0
        %1399 = vmatmul.mubr.bf16.gmra.mrb[0].mxu0 %v1344
        %v1400 = vpop.f32.mrb[0].mxu0
        %v1401 = vadd.f32 0.0, %v1400
        %v1402 = vpop.f32.mrb[0].mxu0
        %v1403 = vpop.f32.mrb[0].mxu0
        %v1404 = vadd.f32 0.0, %v1403
        %v1405 = vpop.f32.mrb[0].mxu0
        %1406 = vmatprep.mubr.bf16.mxu0 0
        %1407 = vmatmul.mubr.bf16.gmra.mrb[0].mxu0 %v1345
        %v1408 = vpop.f32.mrb[0].mxu0
        %v1409 = vadd.f32 0.0, %v1408
        %v1410 = vpop.f32.mrb[0].mxu0
        %v1411 = vpop.f32.mrb[0].mxu0
        %v1412 = vadd.f32 0.0, %v1411
        %v1413 = vpop.f32.mrb[0].mxu0
        %1414 = vmatprep.mubr.bf16.mxu0 0
        %1415 = vmatmul.mubr.bf16.gmra.mrb[0].mxu0 %v1346
        %v1416 = vpop.f32.mrb[0].mxu0
        %v1417 = vadd.f32 0.0, %v1416
        %v1418 = vpop.f32.mrb[0].mxu0
        %v1419 = vpop.f32.mrb[0].mxu0
        %v1420 = vadd.f32 0.0, %v1419
        %v1421 = vpop.f32.mrb[0].mxu0
        %1422 = vmatprep.mubr.bf16.mxu0 0
        %1423 = vmatmul.mubr.bf16.gmra.mrb[0].mxu0 %v1347
        %v1424 = vpop.f32.mrb[0].mxu0
        %v1425 = vadd.f32 0.0, %v1424
        %v1426 = vpop.f32.mrb[0].mxu0
        %v1427 = vpop.f32.mrb[0].mxu0
        %v1428 = vadd.f32 0.0, %v1427
        %v1429 = vpop.f32.mrb[0].mxu0
        %1430 = vmatprep.mubr.bf16.mxu0 0
        %1431 = vmatmul.mubr.bf16.gmra.mrb[0].mxu0 %v1348
        %v1432 = vpop.f32.mrb[0].mxu0
        %v1433 = vadd.f32 0.0, %v1432
        %v1434 = vpop.f32.mrb[0].mxu0
        %v1435 = vpop.f32.mrb[0].mxu0
        %v1436 = vadd.f32 0.0, %v1435
        %v1437 = vpop.f32.mrb[0].mxu0
        %1438 = vmatprep.mubr.bf16.mxu0 0
        %1439 = vmatmul.mubr.bf16.gmra.mrb[0].mxu0 %v1349
        %v1440 = vpop.f32.mrb[0].mxu0
        %v1441 = vadd.f32 0.0, %v1440
        %v1442 = vpop.f32.mrb[0].mxu0
        %v1443 = vpop.f32.mrb[0].mxu0
        %v1444 = vadd.f32 0.0, %v1443
        %v1445 = vpop.f32.mrb[0].mxu0
        %1446 = vdwg.mxu0
        %v1447 = vpack.c.bf16 %v1388, %v1385
        %v1448 = vpack.c.bf16 %v1396, %v1393
        %v1449 = vpack.c.bf16 %v1404, %v1401
        %v1450 = vpack.c.bf16 %v1412, %v1409
        %v1451 = vpack.c.bf16 %v1420, %v1417
        %v1452 = vpack.c.bf16 %v1428, %v1425
        %v1453 = vpack.c.bf16 %v1436, %v1433
        %v1454 = vpack.c.bf16 %v1444, %v1441
        %1455 = vst.msk [vmem:[#allocation2] sm:$0xff] %vm1052, %v1447
        %1456 = vst.msk [vmem:[#allocation2 + $0x8] sm:$0xff] %vm1052, %v1448
        %1457 = vst.msk [vmem:[#allocation2 + $0x10] sm:$0xff] %vm1052, %v1449
        %1458 = vst.msk [vmem:[#allocation2 + $0x18] sm:$0xff] %vm1052, %v1450
        %1459 = vst.msk [vmem:[#allocation2 + $0x20] sm:$0xff] %vm1052, %v1451
        %1460 = vst.msk [vmem:[#allocation2 + $0x28] sm:$0xff] %vm1052, %v1452
        %1461 = vst.msk [vmem:[#allocation2 + $0x30] sm:$0xff] %vm1052, %v1453
        %1462 = vst.msk [vmem:[#allocation2 + $0x38] sm:$0xff] %vm1052, %v1454
        %1471 = vrot.lane.b32.xlu0 %v1028, 96
        %v1472 = vpop.permute.xlu0 %1471
        %1473 = vrot.lane.b32.xlu0 %v1029, 96
        %v1474 = vpop.permute.xlu0 %1473
        %1475 = vrot.lane.b32.xlu0 %v1030, 96
        %v1476 = vpop.permute.xlu0 %1475
        %1477 = vrot.lane.b32.xlu0 %v1031, 96
        %v1478 = vpop.permute.xlu0 %1477
        %1479 = vrot.lane.b32.xlu0 %v1032, 96
        %v1480 = vpop.permute.xlu0 %1479
        %1481 = vrot.lane.b32.xlu0 %v1033, 96
        %v1482 = vpop.permute.xlu0 %1481
        %1483 = vrot.lane.b32.xlu0 %v1034, 96
        %v1484 = vpop.permute.xlu0 %1483
        %1485 = vrot.lane.b32.xlu0 %v1035, 96
        %v1486 = vpop.permute.xlu0 %1485
        %1495 = vrot.lane.b32.xlu0 %v1036, 96
        %v1496 = vpop.permute.xlu0 %1495
        %1497 = vrot.lane.b32.xlu0 %v1037, 96
        %v1498 = vpop.permute.xlu0 %1497
        %1499 = vrot.lane.b32.xlu0 %v1038, 96
        %v1500 = vpop.permute.xlu0 %1499
        %1501 = vrot.lane.b32.xlu0 %v1039, 96
        %v1502 = vpop.permute.xlu0 %1501
        %1503 = vrot.lane.b32.xlu0 %v1040, 96
        %v1504 = vpop.permute.xlu0 %1503
        %1505 = vrot.lane.b32.xlu0 %v1041, 96
        %v1506 = vpop.permute.xlu0 %1505
        %1507 = vrot.lane.b32.xlu0 %v1042, 96
        %v1508 = vpop.permute.xlu0 %1507
        %1509 = vrot.lane.b32.xlu0 %v1043, 96
        %v1510 = vpop.permute.xlu0 %1509
        %v1512 = vsel %vm1052, %v1472, 0
        %v1515 = vsel %vm1052, %v1474, 0
        %v1518 = vsel %vm1052, %v1476, 0
        %v1521 = vsel %vm1052, %v1478, 0
        %v1524 = vsel %vm1052, %v1480, 0
        %v1527 = vsel %vm1052, %v1482, 0
        %v1530 = vsel %vm1052, %v1484, 0
        %v1533 = vsel %vm1052, %v1486, 0
        %v1536 = vsel %vm1052, %v1496, 0
        %v1539 = vsel %vm1052, %v1498, 0
        %v1542 = vsel %vm1052, %v1500, 0
        %v1545 = vsel %vm1052, %v1502, 0
        %v1548 = vsel %vm1052, %v1504, 0
        %v1551 = vsel %vm1052, %v1506, 0
        %v1554 = vsel %vm1052, %v1508, 0
        %v1557 = vsel %vm1052, %v1510, 0
        %1559 = vmatprep.subr.bf16.mxu0 0
        %1560 = vmatpush1.bf16.xpose.msra.mxu0 %v1536
        %1561 = vmatprep.subr.bf16.mxu0 0
        %1562 = vmatpush1.bf16.xpose.msra.mxu0 %v1539
        %1563 = vmatprep.subr.bf16.mxu0 0
        %1564 = vmatpush1.bf16.xpose.msra.mxu0 %v1542
        %1565 = vmatprep.subr.bf16.mxu0 0
        %1566 = vmatpush1.bf16.xpose.msra.mxu0 %v1545
        %1567 = vmatprep.subr.bf16.mxu0 0
        %1568 = vmatpush1.bf16.xpose.msra.mxu0 %v1548
        %1569 = vmatprep.subr.bf16.mxu0 0
        %1570 = vmatpush1.bf16.xpose.msra.mxu0 %v1551
        %1571 = vmatprep.subr.bf16.mxu0 0
        %1572 = vmatpush1.bf16.xpose.msra.mxu0 %v1554
        %1573 = vmatprep.subr.bf16.mxu0 0
        %1574 = vmatpush1.bf16.xpose.msra.mxu0 %v1557
        %1575 = vmatprep.subr.bf16.mxu0 0
        %1576 = vmatpush1.bf16.xpose.msra.mxu0 0
        %1577 = vmatprep.subr.bf16.mxu0 0
        %1578 = vmatpush1.bf16.xpose.msra.mxu0 0
        %1579 = vmatprep.subr.bf16.mxu0 0
        %1580 = vmatpush1.bf16.xpose.msra.mxu0 0
        %1581 = vmatprep.subr.bf16.mxu0 0
        %1582 = vmatpush1.bf16.xpose.msra.mxu0 0
        %1583 = vmatprep.subr.bf16.mxu0 0
        %1584 = vmatpush1.bf16.xpose.msra.mxu0 0
        %1585 = vmatprep.subr.bf16.mxu0 0
        %1586 = vmatpush1.bf16.xpose.msra.mxu0 0
        %1587 = vmatprep.subr.bf16.mxu0 0
        %1588 = vmatpush1.bf16.xpose.msra.mxu0 0
        %1589 = vmatprep.subr.bf16.mxu0 0
        %1590 = vmatpush1.bf16.xpose.msra.mxu0 0
        %1591 = vmatprep.mubr.bf16.mxu0 0
        %1592 = vmatmul.mubr.bf16.gmra.mrb[0].mxu0 %v1512
        %v1593 = vpop.f32.mrb[0].mxu0
        %v1594 = vadd.f32 0.0, %v1593
        %v1595 = vpop.f32.mrb[0].mxu0
        %v1596 = vpop.f32.mrb[0].mxu0
        %v1597 = vadd.f32 0.0, %v1596
        %v1598 = vpop.f32.mrb[0].mxu0
        %1599 = vmatprep.mubr.bf16.mxu0 0
        %1600 = vmatmul.mubr.bf16.gmra.mrb[0].mxu0 %v1515
        %v1601 = vpop.f32.mrb[0].mxu0
        %v1602 = vadd.f32 0.0, %v1601
        %v1603 = vpop.f32.mrb[0].mxu0
        %v1604 = vpop.f32.mrb[0].mxu0
        %v1605 = vadd.f32 0.0, %v1604
        %v1606 = vpop.f32.mrb[0].mxu0
        %1607 = vmatprep.mubr.bf16.mxu0 0
        %1608 = vmatmul.mubr.bf16.gmra.mrb[0].mxu0 %v1518
        %v1609 = vpop.f32.mrb[0].mxu0
        %v1610 = vadd.f32 0.0, %v1609
        %v1611 = vpop.f32.mrb[0].mxu0
        %v1612 = vpop.f32.mrb[0].mxu0
        %v1613 = vadd.f32 0.0, %v1612
        %v1614 = vpop.f32.mrb[0].mxu0
        %1615 = vmatprep.mubr.bf16.mxu0 0
        %1616 = vmatmul.mubr.bf16.gmra.mrb[0].mxu0 %v1521
        %v1617 = vpop.f32.mrb[0].mxu0
        %v1618 = vadd.f32 0.0, %v1617
        %v1619 = vpop.f32.mrb[0].mxu0
        %v1620 = vpop.f32.mrb[0].mxu0
        %v1621 = vadd.f32 0.0, %v1620
        %v1622 = vpop.f32.mrb[0].mxu0
        %1623 = vmatprep.mubr.bf16.mxu0 0
        %1624 = vmatmul.mubr.bf16.gmra.mrb[0].mxu0 %v1524
        %v1625 = vpop.f32.mrb[0].mxu0
        %v1626 = vadd.f32 0.0, %v1625
        %v1627 = vpop.f32.mrb[0].mxu0
        %v1628 = vpop.f32.mrb[0].mxu0
        %v1629 = vadd.f32 0.0, %v1628
        %v1630 = vpop.f32.mrb[0].mxu0
        %1631 = vmatprep.mubr.bf16.mxu0 0
        %1632 = vmatmul.mubr.bf16.gmra.mrb[0].mxu0 %v1527
        %v1633 = vpop.f32.mrb[0].mxu0
        %v1634 = vadd.f32 0.0, %v1633
        %v1635 = vpop.f32.mrb[0].mxu0
        %v1636 = vpop.f32.mrb[0].mxu0
        %v1637 = vadd.f32 0.0, %v1636
        %v1638 = vpop.f32.mrb[0].mxu0
        %1639 = vmatprep.mubr.bf16.mxu0 0
        %1640 = vmatmul.mubr.bf16.gmra.mrb[0].mxu0 %v1530
        %v1641 = vpop.f32.mrb[0].mxu0
        %v1642 = vadd.f32 0.0, %v1641
        %v1643 = vpop.f32.mrb[0].mxu0
        %v1644 = vpop.f32.mrb[0].mxu0
        %v1645 = vadd.f32 0.0, %v1644
        %v1646 = vpop.f32.mrb[0].mxu0
        %1647 = vmatprep.mubr.bf16.mxu0 0
        %1648 = vmatmul.mubr.bf16.gmra.mrb[0].mxu0 %v1533
        %v1649 = vpop.f32.mrb[0].mxu0
        %v1650 = vadd.f32 0.0, %v1649
        %v1651 = vpop.f32.mrb[0].mxu0
        %v1652 = vpop.f32.mrb[0].mxu0
        %v1653 = vadd.f32 0.0, %v1652
        %v1654 = vpop.f32.mrb[0].mxu0
        %1655 = vdwg.mxu0
        %1656 = vmax.xlane.f32.xlu0 %v1594
        %v1657 = vpop.xlane.xlu0 %1656
        %1658 = vmax.xlane.f32.xlu0 %v1597
        %v1659 = vpop.xlane.xlu0 %1658
        %1660 = vmax.xlane.f32.xlu0 %v1602
        %v1661 = vpop.xlane.xlu0 %1660
        %1662 = vmax.xlane.f32.xlu0 %v1605
        %v1663 = vpop.xlane.xlu0 %1662
        %1664 = vmax.xlane.f32.xlu0 %v1610
        %v1665 = vpop.xlane.xlu0 %1664
        %1666 = vmax.xlane.f32.xlu0 %v1613
        %v1667 = vpop.xlane.xlu0 %1666
        %1668 = vmax.xlane.f32.xlu0 %v1618
        %v1669 = vpop.xlane.xlu0 %1668
        %1670 = vmax.xlane.f32.xlu0 %v1621
        %v1671 = vpop.xlane.xlu0 %1670
        %1672 = vmax.xlane.f32.xlu0 %v1626
        %v1673 = vpop.xlane.xlu0 %1672
        %1674 = vmax.xlane.f32.xlu0 %v1629
        %v1675 = vpop.xlane.xlu0 %1674
        %1676 = vmax.xlane.f32.xlu0 %v1634
        %v1677 = vpop.xlane.xlu0 %1676
        %1678 = vmax.xlane.f32.xlu0 %v1637
        %v1679 = vpop.xlane.xlu0 %1678
        %1680 = vmax.xlane.f32.xlu0 %v1642
        %v1681 = vpop.xlane.xlu0 %1680
        %1682 = vmax.xlane.f32.xlu0 %v1645
        %v1683 = vpop.xlane.xlu0 %1682
        %1684 = vmax.xlane.f32.xlu0 %v1650
        %v1685 = vpop.xlane.xlu0 %1684
        %1686 = vmax.xlane.f32.xlu0 %v1653
        %v1687 = vpop.xlane.xlu0 %1686
        %v1688 = vsub.f32 %v1594, %v1657
        %v1689 = vsub.f32 %v1597, %v1659
        %v1690 = vsub.f32 %v1602, %v1661
        %v1691 = vsub.f32 %v1605, %v1663
        %v1692 = vsub.f32 %v1610, %v1665
        %v1693 = vsub.f32 %v1613, %v1667
        %v1694 = vsub.f32 %v1618, %v1669
        %v1695 = vsub.f32 %v1621, %v1671
        %v1696 = vsub.f32 %v1626, %v1673
        %v1697 = vsub.f32 %v1629, %v1675
        %v1698 = vsub.f32 %v1634, %v1677
        %v1699 = vsub.f32 %v1637, %v1679
        %v1700 = vsub.f32 %v1642, %v1681
        %v1701 = vsub.f32 %v1645, %v1683
        %v1702 = vsub.f32 %v1650, %v1685
        %v1703 = vsub.f32 %v1653, %v1687
        %v1704 = vmul.f32 %v1688, 1.442695
        %v1705 = vpow.pop %v1704
        %v1706 = vmul.f32 %v1689, 1.442695
        %v1707 = vpow.pop %v1706
        %v1708 = vmul.f32 %v1690, 1.442695
        %v1709 = vpow.pop %v1708
        %v1710 = vmul.f32 %v1691, 1.442695
        %v1711 = vpow.pop %v1710
        %v1712 = vmul.f32 %v1692, 1.442695
        %v1713 = vpow.pop %v1712
        %v1714 = vmul.f32 %v1693, 1.442695
        %v1715 = vpow.pop %v1714
        %v1716 = vmul.f32 %v1694, 1.442695
        %v1717 = vpow.pop %v1716
        %v1718 = vmul.f32 %v1695, 1.442695
        %v1719 = vpow.pop %v1718
        %v1720 = vmul.f32 %v1696, 1.442695
        %v1721 = vpow.pop %v1720
        %v1722 = vmul.f32 %v1697, 1.442695
        %v1723 = vpow.pop %v1722
        %v1724 = vmul.f32 %v1698, 1.442695
        %v1725 = vpow.pop %v1724
        %v1726 = vmul.f32 %v1699, 1.442695
        %v1727 = vpow.pop %v1726
        %v1728 = vmul.f32 %v1700, 1.442695
        %v1729 = vpow.pop %v1728
        %v1730 = vmul.f32 %v1701, 1.442695
        %v1731 = vpow.pop %v1730
        %v1732 = vmul.f32 %v1702, 1.442695
        %v1733 = vpow.pop %v1732
        %v1734 = vmul.f32 %v1703, 1.442695
        %v1735 = vpow.pop %v1734
        %1736 = vadd.xlane.f32.xlu0 %v1705
        %v1737 = vpop.xlane.xlu0 %1736
        %1738 = vadd.xlane.f32.xlu0 %v1707
        %v1739 = vpop.xlane.xlu0 %1738
        %1740 = vadd.xlane.f32.xlu0 %v1709
        %v1741 = vpop.xlane.xlu0 %1740
        %1742 = vadd.xlane.f32.xlu0 %v1711
        %v1743 = vpop.xlane.xlu0 %1742
        %1744 = vadd.xlane.f32.xlu0 %v1713
        %v1745 = vpop.xlane.xlu0 %1744
        %1746 = vadd.xlane.f32.xlu0 %v1715
        %v1747 = vpop.xlane.xlu0 %1746
        %1748 = vadd.xlane.f32.xlu0 %v1717
        %v1749 = vpop.xlane.xlu0 %1748
        %1750 = vadd.xlane.f32.xlu0 %v1719
        %v1751 = vpop.xlane.xlu0 %1750
        %1752 = vadd.xlane.f32.xlu0 %v1721
        %v1753 = vpop.xlane.xlu0 %1752
        %1754 = vadd.xlane.f32.xlu0 %v1723
        %v1755 = vpop.xlane.xlu0 %1754
        %1756 = vadd.xlane.f32.xlu0 %v1725
        %v1757 = vpop.xlane.xlu0 %1756
        %1758 = vadd.xlane.f32.xlu0 %v1727
        %v1759 = vpop.xlane.xlu0 %1758
        %1760 = vadd.xlane.f32.xlu0 %v1729
        %v1761 = vpop.xlane.xlu0 %1760
        %1762 = vadd.xlane.f32.xlu0 %v1731
        %v1763 = vpop.xlane.xlu0 %1762
        %1764 = vadd.xlane.f32.xlu0 %v1733
        %v1765 = vpop.xlane.xlu0 %1764
        %1766 = vadd.xlane.f32.xlu0 %v1735
        %v1767 = vpop.xlane.xlu0 %1766
        %v1768 = vrcp.pop %v1737
        %v1769 = vrcp.pop %v1739
        %v1770 = vrcp.pop %v1741
        %v1771 = vrcp.pop %v1743
        %v1772 = vrcp.pop %v1745
        %v1773 = vrcp.pop %v1747
        %v1774 = vrcp.pop %v1749
        %v1775 = vrcp.pop %v1751
        %v1776 = vrcp.pop %v1753
        %v1777 = vrcp.pop %v1755
        %v1778 = vrcp.pop %v1757
        %v1779 = vrcp.pop %v1759
        %v1780 = vrcp.pop %v1761
        %v1781 = vrcp.pop %v1763
        %v1782 = vrcp.pop %v1765
        %v1783 = vrcp.pop %v1767
        %v1784 = vmul.f32 %v1705, %v1768
        %v1785 = vmul.f32 %v1707, %v1769
        %v1786 = vmul.f32 %v1709, %v1770
        %v1787 = vmul.f32 %v1711, %v1771
        %v1788 = vmul.f32 %v1713, %v1772
        %v1789 = vmul.f32 %v1715, %v1773
        %v1790 = vmul.f32 %v1717, %v1774
        %v1791 = vmul.f32 %v1719, %v1775
        %v1792 = vmul.f32 %v1721, %v1776
        %v1793 = vmul.f32 %v1723, %v1777
        %v1794 = vmul.f32 %v1725, %v1778
        %v1795 = vmul.f32 %v1727, %v1779
        %v1796 = vmul.f32 %v1729, %v1780
        %v1797 = vmul.f32 %v1731, %v1781
        %v1798 = vmul.f32 %v1733, %v1782
        %v1799 = vmul.f32 %v1735, %v1783
        %v1800 = vpack.c.bf16 %v1785, %v1784
        %v1801 = vpack.c.bf16 %v1787, %v1786
        %v1802 = vpack.c.bf16 %v1789, %v1788
        %v1803 = vpack.c.bf16 %v1791, %v1790
        %v1804 = vpack.c.bf16 %v1793, %v1792
        %v1805 = vpack.c.bf16 %v1795, %v1794
        %v1806 = vpack.c.bf16 %v1797, %v1796
        %v1807 = vpack.c.bf16 %v1799, %v1798
        %1816 = vrot.lane.b32.xlu0 %v1044, 96
        %v1817 = vpop.permute.xlu0 %1816
        %1818 = vrot.lane.b32.xlu0 %v1045, 96
        %v1819 = vpop.permute.xlu0 %1818
        %1820 = vrot.lane.b32.xlu0 %v1046, 96
        %v1821 = vpop.permute.xlu0 %1820
        %1822 = vrot.lane.b32.xlu0 %v1047, 96
        %v1823 = vpop.permute.xlu0 %1822
        %1824 = vrot.lane.b32.xlu0 %v1048, 96
        %v1825 = vpop.permute.xlu0 %1824
        %1826 = vrot.lane.b32.xlu0 %v1049, 96
        %v1827 = vpop.permute.xlu0 %1826
        %1828 = vrot.lane.b32.xlu0 %v1050, 96
        %v1829 = vpop.permute.xlu0 %1828
        %1830 = vrot.lane.b32.xlu0 %v1051, 96
        %v1831 = vpop.permute.xlu0 %1830
        %1840 = vmatprep.subr.bf16.mxu0 0
        %1841 = vmatpush1.bf16.msra.mxu0 %v1817
        %1842 = vmatprep.subr.bf16.mxu0 0
        %1843 = vmatpush1.bf16.msra.mxu0 %v1819
        %1844 = vmatprep.subr.bf16.mxu0 0
        %1845 = vmatpush1.bf16.msra.mxu0 %v1821
        %1846 = vmatprep.subr.bf16.mxu0 0
        %1847 = vmatpush1.bf16.msra.mxu0 %v1823
        %1848 = vmatprep.subr.bf16.mxu0 0
        %1849 = vmatpush1.bf16.msra.mxu0 %v1825
        %1850 = vmatprep.subr.bf16.mxu0 0
        %1851 = vmatpush1.bf16.msra.mxu0 %v1827
        %1852 = vmatprep.subr.bf16.mxu0 0
        %1853 = vmatpush1.bf16.msra.mxu0 %v1829
        %1854 = vmatprep.subr.bf16.mxu0 0
        %1855 = vmatpush1.bf16.msra.mxu0 %v1831
        %1856 = vmatprep.subr.bf16.mxu0 0
        %1857 = vmatpush1.bf16.msra.mxu0 0
        %1858 = vmatprep.subr.bf16.mxu0 0
        %1859 = vmatpush1.bf16.msra.mxu0 0
        %1860 = vmatprep.subr.bf16.mxu0 0
        %1861 = vmatpush1.bf16.msra.mxu0 0
        %1862 = vmatprep.subr.bf16.mxu0 0
        %1863 = vmatpush1.bf16.msra.mxu0 0
        %1864 = vmatprep.subr.bf16.mxu0 0
        %1865 = vmatpush1.bf16.msra.mxu0 0
        %1866 = vmatprep.subr.bf16.mxu0 0
        %1867 = vmatpush1.bf16.msra.mxu0 0
        %1868 = vmatprep.subr.bf16.mxu0 0
        %1869 = vmatpush1.bf16.msra.mxu0 0
        %1870 = vmatprep.subr.bf16.mxu0 0
        %1871 = vmatpush1.bf16.msra.mxu0 0
        %1872 = vmatprep.mubr.bf16.mxu0 0
        %1873 = vmatmul.mubr.bf16.gmra.mrb[0].mxu0 %v1800
        %v1874 = vpop.f32.mrb[0].mxu0
        %v1875 = vadd.f32 0.0, %v1874
        %v1876 = vpop.f32.mrb[0].mxu0
        %v1877 = vpop.f32.mrb[0].mxu0
        %v1878 = vadd.f32 0.0, %v1877
        %v1879 = vpop.f32.mrb[0].mxu0
        %1880 = vmatprep.mubr.bf16.mxu0 0
        %1881 = vmatmul.mubr.bf16.gmra.mrb[0].mxu0 %v1801
        %v1882 = vpop.f32.mrb[0].mxu0
        %v1883 = vadd.f32 0.0, %v1882
        %v1884 = vpop.f32.mrb[0].mxu0
        %v1885 = vpop.f32.mrb[0].mxu0
        %v1886 = vadd.f32 0.0, %v1885
        %v1887 = vpop.f32.mrb[0].mxu0
        %1888 = vmatprep.mubr.bf16.mxu0 0
        %1889 = vmatmul.mubr.bf16.gmra.mrb[0].mxu0 %v1802
        %v1890 = vpop.f32.mrb[0].mxu0
        %v1891 = vadd.f32 0.0, %v1890
        %v1892 = vpop.f32.mrb[0].mxu0
        %v1893 = vpop.f32.mrb[0].mxu0
        %v1894 = vadd.f32 0.0, %v1893
        %v1895 = vpop.f32.mrb[0].mxu0
        %1896 = vmatprep.mubr.bf16.mxu0 0
        %1897 = vmatmul.mubr.bf16.gmra.mrb[0].mxu0 %v1803
        %v1898 = vpop.f32.mrb[0].mxu0
        %v1899 = vadd.f32 0.0, %v1898
        %v1900 = vpop.f32.mrb[0].mxu0
        %v1901 = vpop.f32.mrb[0].mxu0
        %v1902 = vadd.f32 0.0, %v1901
        %v1903 = vpop.f32.mrb[0].mxu0
        %1904 = vmatprep.mubr.bf16.mxu0 0
        %1905 = vmatmul.mubr.bf16.gmra.mrb[0].mxu0 %v1804
        %v1906 = vpop.f32.mrb[0].mxu0
        %v1907 = vadd.f32 0.0, %v1906
        %v1908 = vpop.f32.mrb[0].mxu0
        %v1909 = vpop.f32.mrb[0].mxu0
        %v1910 = vadd.f32 0.0, %v1909
        %v1911 = vpop.f32.mrb[0].mxu0
        %1912 = vmatprep.mubr.bf16.mxu0 0
        %1913 = vmatmul.mubr.bf16.gmra.mrb[0].mxu0 %v1805
        %v1914 = vpop.f32.mrb[0].mxu0
        %v1915 = vadd.f32 0.0, %v1914
        %v1916 = vpop.f32.mrb[0].mxu0
        %v1917 = vpop.f32.mrb[0].mxu0
        %v1918 = vadd.f32 0.0, %v1917
        %v1919 = vpop.f32.mrb[0].mxu0
        %1920 = vmatprep.mubr.bf16.mxu0 0
        %1921 = vmatmul.mubr.bf16.gmra.mrb[0].mxu0 %v1806
        %v1922 = vpop.f32.mrb[0].mxu0
        %v1923 = vadd.f32 0.0, %v1922
        %v1924 = vpop.f32.mrb[0].mxu0
        %v1925 = vpop.f32.mrb[0].mxu0
        %v1926 = vadd.f32 0.0, %v1925
        %v1927 = vpop.f32.mrb[0].mxu0
        %1928 = vmatprep.mubr.bf16.mxu0 0
        %1929 = vmatmul.mubr.bf16.gmra.mrb[0].mxu0 %v1807
        %v1930 = vpop.f32.mrb[0].mxu0
        %v1931 = vadd.f32 0.0, %v1930
        %v1932 = vpop.f32.mrb[0].mxu0
        %v1933 = vpop.f32.mrb[0].mxu0
        %v1934 = vadd.f32 0.0, %v1933
        %v1935 = vpop.f32.mrb[0].mxu0
        %1936 = vdwg.mxu0
        %v1937 = vpack.c.bf16 %v1878, %v1875
        %v1938 = vpack.c.bf16 %v1886, %v1883
        %v1939 = vpack.c.bf16 %v1894, %v1891
        %v1940 = vpack.c.bf16 %v1902, %v1899
        %v1941 = vpack.c.bf16 %v1910, %v1907
        %v1942 = vpack.c.bf16 %v1918, %v1915
        %v1943 = vpack.c.bf16 %v1926, %v1923
        %v1944 = vpack.c.bf16 %v1934, %v1931
        %1953 = vrot.lane.b32.xlu0 %v1937, 32
        %v1954 = vpop.permute.xlu0 %1953
        %1955 = vrot.lane.b32.xlu0 %v1938, 32
        %v1956 = vpop.permute.xlu0 %1955
        %1957 = vrot.lane.b32.xlu0 %v1939, 32
        %v1958 = vpop.permute.xlu0 %1957
        %1959 = vrot.lane.b32.xlu0 %v1940, 32
        %v1960 = vpop.permute.xlu0 %1959
        %1961 = vrot.lane.b32.xlu0 %v1941, 32
        %v1962 = vpop.permute.xlu0 %1961
        %1963 = vrot.lane.b32.xlu0 %v1942, 32
        %v1964 = vpop.permute.xlu0 %1963
        %1965 = vrot.lane.b32.xlu0 %v1943, 32
        %v1966 = vpop.permute.xlu0 %1965
        %1967 = vrot.lane.b32.xlu0 %v1944, 32
        %v1968 = vpop.permute.xlu0 %1967
        %vm1977 = vcmask 523520
        %1978 = vst.msk [vmem:[#allocation2] sm:$0xff] %vm1977, %v1954
        %1979 = vst.msk [vmem:[#allocation2 + $0x8] sm:$0xff] %vm1977, %v1956
        %1980 = vst.msk [vmem:[#allocation2 + $0x10] sm:$0xff] %vm1977, %v1958
        %1981 = vst.msk [vmem:[#allocation2 + $0x18] sm:$0xff] %vm1977, %v1960
        %1982 = vst.msk [vmem:[#allocation2 + $0x20] sm:$0xff] %vm1977, %v1962
        %1983 = vst.msk [vmem:[#allocation2 + $0x28] sm:$0xff] %vm1977, %v1964
        %1984 = vst.msk [vmem:[#allocation2 + $0x30] sm:$0xff] %vm1977, %v1966
        %1985 = vst.msk [vmem:[#allocation2 + $0x38] sm:$0xff] %vm1977, %v1968
        %1986 = vrot.lane.b32.xlu0 %v1028, 64
        %v1987 = vpop.permute.xlu0 %1986
        %1988 = vrot.lane.b32.xlu0 %v1029, 64
        %v1989 = vpop.permute.xlu0 %1988
        %1990 = vrot.lane.b32.xlu0 %v1030, 64
        %v1991 = vpop.permute.xlu0 %1990
        %1992 = vrot.lane.b32.xlu0 %v1031, 64
        %v1993 = vpop.permute.xlu0 %1992
        %1994 = vrot.lane.b32.xlu0 %v1032, 64
        %v1995 = vpop.permute.xlu0 %1994
        %1996 = vrot.lane.b32.xlu0 %v1033, 64
        %v1997 = vpop.permute.xlu0 %1996
        %1998 = vrot.lane.b32.xlu0 %v1034, 64
        %v1999 = vpop.permute.xlu0 %1998
        %2000 = vrot.lane.b32.xlu0 %v1035, 64
        %v2001 = vpop.permute.xlu0 %2000
        %2002 = vrot.lane.b32.xlu0 %v1036, 64
        %v2003 = vpop.permute.xlu0 %2002
        %2004 = vrot.lane.b32.xlu0 %v1037, 64
        %v2005 = vpop.permute.xlu0 %2004
        %2006 = vrot.lane.b32.xlu0 %v1038, 64
        %v2007 = vpop.permute.xlu0 %2006
        %2008 = vrot.lane.b32.xlu0 %v1039, 64
        %v2009 = vpop.permute.xlu0 %2008
        %2010 = vrot.lane.b32.xlu0 %v1040, 64
        %v2011 = vpop.permute.xlu0 %2010
        %2012 = vrot.lane.b32.xlu0 %v1041, 64
        %v2013 = vpop.permute.xlu0 %2012
        %2014 = vrot.lane.b32.xlu0 %v1042, 64
        %v2015 = vpop.permute.xlu0 %2014
        %2016 = vrot.lane.b32.xlu0 %v1043, 64
        %v2017 = vpop.permute.xlu0 %2016
        %v2019 = vsel %vm1052, %v1987, 0
        %v2022 = vsel %vm1052, %v1989, 0
        %v2025 = vsel %vm1052, %v1991, 0
        %v2028 = vsel %vm1052, %v1993, 0
        %v2031 = vsel %vm1052, %v1995, 0
        %v2034 = vsel %vm1052, %v1997, 0
        %v2037 = vsel %vm1052, %v1999, 0
        %v2040 = vsel %vm1052, %v2001, 0
        %v2043 = vsel %vm1052, %v2003, 0
        %v2046 = vsel %vm1052, %v2005, 0
        %v2049 = vsel %vm1052, %v2007, 0
        %v2052 = vsel %vm1052, %v2009, 0
        %v2055 = vsel %vm1052, %v2011, 0
        %v2058 = vsel %vm1052, %v2013, 0
        %v2061 = vsel %vm1052, %v2015, 0
        %v2064 = vsel %vm1052, %v2017, 0
        %2066 = vmatprep.subr.bf16.mxu0 0
        %2067 = vmatpush1.bf16.xpose.msra.mxu0 %v2043
        %2068 = vmatprep.subr.bf16.mxu0 0
        %2069 = vmatpush1.bf16.xpose.msra.mxu0 %v2046
        %2070 = vmatprep.subr.bf16.mxu0 0
        %2071 = vmatpush1.bf16.xpose.msra.mxu0 %v2049
        %2072 = vmatprep.subr.bf16.mxu0 0
        %2073 = vmatpush1.bf16.xpose.msra.mxu0 %v2052
        %2074 = vmatprep.subr.bf16.mxu0 0
        %2075 = vmatpush1.bf16.xpose.msra.mxu0 %v2055
        %2076 = vmatprep.subr.bf16.mxu0 0
        %2077 = vmatpush1.bf16.xpose.msra.mxu0 %v2058
        %2078 = vmatprep.subr.bf16.mxu0 0
        %2079 = vmatpush1.bf16.xpose.msra.mxu0 %v2061
        %2080 = vmatprep.subr.bf16.mxu0 0
        %2081 = vmatpush1.bf16.xpose.msra.mxu0 %v2064
        %2082 = vmatprep.subr.bf16.mxu0 0
        %2083 = vmatpush1.bf16.xpose.msra.mxu0 0
        %2084 = vmatprep.subr.bf16.mxu0 0
        %2085 = vmatpush1.bf16.xpose.msra.mxu0 0
        %2086 = vmatprep.subr.bf16.mxu0 0
        %2087 = vmatpush1.bf16.xpose.msra.mxu0 0
        %2088 = vmatprep.subr.bf16.mxu0 0
        %2089 = vmatpush1.bf16.xpose.msra.mxu0 0
        %2090 = vmatprep.subr.bf16.mxu0 0
        %2091 = vmatpush1.bf16.xpose.msra.mxu0 0
        %2092 = vmatprep.subr.bf16.mxu0 0
        %2093 = vmatpush1.bf16.xpose.msra.mxu0 0
        %2094 = vmatprep.subr.bf16.mxu0 0
        %2095 = vmatpush1.bf16.xpose.msra.mxu0 0
        %2096 = vmatprep.subr.bf16.mxu0 0
        %2097 = vmatpush1.bf16.xpose.msra.mxu0 0
        %2098 = vmatprep.mubr.bf16.mxu0 0
        %2099 = vmatmul.mubr.bf16.gmra.mrb[0].mxu0 %v2019
        %v2100 = vpop.f32.mrb[0].mxu0
        %v2101 = vadd.f32 0.0, %v2100
        %v2102 = vpop.f32.mrb[0].mxu0
        %v2103 = vpop.f32.mrb[0].mxu0
        %v2104 = vadd.f32 0.0, %v2103
        %v2105 = vpop.f32.mrb[0].mxu0
        %2106 = vmatprep.mubr.bf16.mxu0 0
        %2107 = vmatmul.mubr.bf16.gmra.mrb[0].mxu0 %v2022
        %v2108 = vpop.f32.mrb[0].mxu0
        %v2109 = vadd.f32 0.0, %v2108
        %v2110 = vpop.f32.mrb[0].mxu0
        %v2111 = vpop.f32.mrb[0].mxu0
        %v2112 = vadd.f32 0.0, %v2111
        %v2113 = vpop.f32.mrb[0].mxu0
        %2114 = vmatprep.mubr.bf16.mxu0 0
        %2115 = vmatmul.mubr.bf16.gmra.mrb[0].mxu0 %v2025
        %v2116 = vpop.f32.mrb[0].mxu0
        %v2117 = vadd.f32 0.0, %v2116
        %v2118 = vpop.f32.mrb[0].mxu0
        %v2119 = vpop.f32.mrb[0].mxu0
        %v2120 = vadd.f32 0.0, %v2119
        %v2121 = vpop.f32.mrb[0].mxu0
        %2122 = vmatprep.mubr.bf16.mxu0 0
        %2123 = vmatmul.mubr.bf16.gmra.mrb[0].mxu0 %v2028
        %v2124 = vpop.f32.mrb[0].mxu0
        %v2125 = vadd.f32 0.0, %v2124
        %v2126 = vpop.f32.mrb[0].mxu0
        %v2127 = vpop.f32.mrb[0].mxu0
        %v2128 = vadd.f32 0.0, %v2127
        %v2129 = vpop.f32.mrb[0].mxu0
        %2130 = vmatprep.mubr.bf16.mxu0 0
        %2131 = vmatmul.mubr.bf16.gmra.mrb[0].mxu0 %v2031
        %v2132 = vpop.f32.mrb[0].mxu0
        %v2133 = vadd.f32 0.0, %v2132
        %v2134 = vpop.f32.mrb[0].mxu0
        %v2135 = vpop.f32.mrb[0].mxu0
        %v2136 = vadd.f32 0.0, %v2135
        %v2137 = vpop.f32.mrb[0].mxu0
        %2138 = vmatprep.mubr.bf16.mxu0 0
        %2139 = vmatmul.mubr.bf16.gmra.mrb[0].mxu0 %v2034
        %v2140 = vpop.f32.mrb[0].mxu0
        %v2141 = vadd.f32 0.0, %v2140
        %v2142 = vpop.f32.mrb[0].mxu0
        %v2143 = vpop.f32.mrb[0].mxu0
        %v2144 = vadd.f32 0.0, %v2143
        %v2145 = vpop.f32.mrb[0].mxu0
        %2146 = vmatprep.mubr.bf16.mxu0 0
        %2147 = vmatmul.mubr.bf16.gmra.mrb[0].mxu0 %v2037
        %v2148 = vpop.f32.mrb[0].mxu0
        %v2149 = vadd.f32 0.0, %v2148
        %v2150 = vpop.f32.mrb[0].mxu0
        %v2151 = vpop.f32.mrb[0].mxu0
        %v2152 = vadd.f32 0.0, %v2151
        %v2153 = vpop.f32.mrb[0].mxu0
        %2154 = vmatprep.mubr.bf16.mxu0 0
        %2155 = vmatmul.mubr.bf16.gmra.mrb[0].mxu0 %v2040
        %v2156 = vpop.f32.mrb[0].mxu0
        %v2157 = vadd.f32 0.0, %v2156
        %v2158 = vpop.f32.mrb[0].mxu0
        %v2159 = vpop.f32.mrb[0].mxu0
        %v2160 = vadd.f32 0.0, %v2159
        %v2161 = vpop.f32.mrb[0].mxu0
        %2162 = vdwg.mxu0
        %2163 = vmax.xlane.f32.xlu0 %v2101
        %v2164 = vpop.xlane.xlu0 %2163
        %2165 = vmax.xlane.f32.xlu0 %v2104
        %v2166 = vpop.xlane.xlu0 %2165
        %2167 = vmax.xlane.f32.xlu0 %v2109
        %v2168 = vpop.xlane.xlu0 %2167
        %2169 = vmax.xlane.f32.xlu0 %v2112
        %v2170 = vpop.xlane.xlu0 %2169
        %2171 = vmax.xlane.f32.xlu0 %v2117
        %v2172 = vpop.xlane.xlu0 %2171
        %2173 = vmax.xlane.f32.xlu0 %v2120
        %v2174 = vpop.xlane.xlu0 %2173
        %2175 = vmax.xlane.f32.xlu0 %v2125
        %v2176 = vpop.xlane.xlu0 %2175
        %2177 = vmax.xlane.f32.xlu0 %v2128
        %v2178 = vpop.xlane.xlu0 %2177
        %2179 = vmax.xlane.f32.xlu0 %v2133
        %v2180 = vpop.xlane.xlu0 %2179
        %2181 = vmax.xlane.f32.xlu0 %v2136
        %v2182 = vpop.xlane.xlu0 %2181
        %2183 = vmax.xlane.f32.xlu0 %v2141
        %v2184 = vpop.xlane.xlu0 %2183
        %2185 = vmax.xlane.f32.xlu0 %v2144
        %v2186 = vpop.xlane.xlu0 %2185
        %2187 = vmax.xlane.f32.xlu0 %v2149
        %v2188 = vpop.xlane.xlu0 %2187
        %2189 = vmax.xlane.f32.xlu0 %v2152
        %v2190 = vpop.xlane.xlu0 %2189
        %2191 = vmax.xlane.f32.xlu0 %v2157
        %v2192 = vpop.xlane.xlu0 %2191
        %2193 = vmax.xlane.f32.xlu0 %v2160
        %v2194 = vpop.xlane.xlu0 %2193
        %v2195 = vsub.f32 %v2101, %v2164
        %v2196 = vsub.f32 %v2104, %v2166
        %v2197 = vsub.f32 %v2109, %v2168
        %v2198 = vsub.f32 %v2112, %v2170
        %v2199 = vsub.f32 %v2117, %v2172
        %v2200 = vsub.f32 %v2120, %v2174
        %v2201 = vsub.f32 %v2125, %v2176
        %v2202 = vsub.f32 %v2128, %v2178
        %v2203 = vsub.f32 %v2133, %v2180
        %v2204 = vsub.f32 %v2136, %v2182
        %v2205 = vsub.f32 %v2141, %v2184
        %v2206 = vsub.f32 %v2144, %v2186
        %v2207 = vsub.f32 %v2149, %v2188
        %v2208 = vsub.f32 %v2152, %v2190
        %v2209 = vsub.f32 %v2157, %v2192
        %v2210 = vsub.f32 %v2160, %v2194
        %v2211 = vmul.f32 %v2195, 1.442695
        %v2212 = vpow.pop %v2211
        %v2213 = vmul.f32 %v2196, 1.442695
        %v2214 = vpow.pop %v2213
        %v2215 = vmul.f32 %v2197, 1.442695
        %v2216 = vpow.pop %v2215
        %v2217 = vmul.f32 %v2198, 1.442695
        %v2218 = vpow.pop %v2217
        %v2219 = vmul.f32 %v2199, 1.442695
        %v2220 = vpow.pop %v2219
        %v2221 = vmul.f32 %v2200, 1.442695
        %v2222 = vpow.pop %v2221
        %v2223 = vmul.f32 %v2201, 1.442695
        %v2224 = vpow.pop %v2223
        %v2225 = vmul.f32 %v2202, 1.442695
        %v2226 = vpow.pop %v2225
        %v2227 = vmul.f32 %v2203, 1.442695
        %v2228 = vpow.pop %v2227
        %v2229 = vmul.f32 %v2204, 1.442695
        %v2230 = vpow.pop %v2229
        %v2231 = vmul.f32 %v2205, 1.442695
        %v2232 = vpow.pop %v2231
        %v2233 = vmul.f32 %v2206, 1.442695
        %v2234 = vpow.pop %v2233
        %v2235 = vmul.f32 %v2207, 1.442695
        %v2236 = vpow.pop %v2235
        %v2237 = vmul.f32 %v2208, 1.442695
        %v2238 = vpow.pop %v2237
        %v2239 = vmul.f32 %v2209, 1.442695
        %v2240 = vpow.pop %v2239
        %v2241 = vmul.f32 %v2210, 1.442695
        %v2242 = vpow.pop %v2241
        %2243 = vadd.xlane.f32.xlu0 %v2212
        %v2244 = vpop.xlane.xlu0 %2243
        %2245 = vadd.xlane.f32.xlu0 %v2214
        %v2246 = vpop.xlane.xlu0 %2245
        %2247 = vadd.xlane.f32.xlu0 %v2216
        %v2248 = vpop.xlane.xlu0 %2247
        %2249 = vadd.xlane.f32.xlu0 %v2218
        %v2250 = vpop.xlane.xlu0 %2249
        %2251 = vadd.xlane.f32.xlu0 %v2220
        %v2252 = vpop.xlane.xlu0 %2251
        %2253 = vadd.xlane.f32.xlu0 %v2222
        %v2254 = vpop.xlane.xlu0 %2253
        %2255 = vadd.xlane.f32.xlu0 %v2224
        %v2256 = vpop.xlane.xlu0 %2255
        %2257 = vadd.xlane.f32.xlu0 %v2226
        %v2258 = vpop.xlane.xlu0 %2257
        %2259 = vadd.xlane.f32.xlu0 %v2228
        %v2260 = vpop.xlane.xlu0 %2259
        %2261 = vadd.xlane.f32.xlu0 %v2230
        %v2262 = vpop.xlane.xlu0 %2261
        %2263 = vadd.xlane.f32.xlu0 %v2232
        %v2264 = vpop.xlane.xlu0 %2263
        %2265 = vadd.xlane.f32.xlu0 %v2234
        %v2266 = vpop.xlane.xlu0 %2265
        %2267 = vadd.xlane.f32.xlu0 %v2236
        %v2268 = vpop.xlane.xlu0 %2267
        %2269 = vadd.xlane.f32.xlu0 %v2238
        %v2270 = vpop.xlane.xlu0 %2269
        %2271 = vadd.xlane.f32.xlu0 %v2240
        %v2272 = vpop.xlane.xlu0 %2271
        %2273 = vadd.xlane.f32.xlu0 %v2242
        %v2274 = vpop.xlane.xlu0 %2273
        %v2275 = vrcp.pop %v2244
        %v2276 = vrcp.pop %v2246
        %v2277 = vrcp.pop %v2248
        %v2278 = vrcp.pop %v2250
        %v2279 = vrcp.pop %v2252
        %v2280 = vrcp.pop %v2254
        %v2281 = vrcp.pop %v2256
        %v2282 = vrcp.pop %v2258
        %v2283 = vrcp.pop %v2260
        %v2284 = vrcp.pop %v2262
        %v2285 = vrcp.pop %v2264
        %v2286 = vrcp.pop %v2266
        %v2287 = vrcp.pop %v2268
        %v2288 = vrcp.pop %v2270
        %v2289 = vrcp.pop %v2272
        %v2290 = vrcp.pop %v2274
        %v2291 = vmul.f32 %v2212, %v2275
        %v2292 = vmul.f32 %v2214, %v2276
        %v2293 = vmul.f32 %v2216, %v2277
        %v2294 = vmul.f32 %v2218, %v2278
        %v2295 = vmul.f32 %v2220, %v2279
        %v2296 = vmul.f32 %v2222, %v2280
        %v2297 = vmul.f32 %v2224, %v2281
        %v2298 = vmul.f32 %v2226, %v2282
        %v2299 = vmul.f32 %v2228, %v2283
        %v2300 = vmul.f32 %v2230, %v2284
        %v2301 = vmul.f32 %v2232, %v2285
        %v2302 = vmul.f32 %v2234, %v2286
        %v2303 = vmul.f32 %v2236, %v2287
        %v2304 = vmul.f32 %v2238, %v2288
        %v2305 = vmul.f32 %v2240, %v2289
        %v2306 = vmul.f32 %v2242, %v2290
        %v2307 = vpack.c.bf16 %v2292, %v2291
        %v2308 = vpack.c.bf16 %v2294, %v2293
        %v2309 = vpack.c.bf16 %v2296, %v2295
        %v2310 = vpack.c.bf16 %v2298, %v2297
        %v2311 = vpack.c.bf16 %v2300, %v2299
        %v2312 = vpack.c.bf16 %v2302, %v2301
        %v2313 = vpack.c.bf16 %v2304, %v2303
        %v2314 = vpack.c.bf16 %v2306, %v2305
        %2315 = vrot.lane.b32.xlu0 %v1044, 64
        %v2316 = vpop.permute.xlu0 %2315
        %2317 = vrot.lane.b32.xlu0 %v1045, 64
        %v2318 = vpop.permute.xlu0 %2317
        %2319 = vrot.lane.b32.xlu0 %v1046, 64
        %v2320 = vpop.permute.xlu0 %2319
        %2321 = vrot.lane.b32.xlu0 %v1047, 64
        %v2322 = vpop.permute.xlu0 %2321
        %2323 = vrot.lane.b32.xlu0 %v1048, 64
        %v2324 = vpop.permute.xlu0 %2323
        %2325 = vrot.lane.b32.xlu0 %v1049, 64
        %v2326 = vpop.permute.xlu0 %2325
        %2327 = vrot.lane.b32.xlu0 %v1050, 64
        %v2328 = vpop.permute.xlu0 %2327
        %2329 = vrot.lane.b32.xlu0 %v1051, 64
        %v2330 = vpop.permute.xlu0 %2329
        %2339 = vmatprep.subr.bf16.mxu0 0
        %2340 = vmatpush1.bf16.msra.mxu0 %v2316
        %2341 = vmatprep.subr.bf16.mxu0 0
        %2342 = vmatpush1.bf16.msra.mxu0 %v2318
        %2343 = vmatprep.subr.bf16.mxu0 0
        %2344 = vmatpush1.bf16.msra.mxu0 %v2320
        %2345 = vmatprep.subr.bf16.mxu0 0
        %2346 = vmatpush1.bf16.msra.mxu0 %v2322
        %2347 = vmatprep.subr.bf16.mxu0 0
        %2348 = vmatpush1.bf16.msra.mxu0 %v2324
        %2349 = vmatprep.subr.bf16.mxu0 0
        %2350 = vmatpush1.bf16.msra.mxu0 %v2326
        %2351 = vmatprep.subr.bf16.mxu0 0
        %2352 = vmatpush1.bf16.msra.mxu0 %v2328
        %2353 = vmatprep.subr.bf16.mxu0 0
        %2354 = vmatpush1.bf16.msra.mxu0 %v2330
        %2355 = vmatprep.subr.bf16.mxu0 0
        %2356 = vmatpush1.bf16.msra.mxu0 0
        %2357 = vmatprep.subr.bf16.mxu0 0
        %2358 = vmatpush1.bf16.msra.mxu0 0
        %2359 = vmatprep.subr.bf16.mxu0 0
        %2360 = vmatpush1.bf16.msra.mxu0 0
        %2361 = vmatprep.subr.bf16.mxu0 0
        %2362 = vmatpush1.bf16.msra.mxu0 0
        %2363 = vmatprep.subr.bf16.mxu0 0
        %2364 = vmatpush1.bf16.msra.mxu0 0
        %2365 = vmatprep.subr.bf16.mxu0 0
        %2366 = vmatpush1.bf16.msra.mxu0 0
        %2367 = vmatprep.subr.bf16.mxu0 0
        %2368 = vmatpush1.bf16.msra.mxu0 0
        %2369 = vmatprep.subr.bf16.mxu0 0
        %2370 = vmatpush1.bf16.msra.mxu0 0
        %2371 = vmatprep.mubr.bf16.mxu0 0
        %2372 = vmatmul.mubr.bf16.gmra.mrb[0].mxu0 %v2307
        %v2373 = vpop.f32.mrb[0].mxu0
        %v2374 = vadd.f32 0.0, %v2373
        %v2375 = vpop.f32.mrb[0].mxu0
        %v2376 = vpop.f32.mrb[0].mxu0
        %v2377 = vadd.f32 0.0, %v2376
        %v2378 = vpop.f32.mrb[0].mxu0
        %2379 = vmatprep.mubr.bf16.mxu0 0
        %2380 = vmatmul.mubr.bf16.gmra.mrb[0].mxu0 %v2308
        %v2381 = vpop.f32.mrb[0].mxu0
        %v2382 = vadd.f32 0.0, %v2381
        %v2383 = vpop.f32.mrb[0].mxu0
        %v2384 = vpop.f32.mrb[0].mxu0
        %v2385 = vadd.f32 0.0, %v2384
        %v2386 = vpop.f32.mrb[0].mxu0
        %2387 = vmatprep.mubr.bf16.mxu0 0
        %2388 = vmatmul.mubr.bf16.gmra.mrb[0].mxu0 %v2309
        %v2389 = vpop.f32.mrb[0].mxu0
        %v2390 = vadd.f32 0.0, %v2389
        %v2391 = vpop.f32.mrb[0].mxu0
        %v2392 = vpop.f32.mrb[0].mxu0
        %v2393 = vadd.f32 0.0, %v2392
        %v2394 = vpop.f32.mrb[0].mxu0
        %2395 = vmatprep.mubr.bf16.mxu0 0
        %2396 = vmatmul.mubr.bf16.gmra.mrb[0].mxu0 %v2310
        %v2397 = vpop.f32.mrb[0].mxu0
        %v2398 = vadd.f32 0.0, %v2397
        %v2399 = vpop.f32.mrb[0].mxu0
        %v2400 = vpop.f32.mrb[0].mxu0
        %v2401 = vadd.f32 0.0, %v2400
        %v2402 = vpop.f32.mrb[0].mxu0
        %2403 = vmatprep.mubr.bf16.mxu0 0
        %2404 = vmatmul.mubr.bf16.gmra.mrb[0].mxu0 %v2311
        %v2405 = vpop.f32.mrb[0].mxu0
        %v2406 = vadd.f32 0.0, %v2405
        %v2407 = vpop.f32.mrb[0].mxu0
        %v2408 = vpop.f32.mrb[0].mxu0
        %v2409 = vadd.f32 0.0, %v2408
        %v2410 = vpop.f32.mrb[0].mxu0
        %2411 = vmatprep.mubr.bf16.mxu0 0
        %2412 = vmatmul.mubr.bf16.gmra.mrb[0].mxu0 %v2312
        %v2413 = vpop.f32.mrb[0].mxu0
        %v2414 = vadd.f32 0.0, %v2413
        %v2415 = vpop.f32.mrb[0].mxu0
        %v2416 = vpop.f32.mrb[0].mxu0
        %v2417 = vadd.f32 0.0, %v2416
        %v2418 = vpop.f32.mrb[0].mxu0
        %2419 = vmatprep.mubr.bf16.mxu0 0
        %2420 = vmatmul.mubr.bf16.gmra.mrb[0].mxu0 %v2313
        %v2421 = vpop.f32.mrb[0].mxu0
        %v2422 = vadd.f32 0.0, %v2421
        %v2423 = vpop.f32.mrb[0].mxu0
        %v2424 = vpop.f32.mrb[0].mxu0
        %v2425 = vadd.f32 0.0, %v2424
        %v2426 = vpop.f32.mrb[0].mxu0
        %2427 = vmatprep.mubr.bf16.mxu0 0
        %2428 = vmatmul.mubr.bf16.gmra.mrb[0].mxu0 %v2314
        %v2429 = vpop.f32.mrb[0].mxu0
        %v2430 = vadd.f32 0.0, %v2429
        %v2431 = vpop.f32.mrb[0].mxu0
        %v2432 = vpop.f32.mrb[0].mxu0
        %v2433 = vadd.f32 0.0, %v2432
        %v2434 = vpop.f32.mrb[0].mxu0
        %2435 = vdwg.mxu0
        %v2436 = vpack.c.bf16 %v2377, %v2374
        %v2437 = vpack.c.bf16 %v2385, %v2382
        %v2438 = vpack.c.bf16 %v2393, %v2390
        %v2439 = vpack.c.bf16 %v2401, %v2398
        %v2440 = vpack.c.bf16 %v2409, %v2406
        %v2441 = vpack.c.bf16 %v2417, %v2414
        %v2442 = vpack.c.bf16 %v2425, %v2422
        %v2443 = vpack.c.bf16 %v2433, %v2430
        %2452 = vrot.lane.b32.xlu0 %v2436, 64
        %v2453 = vpop.permute.xlu0 %2452
        %2454 = vrot.lane.b32.xlu0 %v2437, 64
        %v2455 = vpop.permute.xlu0 %2454
        %2456 = vrot.lane.b32.xlu0 %v2438, 64
        %v2457 = vpop.permute.xlu0 %2456
        %2458 = vrot.lane.b32.xlu0 %v2439, 64
        %v2459 = vpop.permute.xlu0 %2458
        %2460 = vrot.lane.b32.xlu0 %v2440, 64
        %v2461 = vpop.permute.xlu0 %2460
        %2462 = vrot.lane.b32.xlu0 %v2441, 64
        %v2463 = vpop.permute.xlu0 %2462
        %2464 = vrot.lane.b32.xlu0 %v2442, 64
        %v2465 = vpop.permute.xlu0 %2464
        %2466 = vrot.lane.b32.xlu0 %v2443, 64
        %v2467 = vpop.permute.xlu0 %2466
        %vm2476 = vcmask 785920
        %2477 = vst.msk [vmem:[#allocation2] sm:$0xff] %vm2476, %v2453
        %2478 = vst.msk [vmem:[#allocation2 + $0x8] sm:$0xff] %vm2476, %v2455
        %2479 = vst.msk [vmem:[#allocation2 + $0x10] sm:$0xff] %vm2476, %v2457
        %2480 = vst.msk [vmem:[#allocation2 + $0x18] sm:$0xff] %vm2476, %v2459
        %2481 = vst.msk [vmem:[#allocation2 + $0x20] sm:$0xff] %vm2476, %v2461
        %2482 = vst.msk [vmem:[#allocation2 + $0x28] sm:$0xff] %vm2476, %v2463
        %2483 = vst.msk [vmem:[#allocation2 + $0x30] sm:$0xff] %vm2476, %v2465
        %2484 = vst.msk [vmem:[#allocation2 + $0x38] sm:$0xff] %vm2476, %v2467
        %2485 = vrot.lane.b32.xlu0 %v1028, 32
        %v2486 = vpop.permute.xlu0 %2485
        %2487 = vrot.lane.b32.xlu0 %v1029, 32
        %v2488 = vpop.permute.xlu0 %2487
        %2489 = vrot.lane.b32.xlu0 %v1030, 32
        %v2490 = vpop.permute.xlu0 %2489
        %2491 = vrot.lane.b32.xlu0 %v1031, 32
        %v2492 = vpop.permute.xlu0 %2491
        %2493 = vrot.lane.b32.xlu0 %v1032, 32
        %v2494 = vpop.permute.xlu0 %2493
        %2495 = vrot.lane.b32.xlu0 %v1033, 32
        %v2496 = vpop.permute.xlu0 %2495
        %2497 = vrot.lane.b32.xlu0 %v1034, 32
        %v2498 = vpop.permute.xlu0 %2497
        %2499 = vrot.lane.b32.xlu0 %v1035, 32
        %v2500 = vpop.permute.xlu0 %2499
        %2501 = vrot.lane.b32.xlu0 %v1036, 32
        %v2502 = vpop.permute.xlu0 %2501
        %2503 = vrot.lane.b32.xlu0 %v1037, 32
        %v2504 = vpop.permute.xlu0 %2503
        %2505 = vrot.lane.b32.xlu0 %v1038, 32
        %v2506 = vpop.permute.xlu0 %2505
        %2507 = vrot.lane.b32.xlu0 %v1039, 32
        %v2508 = vpop.permute.xlu0 %2507
        %2509 = vrot.lane.b32.xlu0 %v1040, 32
        %v2510 = vpop.permute.xlu0 %2509
        %2511 = vrot.lane.b32.xlu0 %v1041, 32
        %v2512 = vpop.permute.xlu0 %2511
        %2513 = vrot.lane.b32.xlu0 %v1042, 32
        %v2514 = vpop.permute.xlu0 %2513
        %2515 = vrot.lane.b32.xlu0 %v1043, 32
        %v2516 = vpop.permute.xlu0 %2515
        %v2518 = vsel %vm1052, %v2486, 0
        %v2521 = vsel %vm1052, %v2488, 0
        %v2524 = vsel %vm1052, %v2490, 0
        %v2527 = vsel %vm1052, %v2492, 0
        %v2530 = vsel %vm1052, %v2494, 0
        %v2533 = vsel %vm1052, %v2496, 0
        %v2536 = vsel %vm1052, %v2498, 0
        %v2539 = vsel %vm1052, %v2500, 0
        %v2542 = vsel %vm1052, %v2502, 0
        %v2545 = vsel %vm1052, %v2504, 0
        %v2548 = vsel %vm1052, %v2506, 0
        %v2551 = vsel %vm1052, %v2508, 0
        %v2554 = vsel %vm1052, %v2510, 0
        %v2557 = vsel %vm1052, %v2512, 0
        %v2560 = vsel %vm1052, %v2514, 0
        %v2563 = vsel %vm1052, %v2516, 0
        %2565 = vmatprep.subr.bf16.mxu0 0
        %2566 = vmatpush1.bf16.xpose.msra.mxu0 %v2542
        %2567 = vmatprep.subr.bf16.mxu0 0
        %2568 = vmatpush1.bf16.xpose.msra.mxu0 %v2545
        %2569 = vmatprep.subr.bf16.mxu0 0
        %2570 = vmatpush1.bf16.xpose.msra.mxu0 %v2548
        %2571 = vmatprep.subr.bf16.mxu0 0
        %2572 = vmatpush1.bf16.xpose.msra.mxu0 %v2551
        %2573 = vmatprep.subr.bf16.mxu0 0
        %2574 = vmatpush1.bf16.xpose.msra.mxu0 %v2554
        %2575 = vmatprep.subr.bf16.mxu0 0
        %2576 = vmatpush1.bf16.xpose.msra.mxu0 %v2557
        %2577 = vmatprep.subr.bf16.mxu0 0
        %2578 = vmatpush1.bf16.xpose.msra.mxu0 %v2560
        %2579 = vmatprep.subr.bf16.mxu0 0
        %2580 = vmatpush1.bf16.xpose.msra.mxu0 %v2563
        %2581 = vmatprep.subr.bf16.mxu0 0
        %2582 = vmatpush1.bf16.xpose.msra.mxu0 0
        %2583 = vmatprep.subr.bf16.mxu0 0
        %2584 = vmatpush1.bf16.xpose.msra.mxu0 0
        %2585 = vmatprep.subr.bf16.mxu0 0
        %2586 = vmatpush1.bf16.xpose.msra.mxu0 0
        %2587 = vmatprep.subr.bf16.mxu0 0
        %2588 = vmatpush1.bf16.xpose.msra.mxu0 0
        %2589 = vmatprep.subr.bf16.mxu0 0
        %2590 = vmatpush1.bf16.xpose.msra.mxu0 0
        %2591 = vmatprep.subr.bf16.mxu0 0
        %2592 = vmatpush1.bf16.xpose.msra.mxu0 0
        %2593 = vmatprep.subr.bf16.mxu0 0
        %2594 = vmatpush1.bf16.xpose.msra.mxu0 0
        %2595 = vmatprep.subr.bf16.mxu0 0
        %2596 = vmatpush1.bf16.xpose.msra.mxu0 0
        %2597 = vmatprep.mubr.bf16.mxu0 0
        %2598 = vmatmul.mubr.bf16.gmra.mrb[0].mxu0 %v2518
        %v2599 = vpop.f32.mrb[0].mxu0
        %v2600 = vadd.f32 0.0, %v2599
        %v2601 = vpop.f32.mrb[0].mxu0
        %v2602 = vpop.f32.mrb[0].mxu0
        %v2603 = vadd.f32 0.0, %v2602
        %v2604 = vpop.f32.mrb[0].mxu0
        %2605 = vmatprep.mubr.bf16.mxu0 0
        %2606 = vmatmul.mubr.bf16.gmra.mrb[0].mxu0 %v2521
        %v2607 = vpop.f32.mrb[0].mxu0
        %v2608 = vadd.f32 0.0, %v2607
        %v2609 = vpop.f32.mrb[0].mxu0
        %v2610 = vpop.f32.mrb[0].mxu0
        %v2611 = vadd.f32 0.0, %v2610
        %v2612 = vpop.f32.mrb[0].mxu0
        %2613 = vmatprep.mubr.bf16.mxu0 0
        %2614 = vmatmul.mubr.bf16.gmra.mrb[0].mxu0 %v2524
        %v2615 = vpop.f32.mrb[0].mxu0
        %v2616 = vadd.f32 0.0, %v2615
        %v2617 = vpop.f32.mrb[0].mxu0
        %v2618 = vpop.f32.mrb[0].mxu0
        %v2619 = vadd.f32 0.0, %v2618
        %v2620 = vpop.f32.mrb[0].mxu0
        %2621 = vmatprep.mubr.bf16.mxu0 0
        %2622 = vmatmul.mubr.bf16.gmra.mrb[0].mxu0 %v2527
        %v2623 = vpop.f32.mrb[0].mxu0
        %v2624 = vadd.f32 0.0, %v2623
        %v2625 = vpop.f32.mrb[0].mxu0
        %v2626 = vpop.f32.mrb[0].mxu0
        %v2627 = vadd.f32 0.0, %v2626
        %v2628 = vpop.f32.mrb[0].mxu0
        %2629 = vmatprep.mubr.bf16.mxu0 0
        %2630 = vmatmul.mubr.bf16.gmra.mrb[0].mxu0 %v2530
        %v2631 = vpop.f32.mrb[0].mxu0
        %v2632 = vadd.f32 0.0, %v2631
        %v2633 = vpop.f32.mrb[0].mxu0
        %v2634 = vpop.f32.mrb[0].mxu0
        %v2635 = vadd.f32 0.0, %v2634
        %v2636 = vpop.f32.mrb[0].mxu0
        %2637 = vmatprep.mubr.bf16.mxu0 0
        %2638 = vmatmul.mubr.bf16.gmra.mrb[0].mxu0 %v2533
        %v2639 = vpop.f32.mrb[0].mxu0
        %v2640 = vadd.f32 0.0, %v2639
        %v2641 = vpop.f32.mrb[0].mxu0
        %v2642 = vpop.f32.mrb[0].mxu0
        %v2643 = vadd.f32 0.0, %v2642
        %v2644 = vpop.f32.mrb[0].mxu0
        %2645 = vmatprep.mubr.bf16.mxu0 0
        %2646 = vmatmul.mubr.bf16.gmra.mrb[0].mxu0 %v2536
        %v2647 = vpop.f32.mrb[0].mxu0
        %v2648 = vadd.f32 0.0, %v2647
        %v2649 = vpop.f32.mrb[0].mxu0
        %v2650 = vpop.f32.mrb[0].mxu0
        %v2651 = vadd.f32 0.0, %v2650
        %v2652 = vpop.f32.mrb[0].mxu0
        %2653 = vmatprep.mubr.bf16.mxu0 0
        %2654 = vmatmul.mubr.bf16.gmra.mrb[0].mxu0 %v2539
        %v2655 = vpop.f32.mrb[0].mxu0
        %v2656 = vadd.f32 0.0, %v2655
        %v2657 = vpop.f32.mrb[0].mxu0
        %v2658 = vpop.f32.mrb[0].mxu0
        %v2659 = vadd.f32 0.0, %v2658
        %v2660 = vpop.f32.mrb[0].mxu0
        %2661 = vdwg.mxu0
        %2662 = vmax.xlane.f32.xlu0 %v2600
        %v2663 = vpop.xlane.xlu0 %2662
        %2664 = vmax.xlane.f32.xlu0 %v2603
        %v2665 = vpop.xlane.xlu0 %2664
        %2666 = vmax.xlane.f32.xlu0 %v2608
        %v2667 = vpop.xlane.xlu0 %2666
        %2668 = vmax.xlane.f32.xlu0 %v2611
        %v2669 = vpop.xlane.xlu0 %2668
        %2670 = vmax.xlane.f32.xlu0 %v2616
        %v2671 = vpop.xlane.xlu0 %2670
        %2672 = vmax.xlane.f32.xlu0 %v2619
        %v2673 = vpop.xlane.xlu0 %2672
        %2674 = vmax.xlane.f32.xlu0 %v2624
        %v2675 = vpop.xlane.xlu0 %2674
        %2676 = vmax.xlane.f32.xlu0 %v2627
        %v2677 = vpop.xlane.xlu0 %2676
        %2678 = vmax.xlane.f32.xlu0 %v2632
        %v2679 = vpop.xlane.xlu0 %2678
        %2680 = vmax.xlane.f32.xlu0 %v2635
        %v2681 = vpop.xlane.xlu0 %2680
        %2682 = vmax.xlane.f32.xlu0 %v2640
        %v2683 = vpop.xlane.xlu0 %2682
        %2684 = vmax.xlane.f32.xlu0 %v2643
        %v2685 = vpop.xlane.xlu0 %2684
        %2686 = vmax.xlane.f32.xlu0 %v2648
        %v2687 = vpop.xlane.xlu0 %2686
        %2688 = vmax.xlane.f32.xlu0 %v2651
        %v2689 = vpop.xlane.xlu0 %2688
        %2690 = vmax.xlane.f32.xlu0 %v2656
        %v2691 = vpop.xlane.xlu0 %2690
        %2692 = vmax.xlane.f32.xlu0 %v2659
        %v2693 = vpop.xlane.xlu0 %2692
        %v2694 = vsub.f32 %v2600, %v2663
        %v2695 = vsub.f32 %v2603, %v2665
        %v2696 = vsub.f32 %v2608, %v2667
        %v2697 = vsub.f32 %v2611, %v2669
        %v2698 = vsub.f32 %v2616, %v2671
        %v2699 = vsub.f32 %v2619, %v2673
        %v2700 = vsub.f32 %v2624, %v2675
        %v2701 = vsub.f32 %v2627, %v2677
        %v2702 = vsub.f32 %v2632, %v2679
        %v2703 = vsub.f32 %v2635, %v2681
        %v2704 = vsub.f32 %v2640, %v2683
        %v2705 = vsub.f32 %v2643, %v2685
        %v2706 = vsub.f32 %v2648, %v2687
        %v2707 = vsub.f32 %v2651, %v2689
        %v2708 = vsub.f32 %v2656, %v2691
        %v2709 = vsub.f32 %v2659, %v2693
        %v2710 = vmul.f32 %v2694, 1.442695
        %v2711 = vpow.pop %v2710
        %v2712 = vmul.f32 %v2695, 1.442695
        %v2713 = vpow.pop %v2712
        %v2714 = vmul.f32 %v2696, 1.442695
        %v2715 = vpow.pop %v2714
        %v2716 = vmul.f32 %v2697, 1.442695
        %v2717 = vpow.pop %v2716
        %v2718 = vmul.f32 %v2698, 1.442695
        %v2719 = vpow.pop %v2718
        %v2720 = vmul.f32 %v2699, 1.442695
        %v2721 = vpow.pop %v2720
        %v2722 = vmul.f32 %v2700, 1.442695
        %v2723 = vpow.pop %v2722
        %v2724 = vmul.f32 %v2701, 1.442695
        %v2725 = vpow.pop %v2724
        %v2726 = vmul.f32 %v2702, 1.442695
        %v2727 = vpow.pop %v2726
        %v2728 = vmul.f32 %v2703, 1.442695
        %v2729 = vpow.pop %v2728
        %v2730 = vmul.f32 %v2704, 1.442695
        %v2731 = vpow.pop %v2730
        %v2732 = vmul.f32 %v2705, 1.442695
        %v2733 = vpow.pop %v2732
        %v2734 = vmul.f32 %v2706, 1.442695
        %v2735 = vpow.pop %v2734
        %v2736 = vmul.f32 %v2707, 1.442695
        %v2737 = vpow.pop %v2736
        %v2738 = vmul.f32 %v2708, 1.442695
        %v2739 = vpow.pop %v2738
        %v2740 = vmul.f32 %v2709, 1.442695
        %v2741 = vpow.pop %v2740
        %2742 = vadd.xlane.f32.xlu0 %v2711
        %v2743 = vpop.xlane.xlu0 %2742
        %2744 = vadd.xlane.f32.xlu0 %v2713
        %v2745 = vpop.xlane.xlu0 %2744
        %2746 = vadd.xlane.f32.xlu0 %v2715
        %v2747 = vpop.xlane.xlu0 %2746
        %2748 = vadd.xlane.f32.xlu0 %v2717
        %v2749 = vpop.xlane.xlu0 %2748
        %2750 = vadd.xlane.f32.xlu0 %v2719
        %v2751 = vpop.xlane.xlu0 %2750
        %2752 = vadd.xlane.f32.xlu0 %v2721
        %v2753 = vpop.xlane.xlu0 %2752
        %2754 = vadd.xlane.f32.xlu0 %v2723
        %v2755 = vpop.xlane.xlu0 %2754
        %2756 = vadd.xlane.f32.xlu0 %v2725
        %v2757 = vpop.xlane.xlu0 %2756
        %2758 = vadd.xlane.f32.xlu0 %v2727
        %v2759 = vpop.xlane.xlu0 %2758
        %2760 = vadd.xlane.f32.xlu0 %v2729
        %v2761 = vpop.xlane.xlu0 %2760
        %2762 = vadd.xlane.f32.xlu0 %v2731
        %v2763 = vpop.xlane.xlu0 %2762
        %2764 = vadd.xlane.f32.xlu0 %v2733
        %v2765 = vpop.xlane.xlu0 %2764
        %2766 = vadd.xlane.f32.xlu0 %v2735
        %v2767 = vpop.xlane.xlu0 %2766
        %2768 = vadd.xlane.f32.xlu0 %v2737
        %v2769 = vpop.xlane.xlu0 %2768
        %2770 = vadd.xlane.f32.xlu0 %v2739
        %v2771 = vpop.xlane.xlu0 %2770
        %2772 = vadd.xlane.f32.xlu0 %v2741
        %v2773 = vpop.xlane.xlu0 %2772
        %v2774 = vrcp.pop %v2743
        %v2775 = vrcp.pop %v2745
        %v2776 = vrcp.pop %v2747
        %v2777 = vrcp.pop %v2749
        %v2778 = vrcp.pop %v2751
        %v2779 = vrcp.pop %v2753
        %v2780 = vrcp.pop %v2755
        %v2781 = vrcp.pop %v2757
        %v2782 = vrcp.pop %v2759
        %v2783 = vrcp.pop %v2761
        %v2784 = vrcp.pop %v2763
        %v2785 = vrcp.pop %v2765
        %v2786 = vrcp.pop %v2767
        %v2787 = vrcp.pop %v2769
        %v2788 = vrcp.pop %v2771
        %v2789 = vrcp.pop %v2773
        %v2790 = vmul.f32 %v2711, %v2774
        %v2791 = vmul.f32 %v2713, %v2775
        %v2792 = vmul.f32 %v2715, %v2776
        %v2793 = vmul.f32 %v2717, %v2777
        %v2794 = vmul.f32 %v2719, %v2778
        %v2795 = vmul.f32 %v2721, %v2779
        %v2796 = vmul.f32 %v2723, %v2780
        %v2797 = vmul.f32 %v2725, %v2781
        %v2798 = vmul.f32 %v2727, %v2782
        %v2799 = vmul.f32 %v2729, %v2783
        %v2800 = vmul.f32 %v2731, %v2784
        %v2801 = vmul.f32 %v2733, %v2785
        %v2802 = vmul.f32 %v2735, %v2786
        %v2803 = vmul.f32 %v2737, %v2787
        %v2804 = vmul.f32 %v2739, %v2788
        %v2805 = vmul.f32 %v2741, %v2789
        %v2806 = vpack.c.bf16 %v2791, %v2790
        %v2807 = vpack.c.bf16 %v2793, %v2792
        %v2808 = vpack.c.bf16 %v2795, %v2794
        %v2809 = vpack.c.bf16 %v2797, %v2796
        %v2810 = vpack.c.bf16 %v2799, %v2798
        %v2811 = vpack.c.bf16 %v2801, %v2800
        %v2812 = vpack.c.bf16 %v2803, %v2802
        %v2813 = vpack.c.bf16 %v2805, %v2804
        %2814 = vrot.lane.b32.xlu0 %v1044, 32
        %v2815 = vpop.permute.xlu0 %2814
        %2816 = vrot.lane.b32.xlu0 %v1045, 32
        %v2817 = vpop.permute.xlu0 %2816
        %2818 = vrot.lane.b32.xlu0 %v1046, 32
        %v2819 = vpop.permute.xlu0 %2818
        %2820 = vrot.lane.b32.xlu0 %v1047, 32
        %v2821 = vpop.permute.xlu0 %2820
        %2822 = vrot.lane.b32.xlu0 %v1048, 32
        %v2823 = vpop.permute.xlu0 %2822
        %2824 = vrot.lane.b32.xlu0 %v1049, 32
        %v2825 = vpop.permute.xlu0 %2824
        %2826 = vrot.lane.b32.xlu0 %v1050, 32
        %v2827 = vpop.permute.xlu0 %2826
        %2828 = vrot.lane.b32.xlu0 %v1051, 32
        %v2829 = vpop.permute.xlu0 %2828
        %2838 = vmatprep.subr.bf16.mxu0 0
        %2839 = vmatpush1.bf16.msra.mxu0 %v2815
        %2840 = vmatprep.subr.bf16.mxu0 0
        %2841 = vmatpush1.bf16.msra.mxu0 %v2817
        %2842 = vmatprep.subr.bf16.mxu0 0
        %2843 = vmatpush1.bf16.msra.mxu0 %v2819
        %2844 = vmatprep.subr.bf16.mxu0 0
        %2845 = vmatpush1.bf16.msra.mxu0 %v2821
        %2846 = vmatprep.subr.bf16.mxu0 0
        %2847 = vmatpush1.bf16.msra.mxu0 %v2823
        %2848 = vmatprep.subr.bf16.mxu0 0
        %2849 = vmatpush1.bf16.msra.mxu0 %v2825
        %2850 = vmatprep.subr.bf16.mxu0 0
        %2851 = vmatpush1.bf16.msra.mxu0 %v2827
        %2852 = vmatprep.subr.bf16.mxu0 0
        %2853 = vmatpush1.bf16.msra.mxu0 %v2829
        %2854 = vmatprep.subr.bf16.mxu0 0
        %2855 = vmatpush1.bf16.msra.mxu0 0
        %2856 = vmatprep.subr.bf16.mxu0 0
        %2857 = vmatpush1.bf16.msra.mxu0 0
        %2858 = vmatprep.subr.bf16.mxu0 0
        %2859 = vmatpush1.bf16.msra.mxu0 0
        %2860 = vmatprep.subr.bf16.mxu0 0
        %2861 = vmatpush1.bf16.msra.mxu0 0
        %2862 = vmatprep.subr.bf16.mxu0 0
        %2863 = vmatpush1.bf16.msra.mxu0 0
        %2864 = vmatprep.subr.bf16.mxu0 0
        %2865 = vmatpush1.bf16.msra.mxu0 0
        %2866 = vmatprep.subr.bf16.mxu0 0
        %2867 = vmatpush1.bf16.msra.mxu0 0
        %2868 = vmatprep.subr.bf16.mxu0 0
        %2869 = vmatpush1.bf16.msra.mxu0 0
        %2870 = vmatprep.mubr.bf16.mxu0 0
        %2871 = vmatmul.mubr.bf16.gmra.mrb[0].mxu0 %v2806
        %v2872 = vpop.f32.mrb[0].mxu0
        %v2873 = vadd.f32 0.0, %v2872
        %v2874 = vpop.f32.mrb[0].mxu0
        %v2875 = vpop.f32.mrb[0].mxu0
        %v2876 = vadd.f32 0.0, %v2875
        %v2877 = vpop.f32.mrb[0].mxu0
        %2878 = vmatprep.mubr.bf16.mxu0 0
        %2879 = vmatmul.mubr.bf16.gmra.mrb[0].mxu0 %v2807
        %v2880 = vpop.f32.mrb[0].mxu0
        %v2881 = vadd.f32 0.0, %v2880
        %v2882 = vpop.f32.mrb[0].mxu0
        %v2883 = vpop.f32.mrb[0].mxu0
        %v2884 = vadd.f32 0.0, %v2883
        %v2885 = vpop.f32.mrb[0].mxu0
        %2886 = vmatprep.mubr.bf16.mxu0 0
        %2887 = vmatmul.mubr.bf16.gmra.mrb[0].mxu0 %v2808
        %v2888 = vpop.f32.mrb[0].mxu0
        %v2889 = vadd.f32 0.0, %v2888
        %v2890 = vpop.f32.mrb[0].mxu0
        %v2891 = vpop.f32.mrb[0].mxu0
        %v2892 = vadd.f32 0.0, %v2891
        %v2893 = vpop.f32.mrb[0].mxu0
        %2894 = vmatprep.mubr.bf16.mxu0 0
        %2895 = vmatmul.mubr.bf16.gmra.mrb[0].mxu0 %v2809
        %v2896 = vpop.f32.mrb[0].mxu0
        %v2897 = vadd.f32 0.0, %v2896
        %v2898 = vpop.f32.mrb[0].mxu0
        %v2899 = vpop.f32.mrb[0].mxu0
        %v2900 = vadd.f32 0.0, %v2899
        %v2901 = vpop.f32.mrb[0].mxu0
        %2902 = vmatprep.mubr.bf16.mxu0 0
        %2903 = vmatmul.mubr.bf16.gmra.mrb[0].mxu0 %v2810
        %v2904 = vpop.f32.mrb[0].mxu0
        %v2905 = vadd.f32 0.0, %v2904
        %v2906 = vpop.f32.mrb[0].mxu0
        %v2907 = vpop.f32.mrb[0].mxu0
        %v2908 = vadd.f32 0.0, %v2907
        %v2909 = vpop.f32.mrb[0].mxu0
        %2910 = vmatprep.mubr.bf16.mxu0 0
        %2911 = vmatmul.mubr.bf16.gmra.mrb[0].mxu0 %v2811
        %v2912 = vpop.f32.mrb[0].mxu0
        %v2913 = vadd.f32 0.0, %v2912
        %v2914 = vpop.f32.mrb[0].mxu0
        %v2915 = vpop.f32.mrb[0].mxu0
        %v2916 = vadd.f32 0.0, %v2915
        %v2917 = vpop.f32.mrb[0].mxu0
        %2918 = vmatprep.mubr.bf16.mxu0 0
        %2919 = vmatmul.mubr.bf16.gmra.mrb[0].mxu0 %v2812
        %v2920 = vpop.f32.mrb[0].mxu0
        %v2921 = vadd.f32 0.0, %v2920
        %v2922 = vpop.f32.mrb[0].mxu0
        %v2923 = vpop.f32.mrb[0].mxu0
        %v2924 = vadd.f32 0.0, %v2923
        %v2925 = vpop.f32.mrb[0].mxu0
        %2926 = vmatprep.mubr.bf16.mxu0 0
        %2927 = vmatmul.mubr.bf16.gmra.mrb[0].mxu0 %v2813
        %v2928 = vpop.f32.mrb[0].mxu0
        %v2929 = vadd.f32 0.0, %v2928
        %v2930 = vpop.f32.mrb[0].mxu0
        %v2931 = vpop.f32.mrb[0].mxu0
        %v2932 = vadd.f32 0.0, %v2931
        %v2933 = vpop.f32.mrb[0].mxu0
        %2934 = vdwg.mxu0
        %v2935 = vpack.c.bf16 %v2876, %v2873
        %v2936 = vpack.c.bf16 %v2884, %v2881
        %v2937 = vpack.c.bf16 %v2892, %v2889
        %v2938 = vpack.c.bf16 %v2900, %v2897
        %v2939 = vpack.c.bf16 %v2908, %v2905
        %v2940 = vpack.c.bf16 %v2916, %v2913
        %v2941 = vpack.c.bf16 %v2924, %v2921
        %v2942 = vpack.c.bf16 %v2932, %v2929
        %2951 = vrot.lane.b32.xlu0 %v2935, 96
        %v2952 = vpop.permute.xlu0 %2951
        %2953 = vrot.lane.b32.xlu0 %v2936, 96
        %v2954 = vpop.permute.xlu0 %2953
        %2955 = vrot.lane.b32.xlu0 %v2937, 96
        %v2956 = vpop.permute.xlu0 %2955
        %2957 = vrot.lane.b32.xlu0 %v2938, 96
        %v2958 = vpop.permute.xlu0 %2957
        %2959 = vrot.lane.b32.xlu0 %v2939, 96
        %v2960 = vpop.permute.xlu0 %2959
        %2961 = vrot.lane.b32.xlu0 %v2940, 96
        %v2962 = vpop.permute.xlu0 %2961
        %2963 = vrot.lane.b32.xlu0 %v2941, 96
        %v2964 = vpop.permute.xlu0 %2963
        %2965 = vrot.lane.b32.xlu0 %v2942, 96
        %v2966 = vpop.permute.xlu0 %2965
        %vm2975 = vcmask 1048320
        %2976 = vst.msk [vmem:[#allocation2] sm:$0xff] %vm2975, %v2952
        %2977 = vst.msk [vmem:[#allocation2 + $0x8] sm:$0xff] %vm2975, %v2954
        %2978 = vst.msk [vmem:[#allocation2 + $0x10] sm:$0xff] %vm2975, %v2956
        %2979 = vst.msk [vmem:[#allocation2 + $0x18] sm:$0xff] %vm2975, %v2958
        %2980 = vst.msk [vmem:[#allocation2 + $0x20] sm:$0xff] %vm2975, %v2960
        %2981 = vst.msk [vmem:[#allocation2 + $0x28] sm:$0xff] %vm2975, %v2962
        %2982 = vst.msk [vmem:[#allocation2 + $0x30] sm:$0xff] %vm2975, %v2964
        %2983 = vst.msk [vmem:[#allocation2 + $0x38] sm:$0xff] %vm2975, %v2966
        %v2984 = vld [vmem:[#allocation2] sm:$0xff]
        %v2985 = vld [vmem:[#allocation2 + $0x8] sm:$0xff]
        %v2986 = vld [vmem:[#allocation2 + $0x10] sm:$0xff]
        %v2987 = vld [vmem:[#allocation2 + $0x18] sm:$0xff]
        %v2988 = vld [vmem:[#allocation2 + $0x20] sm:$0xff]
        %v2989 = vld [vmem:[#allocation2 + $0x28] sm:$0xff]
        %v2990 = vld [vmem:[#allocation2 + $0x30] sm:$0xff]
        %v2991 = vld [vmem:[#allocation2 + $0x38] sm:$0xff]
        %v2992 = vld [vmem:[#allocation15] sm:$0xf]
        %v2993 = vld [vmem:[#allocation15 + $0x4] sm:$0xf]
        %v2994 = vld [vmem:[#allocation15 + $0x8] sm:$0xf]
        %v2995 = vld [vmem:[#allocation15 + $0xc] sm:$0xf]
        %v2996 = vld [vmem:[#allocation15 + $0x10] sm:$0xf]
        %v2997 = vld [vmem:[#allocation15 + $0x14] sm:$0xf]
        %v2998 = vld [vmem:[#allocation15 + $0x18] sm:$0xf]
        %v2999 = vld [vmem:[#allocation15 + $0x1c] sm:$0xf]
        %v3000 = vld [vmem:[#allocation15 + $0x20] sm:$0xf]
        %v3001 = vld [vmem:[#allocation15 + $0x24] sm:$0xf]
        %v3002 = vld [vmem:[#allocation15 + $0x28] sm:$0xf]
        %v3003 = vld [vmem:[#allocation15 + $0x2c] sm:$0xf]
        %v3004 = vld [vmem:[#allocation15 + $0x30] sm:$0xf]
        %v3005 = vld [vmem:[#allocation15 + $0x34] sm:$0xf]
        %v3006 = vld [vmem:[#allocation15 + $0x38] sm:$0xf]
        %v3007 = vld [vmem:[#allocation15 + $0x3c] sm:$0xf]
        %v3008 = vld [vmem:[#allocation17] sm:$0x1]
        %v3010 = vlaneseq
        %v3011 = vshrl.u32 %v3010, 7
        %v3012 = vsub.s32 0, %v3011
        %v3013 = vrot.slane %v3008, %v3012
        %v3031 = vunpack.c.l.b16 %v2992
        %v3032 = vunpack.c.l.b16 %v2993
        %v3033 = vunpack.c.l.b16 %v2994
        %v3034 = vunpack.c.l.b16 %v2995
        %v3035 = vunpack.c.l.b16 %v2996
        %v3036 = vunpack.c.l.b16 %v2997
        %v3037 = vunpack.c.l.b16 %v2998
        %v3038 = vunpack.c.l.b16 %v2999
        %v3039 = vunpack.c.l.b16 %v3000
        %v3040 = vunpack.c.l.b16 %v3001
        %v3041 = vunpack.c.l.b16 %v3002
        %v3042 = vunpack.c.l.b16 %v3003
        %v3043 = vunpack.c.l.b16 %v3004
        %v3044 = vunpack.c.l.b16 %v3005
        %v3045 = vunpack.c.l.b16 %v3006
        %v3046 = vunpack.c.l.b16 %v3007
        %v3047 = vpack.c.b16 %v3032, %v3031
        %v3048 = vpack.c.b16 %v3034, %v3033
        %v3049 = vpack.c.b16 %v3036, %v3035
        %v3050 = vpack.c.b16 %v3038, %v3037
        %v3051 = vpack.c.b16 %v3040, %v3039
        %v3052 = vpack.c.b16 %v3042, %v3041
        %v3053 = vpack.c.b16 %v3044, %v3043
        %v3054 = vpack.c.b16 %v3046, %v3045
        %3063 = vmatprep.subr.bf16.mxu0 0
        %3064 = vmatpush1.bf16.msra.mxu0 %v3047
        %3065 = vmatprep.subr.bf16.mxu0 0
        %3066 = vmatpush1.bf16.msra.mxu0 %v3048
        %3067 = vmatprep.subr.bf16.mxu0 0
        %3068 = vmatpush1.bf16.msra.mxu0 %v3049
        %3069 = vmatprep.subr.bf16.mxu0 0
        %3070 = vmatpush1.bf16.msra.mxu0 %v3050
        %3071 = vmatprep.subr.bf16.mxu0 0
        %3072 = vmatpush1.bf16.msra.mxu0 %v3051
        %3073 = vmatprep.subr.bf16.mxu0 0
        %3074 = vmatpush1.bf16.msra.mxu0 %v3052
        %3075 = vmatprep.subr.bf16.mxu0 0
        %3076 = vmatpush1.bf16.msra.mxu0 %v3053
        %3077 = vmatprep.subr.bf16.mxu0 0
        %3078 = vmatpush1.bf16.msra.mxu0 %v3054
        %3079 = vmatprep.subr.bf16.mxu0 0
        %3080 = vmatpush1.bf16.msra.mxu0 0
        %3081 = vmatprep.subr.bf16.mxu0 0
        %3082 = vmatpush1.bf16.msra.mxu0 0
        %3083 = vmatprep.subr.bf16.mxu0 0
        %3084 = vmatpush1.bf16.msra.mxu0 0
        %3085 = vmatprep.subr.bf16.mxu0 0
        %3086 = vmatpush1.bf16.msra.mxu0 0
        %3087 = vmatprep.subr.bf16.mxu0 0
        %3088 = vmatpush1.bf16.msra.mxu0 0
        %3089 = vmatprep.subr.bf16.mxu0 0
        %3090 = vmatpush1.bf16.msra.mxu0 0
        %3091 = vmatprep.subr.bf16.mxu0 0
        %3092 = vmatpush1.bf16.msra.mxu0 0
        %3093 = vmatprep.subr.bf16.mxu0 0
        %3094 = vmatpush1.bf16.msra.mxu0 0
        %3095 = vmatprep.mubr.bf16.mxu0 0
        %3096 = vmatmul.mubr.bf16.gmra.mrb[0].mxu0 %v2984
        %v3097 = vpop.f32.mrb[0].mxu0
        %v3098 = vadd.f32 %v3013, %v3097
        %v3099 = vpop.f32.mrb[0].mxu0
        %v3100 = vpop.f32.mrb[0].mxu0
        %v3101 = vadd.f32 %v3013, %v3100
        %v3102 = vpop.f32.mrb[0].mxu0
        %3103 = vmatprep.mubr.bf16.mxu0 0
        %3104 = vmatmul.mubr.bf16.gmra.mrb[0].mxu0 %v2985
        %v3105 = vpop.f32.mrb[0].mxu0
        %v3106 = vadd.f32 %v3013, %v3105
        %v3107 = vpop.f32.mrb[0].mxu0
        %v3108 = vpop.f32.mrb[0].mxu0
        %v3109 = vadd.f32 %v3013, %v3108
        %v3110 = vpop.f32.mrb[0].mxu0
        %3111 = vmatprep.mubr.bf16.mxu0 0
        %3112 = vmatmul.mubr.bf16.gmra.mrb[0].mxu0 %v2986
        %v3113 = vpop.f32.mrb[0].mxu0
        %v3114 = vadd.f32 %v3013, %v3113
        %v3115 = vpop.f32.mrb[0].mxu0
        %v3116 = vpop.f32.mrb[0].mxu0
        %v3117 = vadd.f32 %v3013, %v3116
        %v3118 = vpop.f32.mrb[0].mxu0
        %3119 = vmatprep.mubr.bf16.mxu0 0
        %3120 = vmatmul.mubr.bf16.gmra.mrb[0].mxu0 %v2987
        %v3121 = vpop.f32.mrb[0].mxu0
        %v3122 = vadd.f32 %v3013, %v3121
        %v3123 = vpop.f32.mrb[0].mxu0
        %v3124 = vpop.f32.mrb[0].mxu0
        %v3125 = vadd.f32 %v3013, %v3124
        %v3126 = vpop.f32.mrb[0].mxu0
        %3127 = vmatprep.mubr.bf16.mxu0 0
        %3128 = vmatmul.mubr.bf16.gmra.mrb[0].mxu0 %v2988
        %v3129 = vpop.f32.mrb[0].mxu0
        %v3130 = vadd.f32 %v3013, %v3129
        %v3131 = vpop.f32.mrb[0].mxu0
        %v3132 = vpop.f32.mrb[0].mxu0
        %v3133 = vadd.f32 %v3013, %v3132
        %v3134 = vpop.f32.mrb[0].mxu0
        %3135 = vmatprep.mubr.bf16.mxu0 0
        %3136 = vmatmul.mubr.bf16.gmra.mrb[0].mxu0 %v2989
        %v3137 = vpop.f32.mrb[0].mxu0
        %v3138 = vadd.f32 %v3013, %v3137
        %v3139 = vpop.f32.mrb[0].mxu0
        %v3140 = vpop.f32.mrb[0].mxu0
        %v3141 = vadd.f32 %v3013, %v3140
        %v3142 = vpop.f32.mrb[0].mxu0
        %3143 = vmatprep.mubr.bf16.mxu0 0
        %3144 = vmatmul.mubr.bf16.gmra.mrb[0].mxu0 %v2990
        %v3145 = vpop.f32.mrb[0].mxu0
        %v3146 = vadd.f32 %v3013, %v3145
        %v3147 = vpop.f32.mrb[0].mxu0
        %v3148 = vpop.f32.mrb[0].mxu0
        %v3149 = vadd.f32 %v3013, %v3148
        %v3150 = vpop.f32.mrb[0].mxu0
        %3151 = vmatprep.mubr.bf16.mxu0 0
        %3152 = vmatmul.mubr.bf16.gmra.mrb[0].mxu0 %v2991
        %v3153 = vpop.f32.mrb[0].mxu0
        %v3154 = vadd.f32 %v3013, %v3153
        %v3155 = vpop.f32.mrb[0].mxu0
        %v3156 = vpop.f32.mrb[0].mxu0
        %v3157 = vadd.f32 %v3013, %v3156
        %v3158 = vpop.f32.mrb[0].mxu0
        %3159 = vdwg.mxu0
        %3160 = vst [vmem:[%s458] sm:$0xff] %v3098
        %3161 = vst [vmem:[%s458 + $0x8] sm:$0xff] %v3101
        %3162 = vst [vmem:[%s458 + $0x10] sm:$0xff] %v3106
        %3163 = vst [vmem:[%s458 + $0x18] sm:$0xff] %v3109
        %3164 = vst [vmem:[%s458 + $0x20] sm:$0xff] %v3114
        %3165 = vst [vmem:[%s458 + $0x28] sm:$0xff] %v3117
        %3166 = vst [vmem:[%s458 + $0x30] sm:$0xff] %v3122
        %3167 = vst [vmem:[%s458 + $0x38] sm:$0xff] %v3125
        %3168 = vst [vmem:[%s458 + $0x40] sm:$0xff] %v3130
        %3169 = vst [vmem:[%s458 + $0x48] sm:$0xff] %v3133
        %3170 = vst [vmem:[%s458 + $0x50] sm:$0xff] %v3138
        %3171 = vst [vmem:[%s458 + $0x58] sm:$0xff] %v3141
        %3172 = vst [vmem:[%s458 + $0x60] sm:$0xff] %v3146
        %3173 = vst [vmem:[%s458 + $0x68] sm:$0xff] %v3149
        %3174 = vst [vmem:[%s458 + $0x70] sm:$0xff] %v3154
        %3175 = vst [vmem:[%s458 + $0x78] sm:$0xff] %v3157
        %s3176 = sand.u32 %s232, 1
        %s3177 = scalar_lea.sflag [#allocation5], %s3176
        %s3178 = sand.u32 %s232, 1
        %s3179 = smul.addr %s3178, 128
        %s3180 = scalar_lea.vmem [#allocation18], %s3179
        // Predicated region
        $region93: #{tpu_custom_call.1} parent=55 // pred_check
          %p3181 = pneg %p242
        $region94: #{tpu_custom_call.1} parent=55 // pred_check_branch
          %3183 = sbr.rel (%p3181) target = $region96
        $region95: #{tpu_custom_call.1} parent=55 // pred_region
          %s3185 = ssub.s32 2048, 2048
          %3186 = vsyncadd %s3177, %s3185
          %s3187 = smul.addr %s30, 16
          %s3188 = smul.addr %s3187, 128
          %s3189 = scalar_lea.hbm %s9, %s3188
          %s3190 = sshll.u32 %s3180, 4
          %s3191 = int_to_ptr.vmem [resolvable:$true] %s3190
          %3196 = dma.vmem_to_hbm [thread:$0]  %s3191, 2048, %s3189, %s3177, 128, 128, 8
        $region96: #{tpu_custom_call.1} parent=55 // pred_fallthru
          _
      $region56: #{tpu_custom_call.1} parent=5 // pred_fallthru
        _
      %p3197 = scmp.le.s32.totalorder 2, %s25
      // Predicated region
      $region97: #{tpu_custom_call.1} parent=5 // pred_check
        %p3198 = pneg %p3197
      $region98: #{tpu_custom_call.1} parent=5 // pred_check_branch
        %3200 = sbr.rel (%p3198) target = $region100
      $region99: #{tpu_custom_call.1} parent=5 // pred_region
        %s3201 = ssub.s32 %s25, 2
        // Predicated region
        $region101: #{tpu_custom_call.1} parent=99 // pred_check
          %p3202 = pneg %p248
        $region102: #{tpu_custom_call.1} parent=99 // pred_check_branch
          %3204 = sbr.rel (%p3202) target = $region104
        $region103: #{tpu_custom_call.1} parent=99 // pred_region
          %s3205 = sand.u32 %s233, 1
          %s3206 = scalar_lea.sflag [#allocation5], %s3205
          %s3207 = sand.u32 %s233, 1
          %s3208 = smul.addr %s3207, 128
          %s3209 = scalar_lea.vmem [#allocation18], %s3208
          %3210 = dma.done %s3206, 2048
        $region104: #{tpu_custom_call.1} parent=99 // pred_fallthru
          _
      $region100: #{tpu_custom_call.1} parent=5 // pred_fallthru
        _
    $region6: #{tpu_custom_call.1} parent=1 // loop_footer
      %s29 = sadd.s32 1, %s25
    $region7: #{tpu_custom_call.1} parent=1 // loop_footer_branch
      %24 = sbr.rel target = $region3
    $region8: #{tpu_custom_call.1} parent=1 // loop_exit
      _
    %3211 = vsyncpa [#allocation4], 1
    %s3212 = scalar_lea.sflag [#allocation4], 1
    %3213 = vsyncpa %s3212, 1
    %3214 = vsyncpa [#allocation7], 1
    %3215 = vsyncpa [#allocation10], 1
    %3216 = vsyncpa [#allocation13], 1
    %3217 = vsyncpa [#allocation16], 1
    %3218 = vsyncpa [#allocation5], 1
    %s3219 = scalar_lea.sflag [#allocation5], 1
    %3220 = vsyncpa %s3219, 1

</llo_original>
